<compile_context>
chip_gen: v6e
topology: v6e:2x2x1
jax: 0.10.0
libtpu: 0.0.40
codegen_flags: <defaults>
</compile_context>

<pallas_src>
import collections

import numpy as np
import jax
import jax.numpy as jnp
from jax.experimental import pallas as pl
from jax.experimental.pallas import tpu as pltpu


# ---------------------------------------------------------------------------
# Skeleton-topology helpers (re-implemented; originals not provided)
# ---------------------------------------------------------------------------
def create_pooling_list(parents, is_last):
    # TODO(synk): original create_pooling_list not provided; merge consecutive
    # joint pairs; on the last level append a virtual "displacement" node.
    n = len(parents)
    groups, j = [], 0
    while j < n:
        if j + 1 < n:
            groups.append([j, j + 1]); j += 2
        else:
            groups.append([j]); j += 1
    group_of = {}
    for k, g in enumerate(groups):
        for jj in g:
            group_of[jj] = k
    new_parents = []
    for k, g in enumerate(groups):
        p = parents[g[0]]
        new_parents.append(-1 if p == -1 else group_of[p])
    if is_last:
        groups.append([])          # displacement node pools nothing
        new_parents.append(0)      # attached to the root
    return groups, new_parents


def find_neighbor(parents, dist, add_displacement=False):
    # TODO(synk): original find_neighbor not provided; BFS distance over parent tree.
    n = len(parents)
    adj = [[] for _ in range(n)]
    for j, p in enumerate(parents):
        if p >= 0:
            adj[j].append(p); adj[p].append(j)
    neighbor_list = []
    for s in range(n):
        d = {s: 0}
        q = collections.deque([s])
        while q:
            u = q.popleft()
            if d[u] == dist:
                continue
            for v in adj[u]:
                if v not in d:
                    d[v] = d[u] + 1
                    q.append(v)
        neighbor_list.append(sorted(d.keys()))
    if add_displacement:
        last = n - 1
        for nl in neighbor_list:
            if last not in nl:
                nl.append(last)
        neighbor_list[last] = list(range(n))
    return neighbor_list, parents


def conv_mask(neighbor_list, out_per_joint, in_per_joint):
    """SkeletonConv weight mask: output joint j only sees its neighborhood."""
    J = len(neighbor_list)
    m = np.zeros((out_per_joint * J, in_per_joint * J), np.float32)
    for j, nbrs in enumerate(neighbor_list):
        for ji in nbrs:
            m[j * out_per_joint:(j + 1) * out_per_joint,
              ji * in_per_joint:(ji + 1) * in_per_joint] = 1.0
    return jnp.asarray(m)


def fold_unpool(w, pooling_list, cpe):
    """Fold the SkeletonUnpool channel-copy matrix into the conv weights.

    w: (Cout, Cin_fine, K) acting on unpooled channels -> (Cout, Cin_coarse, K).
    Exactly equivalent to unpool-then-convolve."""
    group_of = {}
    for g_idx, g in enumerate(pooling_list):
        for j in g:
            group_of[j] = g_idx
    j_fine = sum(len(g) for g in pooling_list)
    n_coarse = len(pooling_list)
    coarse_idx = np.asarray([group_of[jf] * cpe + m
                             for jf in range(j_fine) for m in range(cpe)], np.int32)
    wf = jnp.zeros((w.shape[0], n_coarse * cpe, w.shape[2]), w.dtype)
    return wf.at[:, coarse_idx, :].add(w)


# ---------------------------------------------------------------------------
# Host-precomputed temporal gather matrices (batch-block-diagonal)
# ---------------------------------------------------------------------------
def _upsample_matrix(t_in):
    """nn.Upsample(scale_factor=2, mode='linear', align_corners=False) as (2t, t)."""
    t_up = 2 * t_in
    U = np.zeros((t_up, t_in), np.float32)
    for i in range(t_up):
        tt = i // 2
        nb = tt - 1 if (i % 2 == 0) else tt + 1
        nb = min(max(nb, 0), t_in - 1)
        U[i, tt] += 0.75
        U[i, nb] += 0.25
    return U


def _enc_select(B, t_in, K, pad, stride):
    """Gather matrix for a strided, zero-padded conv on the batch-folded slab.

    Columns are ordered (tap k)-major then (batch, time) to match the stacked
    per-tap matmul results in the kernel scratch buffer."""
    t_out = (t_in + 2 * pad - K) // stride + 1
    m_in, m_out = B * t_in, B * t_out
    S = np.zeros((m_out, K * m_in), np.float32)
    for b in range(B):
        for t in range(t_out):
            for k in range(K):
                u = stride * t + k - pad
                if 0 <= u < t_in:
                    S[b * t_out + t, k * m_in + b * t_in + u] = 1.0
    return S, t_out


def _dec_select(B, t_in, K, pad):
    """Linear 2x upsample FOLDED into the stride-1 conv's temporal gather."""
    U = _upsample_matrix(t_in)
    t_up = 2 * t_in
    t_out = t_up
    m_in, m_out = B * t_in, B * t_out
    S = np.zeros((m_out, K * m_in), np.float32)
    for b in range(B):
        for t in range(t_out):
            for k in range(K):
                u = t + k - pad
                if 0 <= u < t_up:
                    S[b * t_out + t,
                      k * m_in + b * t_in: k * m_in + (b + 1) * t_in] += U[u]
    return S, t_out


def _round8(n):
    return ((n + 7) // 8) * 8


# ---------------------------------------------------------------------------
# Fused Pallas kernel: whole forward pass, one grid step, batch folded into M
# ---------------------------------------------------------------------------
def _make_kernel(cfg, slope=0.2):
    f32 = jnp.float32
    K = cfg['K']

    def leaky(a):
        return jnp.where(a >= 0, a, slope * a)

    def kernel(x_ref, w_ref, s_ref, dbo_ref, c_ref, ep_ref, lat_ref, out_ref, zbuf):
        def conv(y, L):
            # K per-tap weight matmuls -> stack in VMEM scratch -> ONE fused
            # (zero-pad + stride + 2x-upsample + batch-block) gather matmul.
            c_in, c_out = L['c_in'], L['c_out']
            m_in, m_out = L['m_in'], L['m_out']
            for k in range(K):
                wk = w_ref[pl.ds(L['w_off'] + k * c_in, c_in), pl.ds(0, c_out)]
                zbuf[pl.ds(k * m_in, m_in), pl.ds(0, c_out)] = jnp.dot(
                    y, wk, preferred_element_type=f32)
            smat = s_ref[pl.ds(L['s_off'], m_out), pl.ds(0, K * m_in)]
            zfull = zbuf[pl.ds(0, K * m_in), pl.ds(0, c_out)]
            return jnp.dot(smat, zfull, preferred_element_type=f32)

        # ---------------- Encoder: 3 x (masked conv stride 2 + LeakyReLU) ----------------
        y = x_ref[...]                                   # (B*T, C0), zero channels appended
        for L in cfg['enc']:
            b = c_ref[pl.ds(L['b_row'], 1), pl.ds(0, L['c_out'])]
            y = leaky(conv(y, L) + b)
        lat_ref[...] = y                                 # (B*T/8, 128)

        # ------ Decoder: 3 x (upsample+unpool folded into one gather/weight pair) ------
        n_dec = len(cfg['dec'])
        for i, L in enumerate(cfg['dec']):
            acc = conv(y, L) + dbo_ref[pl.ds(L['bo_off'], L['m_out']), pl.ds(0, L['c_out'])]
            y = leaky(acc) if i != n_dec - 1 else acc

        # ---- epilogue: de-norm, dual-quaternion normalize, re-norm (constants hoisted) ----
        C = cfg['c_final']
        mean = c_ref[pl.ds(cfg['mean_row'], 1), pl.ds(0, C)]
        std = c_ref[pl.ds(cfg['std_row'], 1), pl.ds(0, C)]
        istd = c_ref[pl.ds(cfg['istd_row'], 1), pl.ds(0, C)]
        rmask = c_ref[pl.ds(cfg['rmask_row'], 1), pl.ds(0, C)]   # 1 on real-quat lanes
        blk = ep_ref[pl.ds(0, C), pl.ds(0, C)]                   # per-joint segment-sum
        pswap = ep_ref[pl.ds(C, C), pl.ds(0, C)]                 # real<->dual lane swap

        ym = y * std + mean
        # TODO(synk): dquat.normalize source not provided; standard DQ normalization
        #             (unit real part + remove the component violating qr . qd = 0).
        sumsq = jnp.dot(ym * ym * rmask, blk, preferred_element_type=f32)   # ||qr||^2
        z = ym * jax.lax.rsqrt(sumsq + 1e-12)
        zs = jnp.dot(z, pswap, preferred_element_type=f32)   # dual part at real lanes & v.v.
        rd = jnp.dot(z * zs * rmask, blk, preferred_element_type=f32)       # <qr, qd0>
        z = z - (1.0 - rmask) * rd * zs
        out_ref[...] = (z - mean) * istd

    return kernel


# ---------------------------------------------------------------------------
# Parameter construction (deterministic, synthetic, kernel-ready layouts)
# ---------------------------------------------------------------------------
def init_autoencoder(key, param, parents):
    K = param['kernel_size_temporal_dim']
    number_layers = 3
    channel_size = [8, 16, 32, 64]

    parents_levels = [list(parents)]
    pooling_lists = []
    p = list(parents)
    for l in range(number_layers):
        pl_list, p = create_pooling_list(p, l == number_layers - 1)
        pooling_lists.append(pl_list)
        parents_levels.append(p)

    nbr_enc, _ = find_neighbor(parents_levels[-1], param['neighbor_distance'],
                               add_displacement=True)
    Jenc = len(nbr_enc)

    keys = jax.random.split(key, 64)
    ki = 0

    enc_layers, enc_dims = [], []
    for l in range(number_layers):
        cin = channel_size[l] * Jenc
        cout = channel_size[l + 1] * Jenc
        mask = conv_mask(nbr_enc, channel_size[l + 1], channel_size[l])
        w = 0.1 * jax.random.normal(keys[ki], (cout, cin, K), jnp.float32); ki += 1
        w = w * mask[:, :, None]
        b = 0.01 * jax.random.normal(keys[ki], (1, cout), jnp.float32); ki += 1
        # (Cout, Cin, K) -> (K*Cin, Cout), k-major: matmul-ready for (M, Cin) @ W_k
        w_kcio = jnp.transpose(w, (2, 1, 0)).reshape(K * cin, cout)
        enc_layers.append(dict(w=w_kcio, b=b))
        enc_dims.append((cin, cout))

    dec_layers, dec_dims = [], []
    offset_dims = [0] * number_layers
    for i in range(number_layers):
        lvl = number_layers - i - 1
        nbr, _ = find_neighbor(parents_levels[lvl], param['neighbor_distance'])
        J = len(nbr)
        cpe = channel_size[number_layers - i]       # in channels per joint (and unpool cpe)
        out_pj = cpe // 2
        mask = conv_mask(nbr, out_pj, cpe)
        cin = cpe * J
        cout = out_pj * J
        w = 0.1 * jax.random.normal(keys[ki], (cout, cin, K), jnp.float32); ki += 1
        w = w * mask[:, :, None]
        b = 0.01 * jax.random.normal(keys[ki], (1, cout), jnp.float32); ki += 1
        in_off = 3 * channel_size[lvl] // channel_size[0]
        # TODO(synk): SkeletonConv offset_enc details approximated as a dense linear / 100.
        woff = 0.05 * jax.random.normal(keys[ki], (cout, in_off * J), jnp.float32); ki += 1
        offset_dims[lvl] = in_off * J
        # fold SkeletonUnpool (channel-copy matrix) into the conv weights
        wf = fold_unpool(w, pooling_lists[lvl], cpe)            # (Cout, Cin_coarse, K)
        c_coarse = wf.shape[1]
        w_kcio = jnp.transpose(wf, (2, 1, 0)).reshape(K * c_coarse, cout)
        dec_layers.append(dict(w=w_kcio, b=b, woff=woff))
        dec_dims.append((c_coarse, cout))

    return dict(enc=enc_layers, dec=dec_layers,
                enc_dims=enc_dims, dec_dims=dec_dims,
                K=K, stride=param['stride_encoder_conv'],
                joints0=len(parents), enc_joints=Jenc, offset_dims=offset_dims)


# ---------------------------------------------------------------------------
# Forward pass (Encoder -> Decoder), mirrors the PyTorch module
# ---------------------------------------------------------------------------
def autoencoder_forward(params, x, offsets, mean_dqs, std_dqs, denorm_offsets=None):
    # NOTE: denorm_offsets is unused in the reference Decoder.forward as well.
    B, c_raw, T = x.shape
    K = params['K']
    stride = params['stride']
    pad = (K - 1) // 2
    enc_dims = params['enc_dims']
    dec_dims = params['dec_dims']
    n_enc, n_dec = len(enc_dims), len(dec_dims)
    c0 = enc_dims[0][0]
    c_lat = enc_dims[-1][1]
    c_fin = dec_dims[-1][1]

    # ---- batch folded into matmul M: (B, C, T) -> one (B*T, C0) lane-major slab ----
    x_tc = jnp.transpose(jnp.pad(x, ((0, 0), (0, c0 - c_raw), (0, 0))), (0, 2, 1))
    x_slab = x_tc.reshape(B * T, c0)

    # ---- host-precomputed gather matrices (pad / stride / upsample / batch blocks) ----
    enc_S, dec_S, enc_cfg, dec_cfg = [], [], [], []
    t = T
    for l in range(n_enc):
        S, t_out = _enc_select(B, t, K, pad, stride)
        enc_S.append(S)
        enc_cfg.append(dict(c_in=enc_dims[l][0], c_out=enc_dims[l][1],
                            m_in=B * t, m_out=B * t_out, b_row=l))
        t = t_out
    t_lat = t
    for l in range(n_dec):
        S, t_out = _dec_select(B, t, K, pad)
        dec_S.append(S)
        dec_cfg.append(dict(c_in=dec_dims[l][0], c_out=dec_dims[l][1],
                            m_in=B * t, m_out=B * t_out))
        t = t_out
    t_fin = t

    # ---- pack weights / gather matrices / bias rows into a handful of operands ----
    w_all = [params['enc'][l]['w'] for l in range(n_enc)] + \
            [params['dec'][l]['w'] for l in range(n_dec)]
    w_cols = max(w.shape[1] for w in w_all)
    w_pieces, off = [], 0
    for i, w in enumerate(w_all):
        (enc_cfg[i] if i < n_enc else dec_cfg[i - n_enc])['w_off'] = off
        rows = _round8(w.shape[0])
        w_pieces.append(jnp.pad(w, ((0, rows - w.shape[0]), (0, w_cols - w.shape[1]))))
        off += rows
    w_pack = jnp.concatenate(w_pieces, axis=0)

    s_all = enc_S + dec_S
    s_cols = max(s.shape[1] for s in s_all)
    s_pieces, off = [], 0
    for i, s in enumerate(s_all):
        (enc_cfg[i] if i < n_enc else dec_cfg[i - n_enc])['s_off'] = off
        rows = _round8(s.shape[0])
        s_pieces.append(np.pad(s, ((0, rows - s.shape[0]), (0, s_cols - s.shape[1]))))
        off += rows
    s_pack = jnp.asarray(np.concatenate(s_pieces, axis=0))

    # decoder bias + per-batch skeleton-offset term, replicated over each batch's time rows
    dbo_pieces, off = [], 0
    for i in range(n_dec):
        layer = params['dec'][i]
        per_b = layer['b'] + offsets[n_dec - i - 1] @ layer['woff'].T / 100.0   # (B, c_out)
        rows_full = jnp.repeat(per_b, dec_cfg[i]['m_out'] // B, axis=0)         # (m_out, c_out)
        dec_cfg[i]['bo_off'] = off
        rows = _round8(rows_full.shape[0])
        dbo_pieces.append(jnp.pad(rows_full, ((0, rows - rows_full.shape[0]), (0, 0))))
        off += rows
    dbo_pack = jnp.concatenate(dbo_pieces, axis=0)

    # 1-row constants: encoder biases, mean, std, 1/std, real-quaternion lane mask
    mean2 = mean_dqs.reshape(1, c_fin).astype(jnp.float32)
    std2 = std_dqs.reshape(1, c_fin).astype(jnp.float32)
    lanes = np.arange(c_fin)
    rmask = jnp.asarray(((lanes % 8) < 4).astype(np.float32).reshape(1, c_fin))
    c_rows = [params['enc'][l]['b'] for l in range(n_enc)] + [mean2, std2, 1.0 / std2, rmask]
    c_cols = max(r.shape[1] for r in c_rows)
    c_pack = jnp.concatenate(
        [jnp.pad(r, ((0, 0), (0, c_cols - r.shape[1]))) for r in c_rows], axis=0)
    mean_row, std_row, istd_row, rmask_row = n_enc, n_enc + 1, n_enc + 2, n_enc + 3

    # epilogue constant matrices: per-joint segment-sum + real<->dual lane swap
    blk = (lanes[:, None] // 8 == lanes[None, :] // 8).astype(np.float32)
    swap = ((lanes[:, None] % 8) == ((lanes[None, :] % 8) + 4) % 8).astype(np.float32)
    ep_pack = jnp.asarray(np.concatenate([blk, blk * swap], axis=0).astype(np.float32))

    cfg = dict(K=K, enc=enc_cfg, dec=dec_cfg, c_final=c_fin,
               mean_row=mean_row, std_row=std_row, istd_row=istd_row, rmask_row=rmask_row)
    kernel = _make_kernel(cfg)

    scratch_rows = _round8(max(K * L['m_in'] for L in enc_cfg + dec_cfg))
    scratch_cols = max(L['c_out'] for L in enc_cfg + dec_cfg)

    operands = [x_slab, w_pack, s_pack, dbo_pack, c_pack, ep_pack]
    in_specs = [pl.BlockSpec(a.shape, lambda i: (0, 0)) for a in operands]

    latent_slab, out_slab = pl.pallas_call(
        kernel,
        out_shape=(jax.ShapeDtypeStruct((B * t_lat, c_lat), jnp.float32),
                   jax.ShapeDtypeStruct((B * t_fin, c_fin), jnp.float32)),
        grid=(1,),
        in_specs=in_specs,
        out_specs=(pl.BlockSpec((B * t_lat, c_lat), lambda i: (0, 0)),
                   pl.BlockSpec((B * t_fin, c_fin), lambda i: (0, 0))),
        scratch_shapes=[pltpu.VMEM((scratch_rows, scratch_cols), jnp.float32)],
        compiler_params=pltpu.CompilerParams(dimension_semantics=("arbitrary",)),
    )(*operands)

    # back to the module's NCW layout (pure wrapper-side layout plumbing)
    latent = latent_slab.reshape(B, t_lat, c_lat).transpose(0, 2, 1)
    out = out_slab.reshape(B, t_fin, c_fin).transpose(0, 2, 1)
    return latent, out


# ---------------------------------------------------------------------------
if __name__ == "__main__":
    param = {'kernel_size_temporal_dim': 3, 'stride_encoder_conv': 2, 'neighbor_distance': 2}
    parents = [-1, 0, 1, 2, 3, 4, 5, 6]   # chain skeleton with 8 joints

    params = init_autoencoder(jax.random.PRNGKey(1234), param, parents)

    key = jax.random.PRNGKey(0)
    k_x, k_o0, k_o1, k_o2, k_m, k_s = jax.random.split(key, 6)

    B, T = 2, 16
    # Encoder's first conv expects 8 * enc_joints channels after appending 5 zero
    # channels, so the raw input has 8 * enc_joints - 5 channels (here 11).
    c_in = params['enc_dims'][0][0] - 5
    x = jax.random.normal(k_x, (B, c_in, T), jnp.float32)

    offsets = [
        0.1 * jax.random.normal(k_o0, (B, params['offset_dims'][0]), jnp.float32),
        0.1 * jax.random.normal(k_o1, (B, params['offset_dims'][1]), jnp.float32),
        0.1 * jax.random.normal(k_o2, (B, params['offset_dims'][2]), jnp.float32),
    ]

    c_out = 8 * len(parents)   # 64 output channels = 8 dq components per original joint
    mean_dqs = 0.1 * jax.random.normal(k_m, (c_out,), jnp.float32)
    std_dqs = 0.5 + 0.5 * jax.random.uniform(k_s, (c_out,), jnp.float32)
    denorm_offsets = jnp.zeros((B, 3), jnp.float32)   # unused (as in the reference)

    fwd = jax.jit(lambda xx, oo, mm, ss: autoencoder_forward(params, xx, oo, mm, ss,
                                                             denorm_offsets))
    latent, output = fwd(x, offsets, mean_dqs, std_dqs)
    jax.block_until_ready((latent, output))

    assert latent.shape == (B, params['enc_dims'][-1][1], T // 8)
    assert output.shape == (B, c_out, T)
    assert bool(jnp.all(jnp.isfinite(latent))) and bool(jnp.all(jnp.isfinite(output)))
    print("KERNEL_OK")
</pallas_src>

<mosaic_0001>
module attributes {stable_mosaic.version = 11 : i64} {
  func.func @kernel(%arg0: i32, %arg1: memref<32x16xf32, #tpu.memory_space<vmem>>, %arg2: memref<1104x128xf32, #tpu.memory_space<vmem>>, %arg3: memref<88x96xf32, #tpu.memory_space<vmem>>, %arg4: memref<56x64xf32, #tpu.memory_space<vmem>>, %arg5: memref<7x128xf32, #tpu.memory_space<vmem>>, %arg6: memref<128x64xf32, #tpu.memory_space<vmem>>, %arg7: memref<4x128xf32, #tpu.memory_space<vmem>>, %arg8: memref<32x64xf32, #tpu.memory_space<vmem>>, %arg9: memref<96x128xf32, #tpu.memory_space<vmem>>) attributes {dimension_semantics = [#tpu.dimension_semantics<arbitrary>], iteration_bounds = array<i64: 1>, scalar_prefetch = 0 : i64, scratch_operands = 1 : i64, tpu.core_type = #tpu.core_type<tc>, window_params = [{pipeline_mode = #tpu.pipeline_mode<synchronous>, transform_indices = @transform_0, window_bounds = array<i64: 32, 16>}, {pipeline_mode = #tpu.pipeline_mode<synchronous>, transform_indices = @transform_1, window_bounds = array<i64: 1104, 128>}, {pipeline_mode = #tpu.pipeline_mode<synchronous>, transform_indices = @transform_2, window_bounds = array<i64: 88, 96>}, {pipeline_mode = #tpu.pipeline_mode<synchronous>, transform_indices = @transform_3, window_bounds = array<i64: 56, 64>}, {pipeline_mode = #tpu.pipeline_mode<synchronous>, transform_indices = @transform_4, window_bounds = array<i64: 7, 128>}, {pipeline_mode = #tpu.pipeline_mode<synchronous>, transform_indices = @transform_5, window_bounds = array<i64: 128, 64>}, {pipeline_mode = #tpu.pipeline_mode<synchronous>, transform_indices = @transform_6, window_bounds = array<i64: 4, 128>}, {pipeline_mode = #tpu.pipeline_mode<synchronous>, transform_indices = @transform_7, window_bounds = array<i64: 32, 64>}]} {
    %c0 = arith.constant 0 : index
    %c0_0 = arith.constant 0 : index
    %0 = vector.load %arg1[%c0, %c0_0] : memref<32x16xf32, #tpu.memory_space<vmem>>, vector<32x16xf32>
    %c0_1 = arith.constant 0 : index
    %c0_2 = arith.constant 0 : index
    %1 = vector.load %arg5[%c0_1, %c0_2] : memref<7x128xf32, #tpu.memory_space<vmem>>, vector<1x32xf32>
    %c0_3 = arith.constant 0 : index
    %c0_4 = arith.constant 0 : index
    %2 = vector.load %arg2[%c0_3, %c0_4] : memref<1104x128xf32, #tpu.memory_space<vmem>>, vector<16x32xf32>
    %cst = arith.constant dense<0.000000e+00> : vector<32x32xf32>
    %3 = tpu.matmul %0, %2, %cst {dimension_numbers = #tpu.dot_dimension_numbers<[1], [0], [0], [1], [0, 0, 1, 1], [], []>} : vector<32x16xf32>, vector<16x32xf32>, vector<32x32xf32> -> vector<32x32xf32>
    %c0_5 = arith.constant 0 : index
    %c0_6 = arith.constant 0 : index
    %4 = vector.load %arg9[%c0_5, %c0_6] : memref<96x128xf32, #tpu.memory_space<vmem>>, vector<32x32xf32>
    tpu.vector_store %arg9[%c0_5, %c0_6], %3 {strides = array<i32>} : memref<96x128xf32, #tpu.memory_space<vmem>>, vector<32x32xf32>,
    %c16 = arith.constant 16 : index
    %c0_7 = arith.constant 0 : index
    %5 = vector.load %arg2[%c16, %c0_7] : memref<1104x128xf32, #tpu.memory_space<vmem>>, vector<16x32xf32>
    %cst_8 = arith.constant dense<0.000000e+00> : vector<32x32xf32>
    %6 = tpu.matmul %0, %5, %cst_8 {dimension_numbers = #tpu.dot_dimension_numbers<[1], [0], [0], [1], [0, 0, 1, 1], [], []>} : vector<32x16xf32>, vector<16x32xf32>, vector<32x32xf32> -> vector<32x32xf32>
    %c32 = arith.constant 32 : index
    %c0_9 = arith.constant 0 : index
    %7 = vector.load %arg9[%c32, %c0_9] : memref<96x128xf32, #tpu.memory_space<vmem>>, vector<32x32xf32>
    tpu.vector_store %arg9[%c32, %c0_9], %6 {strides = array<i32>} : memref<96x128xf32, #tpu.memory_space<vmem>>, vector<32x32xf32>,
    %c32_10 = arith.constant 32 : index
    %c0_11 = arith.constant 0 : index
    %8 = vector.load %arg2[%c32_10, %c0_11] : memref<1104x128xf32, #tpu.memory_space<vmem>>, vector<16x32xf32>
    %cst_12 = arith.constant dense<0.000000e+00> : vector<32x32xf32>
    %9 = tpu.matmul %0, %8, %cst_12 {dimension_numbers = #tpu.dot_dimension_numbers<[1], [0], [0], [1], [0, 0, 1, 1], [], []>} : vector<32x16xf32>, vector<16x32xf32>, vector<32x32xf32> -> vector<32x32xf32>
    %c64 = arith.constant 64 : index
    %c0_13 = arith.constant 0 : index
    %10 = vector.load %arg9[%c64, %c0_13] : memref<96x128xf32, #tpu.memory_space<vmem>>, vector<32x32xf32>
    tpu.vector_store %arg9[%c64, %c0_13], %9 {strides = array<i32>} : memref<96x128xf32, #tpu.memory_space<vmem>>, vector<32x32xf32>,
    %c0_14 = arith.constant 0 : index
    %c0_15 = arith.constant 0 : index
    %11 = vector.load %arg3[%c0_14, %c0_15] : memref<88x96xf32, #tpu.memory_space<vmem>>, vector<16x96xf32>
    %c0_16 = arith.constant 0 : index
    %c0_17 = arith.constant 0 : index
    %12 = vector.load %arg9[%c0_16, %c0_17] : memref<96x128xf32, #tpu.memory_space<vmem>>, vector<96x32xf32>
    %cst_18 = arith.constant dense<0.000000e+00> : vector<16x32xf32>
    %13 = tpu.matmul %11, %12, %cst_18 {dimension_numbers = #tpu.dot_dimension_numbers<[1], [0], [0], [1], [0, 0, 1, 1], [], []>} : vector<16x96xf32>, vector<96x32xf32>, vector<16x32xf32> -> vector<16x32xf32>
    %14 = vector.broadcast %1 : vector<1x32xf32> to vector<16x32xf32>
    %15 = arith.addf %13, %14 : vector<16x32xf32>
    %cst_19 = arith.constant 0.000000e+00 : f32
    %16 = vector.broadcast %cst_19 : f32 to vector<16x32xf32>
    %17 = arith.cmpf oge, %15, %16 : vector<16x32xf32>
    %cst_20 = arith.constant 2.000000e-01 : f32
    %18 = vector.broadcast %cst_20 : f32 to vector<16x32xf32>
    %19 = arith.mulf %18, %15 : vector<16x32xf32>
    %20 = arith.select %17, %15, %19 : vector<16x32xi1>, vector<16x32xf32>
    %c1 = arith.constant 1 : index
    %c0_21 = arith.constant 0 : index
    %21 = vector.load %arg5[%c1, %c0_21] : memref<7x128xf32, #tpu.memory_space<vmem>>, vector<1x64xf32>
    %c48 = arith.constant 48 : index
    %c0_22 = arith.constant 0 : index
    %22 = vector.load %arg2[%c48, %c0_22] : memref<1104x128xf32, #tpu.memory_space<vmem>>, vector<32x64xf32>
    %cst_23 = arith.constant dense<0.000000e+00> : vector<16x64xf32>
    %23 = tpu.matmul %20, %22, %cst_23 {dimension_numbers = #tpu.dot_dimension_numbers<[1], [0], [0], [1], [0, 0, 1, 1], [], []>} : vector<16x32xf32>, vector<32x64xf32>, vector<16x64xf32> -> vector<16x64xf32>
    %c0_24 = arith.constant 0 : index
    %c0_25 = arith.constant 0 : index
    %24 = vector.load %arg9[%c0_24, %c0_25] : memref<96x128xf32, #tpu.memory_space<vmem>>, vector<16x64xf32>
    tpu.vector_store %arg9[%c0_24, %c0_25], %23 {strides = array<i32>} : memref<96x128xf32, #tpu.memory_space<vmem>>, vector<16x64xf32>,
    %c80 = arith.constant 80 : index
    %c0_26 = arith.constant 0 : index
    %25 = vector.load %arg2[%c80, %c0_26] : memref<1104x128xf32, #tpu.memory_space<vmem>>, vector<32x64xf32>
    %cst_27 = arith.constant dense<0.000000e+00> : vector<16x64xf32>
    %26 = tpu.matmul %20, %25, %cst_27 {dimension_numbers = #tpu.dot_dimension_numbers<[1], [0], [0], [1], [0, 0, 1, 1], [], []>} : vector<16x32xf32>, vector<32x64xf32>, vector<16x64xf32> -> vector<16x64xf32>
    %c16_28 = arith.constant 16 : index
    %c0_29 = arith.constant 0 : index
    %27 = vector.load %arg9[%c16_28, %c0_29] : memref<96x128xf32, #tpu.memory_space<vmem>>, vector<16x64xf32>
    tpu.vector_store %arg9[%c16_28, %c0_29], %26 {strides = array<i32>} : memref<96x128xf32, #tpu.memory_space<vmem>>, vector<16x64xf32>,
    %c112 = arith.constant 112 : index
    %c0_30 = arith.constant 0 : index
    %28 = vector.load %arg2[%c112, %c0_30] : memref<1104x128xf32, #tpu.memory_space<vmem>>, vector<32x64xf32>
    %cst_31 = arith.constant dense<0.000000e+00> : vector<16x64xf32>
    %29 = tpu.matmul %20, %28, %cst_31 {dimension_numbers = #tpu.dot_dimension_numbers<[1], [0], [0], [1], [0, 0, 1, 1], [], []>} : vector<16x32xf32>, vector<32x64xf32>, vector<16x64xf32> -> vector<16x64xf32>
    %c32_32 = arith.constant 32 : index
    %c0_33 = arith.constant 0 : index
    %30 = vector.load %arg9[%c32_32, %c0_33] : memref<96x128xf32, #tpu.memory_space<vmem>>, vector<16x64xf32>
    tpu.vector_store %arg9[%c32_32, %c0_33], %29 {strides = array<i32>} : memref<96x128xf32, #tpu.memory_space<vmem>>, vector<16x64xf32>,
    %c16_34 = arith.constant 16 : index
    %c0_35 = arith.constant 0 : index
    %31 = vector.load %arg3[%c16_34, %c0_35] : memref<88x96xf32, #tpu.memory_space<vmem>>, vector<8x48xf32>
    %c0_36 = arith.constant 0 : index
    %c0_37 = arith.constant 0 : index
    %32 = vector.load %arg9[%c0_36, %c0_37] : memref<96x128xf32, #tpu.memory_space<vmem>>, vector<48x64xf32>
    %cst_38 = arith.constant dense<0.000000e+00> : vector<8x64xf32>
    %33 = tpu.matmul %31, %32, %cst_38 {dimension_numbers = #tpu.dot_dimension_numbers<[1], [0], [0], [1], [0, 0, 1, 1], [], []>} : vector<8x48xf32>, vector<48x64xf32>, vector<8x64xf32> -> vector<8x64xf32>
    %34 = vector.broadcast %21 : vector<1x64xf32> to vector<8x64xf32>
    %35 = arith.addf %33, %34 : vector<8x64xf32>
    %cst_39 = arith.constant 0.000000e+00 : f32
    %36 = vector.broadcast %cst_39 : f32 to vector<8x64xf32>
    %37 = arith.cmpf oge, %35, %36 : vector<8x64xf32>
    %cst_40 = arith.constant 2.000000e-01 : f32
    %38 = vector.broadcast %cst_40 : f32 to vector<8x64xf32>
    %39 = arith.mulf %38, %35 : vector<8x64xf32>
    %40 = arith.select %37, %35, %39 : vector<8x64xi1>, vector<8x64xf32>
    %c2 = arith.constant 2 : index
    %c0_41 = arith.constant 0 : index
    %41 = vector.load %arg5[%c2, %c0_41] : memref<7x128xf32, #tpu.memory_space<vmem>>, vector<1x128xf32>
    %c144 = arith.constant 144 : index
    %c0_42 = arith.constant 0 : index
    %42 = vector.load %arg2[%c144, %c0_42] : memref<1104x128xf32, #tpu.memory_space<vmem>>, vector<64x128xf32>
    %cst_43 = arith.constant dense<0.000000e+00> : vector<8x128xf32>
    %43 = tpu.matmul %40, %42, %cst_43 {dimension_numbers = #tpu.dot_dimension_numbers<[1], [0], [0], [1], [0, 0, 1, 1], [], []>} : vector<8x64xf32>, vector<64x128xf32>, vector<8x128xf32> -> vector<8x128xf32>
    %c0_44 = arith.constant 0 : index
    %c0_45 = arith.constant 0 : index
    %44 = vector.load %arg9[%c0_44, %c0_45] : memref<96x128xf32, #tpu.memory_space<vmem>>, vector<8x128xf32>
    tpu.vector_store %arg9[%c0_44, %c0_45], %43 {strides = array<i32>} : memref<96x128xf32, #tpu.memory_space<vmem>>, vector<8x128xf32>,
    %c208 = arith.constant 208 : index
    %c0_46 = arith.constant 0 : index
    %45 = vector.load %arg2[%c208, %c0_46] : memref<1104x128xf32, #tpu.memory_space<vmem>>, vector<64x128xf32>
    %cst_47 = arith.constant dense<0.000000e+00> : vector<8x128xf32>
    %46 = tpu.matmul %40, %45, %cst_47 {dimension_numbers = #tpu.dot_dimension_numbers<[1], [0], [0], [1], [0, 0, 1, 1], [], []>} : vector<8x64xf32>, vector<64x128xf32>, vector<8x128xf32> -> vector<8x128xf32>
    %c8 = arith.constant 8 : index
    %c0_48 = arith.constant 0 : index
    %47 = vector.load %arg9[%c8, %c0_48] : memref<96x128xf32, #tpu.memory_space<vmem>>, vector<8x128xf32>
    tpu.vector_store %arg9[%c8, %c0_48], %46 {strides = array<i32>} : memref<96x128xf32, #tpu.memory_space<vmem>>, vector<8x128xf32>,
    %c272 = arith.constant 272 : index
    %c0_49 = arith.constant 0 : index
    %48 = vector.load %arg2[%c272, %c0_49] : memref<1104x128xf32, #tpu.memory_space<vmem>>, vector<64x128xf32>
    %cst_50 = arith.constant dense<0.000000e+00> : vector<8x128xf32>
    %49 = tpu.matmul %40, %48, %cst_50 {dimension_numbers = #tpu.dot_dimension_numbers<[1], [0], [0], [1], [0, 0, 1, 1], [], []>} : vector<8x64xf32>, vector<64x128xf32>, vector<8x128xf32> -> vector<8x128xf32>
    %c16_51 = arith.constant 16 : index
    %c0_52 = arith.constant 0 : index
    %50 = vector.load %arg9[%c16_51, %c0_52] : memref<96x128xf32, #tpu.memory_space<vmem>>, vector<8x128xf32>
    tpu.vector_store %arg9[%c16_51, %c0_52], %49 {strides = array<i32>} : memref<96x128xf32, #tpu.memory_space<vmem>>, vector<8x128xf32>,
    %c24 = arith.constant 24 : index
    %c0_53 = arith.constant 0 : index
    %51 = vector.load %arg3[%c24, %c0_53] : memref<88x96xf32, #tpu.memory_space<vmem>>, vector<4x24xf32>
    %c0_54 = arith.constant 0 : index
    %c0_55 = arith.constant 0 : index
    %52 = vector.load %arg9[%c0_54, %c0_55] : memref<96x128xf32, #tpu.memory_space<vmem>>, vector<24x128xf32>
    %cst_56 = arith.constant dense<0.000000e+00> : vector<4x128xf32>
    %53 = tpu.matmul %51, %52, %cst_56 {dimension_numbers = #tpu.dot_dimension_numbers<[1], [0], [0], [1], [0, 0, 1, 1], [], []>} : vector<4x24xf32>, vector<24x128xf32>, vector<4x128xf32> -> vector<4x128xf32>
    %54 = vector.broadcast %41 : vector<1x128xf32> to vector<4x128xf32>
    %55 = arith.addf %53, %54 : vector<4x128xf32>
    %cst_57 = arith.constant 0.000000e+00 : f32
    %56 = vector.broadcast %cst_57 : f32 to vector<4x128xf32>
    %57 = arith.cmpf oge, %55, %56 : vector<4x128xf32>
    %cst_58 = arith.constant 2.000000e-01 : f32
    %58 = vector.broadcast %cst_58 : f32 to vector<4x128xf32>
    %59 = arith.mulf %58, %55 : vector<4x128xf32>
    %60 = arith.select %57, %55, %59 : vector<4x128xi1>, vector<4x128xf32>
    %c0_59 = arith.constant 0 : index
    %c0_60 = arith.constant 0 : index
    %61 = vector.load %arg7[%c0_59, %c0_60] : memref<4x128xf32, #tpu.memory_space<vmem>>, vector<4x128xf32>
    tpu.vector_store %arg7[%c0_59, %c0_60], %60 {strides = array<i32>} : memref<4x128xf32, #tpu.memory_space<vmem>>, vector<4x128xf32>,
    %c336 = arith.constant 336 : index
    %c0_61 = arith.constant 0 : index
    %62 = vector.load %arg2[%c336, %c0_61] : memref<1104x128xf32, #tpu.memory_space<vmem>>, vector<128x64xf32>
    %cst_62 = arith.constant dense<0.000000e+00> : vector<4x64xf32>
    %63 = tpu.matmul %60, %62, %cst_62 {dimension_numbers = #tpu.dot_dimension_numbers<[1], [0], [0], [1], [0, 0, 1, 1], [], []>} : vector<4x128xf32>, vector<128x64xf32>, vector<4x64xf32> -> vector<4x64xf32>
    %c0_63 = arith.constant 0 : index
    %c0_64 = arith.constant 0 : index
    %64 = vector.load %arg9[%c0_63, %c0_64] : memref<96x128xf32, #tpu.memory_space<vmem>>, vector<4x64xf32>
    tpu.vector_store %arg9[%c0_63, %c0_64], %63 {strides = array<i32>} : memref<96x128xf32, #tpu.memory_space<vmem>>, vector<4x64xf32>,
    %c464 = arith.constant 464 : index
    %c0_65 = arith.constant 0 : index
    %65 = vector.load %arg2[%c464, %c0_65] : memref<1104x128xf32, #tpu.memory_space<vmem>>, vector<128x64xf32>
    %cst_66 = arith.constant dense<0.000000e+00> : vector<4x64xf32>
    %66 = tpu.matmul %60, %65, %cst_66 {dimension_numbers = #tpu.dot_dimension_numbers<[1], [0], [0], [1], [0, 0, 1, 1], [], []>} : vector<4x128xf32>, vector<128x64xf32>, vector<4x64xf32> -> vector<4x64xf32>
    %c4 = arith.constant 4 : index
    %c0_67 = arith.constant 0 : index
    %67 = vector.load %arg9[%c4, %c0_67] : memref<96x128xf32, #tpu.memory_space<vmem>>, vector<4x64xf32>
    tpu.vector_store %arg9[%c4, %c0_67], %66 {strides = array<i32>} : memref<96x128xf32, #tpu.memory_space<vmem>>, vector<4x64xf32>,
    %c592 = arith.constant 592 : index
    %c0_68 = arith.constant 0 : index
    %68 = vector.load %arg2[%c592, %c0_68] : memref<1104x128xf32, #tpu.memory_space<vmem>>, vector<128x64xf32>
    %cst_69 = arith.constant dense<0.000000e+00> : vector<4x64xf32>
    %69 = tpu.matmul %60, %68, %cst_69 {dimension_numbers = #tpu.dot_dimension_numbers<[1], [0], [0], [1], [0, 0, 1, 1], [], []>} : vector<4x128xf32>, vector<128x64xf32>, vector<4x64xf32> -> vector<4x64xf32>
    %c8_70 = arith.constant 8 : index
    %c0_71 = arith.constant 0 : index
    %70 = vector.load %arg9[%c8_70, %c0_71] : memref<96x128xf32, #tpu.memory_space<vmem>>, vector<4x64xf32>
    tpu.vector_store %arg9[%c8_70, %c0_71], %69 {strides = array<i32>} : memref<96x128xf32, #tpu.memory_space<vmem>>, vector<4x64xf32>,
    %c32_72 = arith.constant 32 : index
    %c0_73 = arith.constant 0 : index
    %71 = vector.load %arg3[%c32_72, %c0_73] : memref<88x96xf32, #tpu.memory_space<vmem>>, vector<8x12xf32>
    %c0_74 = arith.constant 0 : index
    %c0_75 = arith.constant 0 : index
    %72 = vector.load %arg9[%c0_74, %c0_75] : memref<96x128xf32, #tpu.memory_space<vmem>>, vector<12x64xf32>
    %cst_76 = arith.constant dense<0.000000e+00> : vector<8x64xf32>
    %73 = tpu.matmul %71, %72, %cst_76 {dimension_numbers = #tpu.dot_dimension_numbers<[1], [0], [0], [1], [0, 0, 1, 1], [], []>} : vector<8x12xf32>, vector<12x64xf32>, vector<8x64xf32> -> vector<8x64xf32>
    %c0_77 = arith.constant 0 : index
    %c0_78 = arith.constant 0 : index
    %74 = vector.load %arg4[%c0_77, %c0_78] : memref<56x64xf32, #tpu.memory_space<vmem>>, vector<8x64xf32>
    %75 = arith.addf %73, %74 : vector<8x64xf32>
    %cst_79 = arith.constant 0.000000e+00 : f32
    %76 = vector.broadcast %cst_79 : f32 to vector<8x64xf32>
    %77 = arith.cmpf oge, %75, %76 : vector<8x64xf32>
    %cst_80 = arith.constant 2.000000e-01 : f32
    %78 = vector.broadcast %cst_80 : f32 to vector<8x64xf32>
    %79 = arith.mulf %78, %75 : vector<8x64xf32>
    %80 = arith.select %77, %75, %79 : vector<8x64xi1>, vector<8x64xf32>
    %c720 = arith.constant 720 : index
    %c0_81 = arith.constant 0 : index
    %81 = vector.load %arg2[%c720, %c0_81] : memref<1104x128xf32, #tpu.memory_space<vmem>>, vector<64x64xf32>
    %cst_82 = arith.constant dense<0.000000e+00> : vector<8x64xf32>
    %82 = tpu.matmul %80, %81, %cst_82 {dimension_numbers = #tpu.dot_dimension_numbers<[1], [0], [0], [1], [0, 0, 1, 1], [], []>} : vector<8x64xf32>, vector<64x64xf32>, vector<8x64xf32> -> vector<8x64xf32>
    %c0_83 = arith.constant 0 : index
    %c0_84 = arith.constant 0 : index
    %83 = vector.load %arg9[%c0_83, %c0_84] : memref<96x128xf32, #tpu.memory_space<vmem>>, vector<8x64xf32>
    tpu.vector_store %arg9[%c0_83, %c0_84], %82 {strides = array<i32>} : memref<96x128xf32, #tpu.memory_space<vmem>>, vector<8x64xf32>,
    %c784 = arith.constant 784 : index
    %c0_85 = arith.constant 0 : index
    %84 = vector.load %arg2[%c784, %c0_85] : memref<1104x128xf32, #tpu.memory_space<vmem>>, vector<64x64xf32>
    %cst_86 = arith.constant dense<0.000000e+00> : vector<8x64xf32>
    %85 = tpu.matmul %80, %84, %cst_86 {dimension_numbers = #tpu.dot_dimension_numbers<[1], [0], [0], [1], [0, 0, 1, 1], [], []>} : vector<8x64xf32>, vector<64x64xf32>, vector<8x64xf32> -> vector<8x64xf32>
    %c8_87 = arith.constant 8 : index
    %c0_88 = arith.constant 0 : index
    %86 = vector.load %arg9[%c8_87, %c0_88] : memref<96x128xf32, #tpu.memory_space<vmem>>, vector<8x64xf32>
    tpu.vector_store %arg9[%c8_87, %c0_88], %85 {strides = array<i32>} : memref<96x128xf32, #tpu.memory_space<vmem>>, vector<8x64xf32>,
    %c848 = arith.constant 848 : index
    %c0_89 = arith.constant 0 : index
    %87 = vector.load %arg2[%c848, %c0_89] : memref<1104x128xf32, #tpu.memory_space<vmem>>, vector<64x64xf32>
    %cst_90 = arith.constant dense<0.000000e+00> : vector<8x64xf32>
    %88 = tpu.matmul %80, %87, %cst_90 {dimension_numbers = #tpu.dot_dimension_numbers<[1], [0], [0], [1], [0, 0, 1, 1], [], []>} : vector<8x64xf32>, vector<64x64xf32>, vector<8x64xf32> -> vector<8x64xf32>
    %c16_91 = arith.constant 16 : index
    %c0_92 = arith.constant 0 : index
    %89 = vector.load %arg9[%c16_91, %c0_92] : memref<96x128xf32, #tpu.memory_space<vmem>>, vector<8x64xf32>
    tpu.vector_store %arg9[%c16_91, %c0_92], %88 {strides = array<i32>} : memref<96x128xf32, #tpu.memory_space<vmem>>, vector<8x64xf32>,
    %c40 = arith.constant 40 : index
    %c0_93 = arith.constant 0 : index
    %90 = vector.load %arg3[%c40, %c0_93] : memref<88x96xf32, #tpu.memory_space<vmem>>, vector<16x24xf32>
    %c0_94 = arith.constant 0 : index
    %c0_95 = arith.constant 0 : index
    %91 = vector.load %arg9[%c0_94, %c0_95] : memref<96x128xf32, #tpu.memory_space<vmem>>, vector<24x64xf32>
    %cst_96 = arith.constant dense<0.000000e+00> : vector<16x64xf32>
    %92 = tpu.matmul %90, %91, %cst_96 {dimension_numbers = #tpu.dot_dimension_numbers<[1], [0], [0], [1], [0, 0, 1, 1], [], []>} : vector<16x24xf32>, vector<24x64xf32>, vector<16x64xf32> -> vector<16x64xf32>
    %c8_97 = arith.constant 8 : index
    %c0_98 = arith.constant 0 : index
    %93 = vector.load %arg4[%c8_97, %c0_98] : memref<56x64xf32, #tpu.memory_space<vmem>>, vector<16x64xf32>
    %94 = arith.addf %92, %93 : vector<16x64xf32>
    %cst_99 = arith.constant 0.000000e+00 : f32
    %95 = vector.broadcast %cst_99 : f32 to vector<16x64xf32>
    %96 = arith.cmpf oge, %94, %95 : vector<16x64xf32>
    %cst_100 = arith.constant 2.000000e-01 : f32
    %97 = vector.broadcast %cst_100 : f32 to vector<16x64xf32>
    %98 = arith.mulf %97, %94 : vector<16x64xf32>
    %99 = arith.select %96, %94, %98 : vector<16x64xi1>, vector<16x64xf32>
    %c912 = arith.constant 912 : index
    %c0_101 = arith.constant 0 : index
    %100 = vector.load %arg2[%c912, %c0_101] : memref<1104x128xf32, #tpu.memory_space<vmem>>, vector<64x64xf32>
    %cst_102 = arith.constant dense<0.000000e+00> : vector<16x64xf32>
    %101 = tpu.matmul %99, %100, %cst_102 {dimension_numbers = #tpu.dot_dimension_numbers<[1], [0], [0], [1], [0, 0, 1, 1], [], []>} : vector<16x64xf32>, vector<64x64xf32>, vector<16x64xf32> -> vector<16x64xf32>
    %c0_103 = arith.constant 0 : index
    %c0_104 = arith.constant 0 : index
    %102 = vector.load %arg9[%c0_103, %c0_104] : memref<96x128xf32, #tpu.memory_space<vmem>>, vector<16x64xf32>
    tpu.vector_store %arg9[%c0_103, %c0_104], %101 {strides = array<i32>} : memref<96x128xf32, #tpu.memory_space<vmem>>, vector<16x64xf32>,
    %c976 = arith.constant 976 : index
    %c0_105 = arith.constant 0 : index
    %103 = vector.load %arg2[%c976, %c0_105] : memref<1104x128xf32, #tpu.memory_space<vmem>>, vector<64x64xf32>
    %cst_106 = arith.constant dense<0.000000e+00> : vector<16x64xf32>
    %104 = tpu.matmul %99, %103, %cst_106 {dimension_numbers = #tpu.dot_dimension_numbers<[1], [0], [0], [1], [0, 0, 1, 1], [], []>} : vector<16x64xf32>, vector<64x64xf32>, vector<16x64xf32> -> vector<16x64xf32>
    %c16_107 = arith.constant 16 : index
    %c0_108 = arith.constant 0 : index
    %105 = vector.load %arg9[%c16_107, %c0_108] : memref<96x128xf32, #tpu.memory_space<vmem>>, vector<16x64xf32>
    tpu.vector_store %arg9[%c16_107, %c0_108], %104 {strides = array<i32>} : memref<96x128xf32, #tpu.memory_space<vmem>>, vector<16x64xf32>,
    %c1040 = arith.constant 1040 : index
    %c0_109 = arith.constant 0 : index
    %106 = vector.load %arg2[%c1040, %c0_109] : memref<1104x128xf32, #tpu.memory_space<vmem>>, vector<64x64xf32>
    %cst_110 = arith.constant dense<0.000000e+00> : vector<16x64xf32>
    %107 = tpu.matmul %99, %106, %cst_110 {dimension_numbers = #tpu.dot_dimension_numbers<[1], [0], [0], [1], [0, 0, 1, 1], [], []>} : vector<16x64xf32>, vector<64x64xf32>, vector<16x64xf32> -> vector<16x64xf32>
    %c32_111 = arith.constant 32 : index
    %c0_112 = arith.constant 0 : index
    %108 = vector.load %arg9[%c32_111, %c0_112] : memref<96x128xf32, #tpu.memory_space<vmem>>, vector<16x64xf32>
    tpu.vector_store %arg9[%c32_111, %c0_112], %107 {strides = array<i32>} : memref<96x128xf32, #tpu.memory_space<vmem>>, vector<16x64xf32>,
    %c56 = arith.constant 56 : index
    %c0_113 = arith.constant 0 : index
    %109 = vector.load %arg3[%c56, %c0_113] : memref<88x96xf32, #tpu.memory_space<vmem>>, vector<32x48xf32>
    %c0_114 = arith.constant 0 : index
    %c0_115 = arith.constant 0 : index
    %110 = vector.load %arg9[%c0_114, %c0_115] : memref<96x128xf32, #tpu.memory_space<vmem>>, vector<48x64xf32>
    %cst_116 = arith.constant dense<0.000000e+00> : vector<32x64xf32>
    %111 = tpu.matmul %109, %110, %cst_116 {dimension_numbers = #tpu.dot_dimension_numbers<[1], [0], [0], [1], [0, 0, 1, 1], [], []>} : vector<32x48xf32>, vector<48x64xf32>, vector<32x64xf32> -> vector<32x64xf32>
    %c24_117 = arith.constant 24 : index
    %c0_118 = arith.constant 0 : index
    %112 = vector.load %arg4[%c24_117, %c0_118] : memref<56x64xf32, #tpu.memory_space<vmem>>, vector<32x64xf32>
    %113 = arith.addf %111, %112 : vector<32x64xf32>
    %c3 = arith.constant 3 : index
    %c0_119 = arith.constant 0 : index
    %114 = vector.load %arg5[%c3, %c0_119] : memref<7x128xf32, #tpu.memory_space<vmem>>, vector<1x64xf32>
    %c4_120 = arith.constant 4 : index
    %c0_121 = arith.constant 0 : index
    %115 = vector.load %arg5[%c4_120, %c0_121] : memref<7x128xf32, #tpu.memory_space<vmem>>, vector<1x64xf32>
    %c5 = arith.constant 5 : index
    %c0_122 = arith.constant 0 : index
    %116 = vector.load %arg5[%c5, %c0_122] : memref<7x128xf32, #tpu.memory_space<vmem>>, vector<1x64xf32>
    %c6 = arith.constant 6 : index
    %c0_123 = arith.constant 0 : index
    %117 = vector.load %arg5[%c6, %c0_123] : memref<7x128xf32, #tpu.memory_space<vmem>>, vector<1x64xf32>
    %c0_124 = arith.constant 0 : index
    %c0_125 = arith.constant 0 : index
    %118 = vector.load %arg6[%c0_124, %c0_125] : memref<128x64xf32, #tpu.memory_space<vmem>>, vector<64x64xf32>
    %c64_126 = arith.constant 64 : index
    %c0_127 = arith.constant 0 : index
    %119 = vector.load %arg6[%c64_126, %c0_127] : memref<128x64xf32, #tpu.memory_space<vmem>>, vector<64x64xf32>
    %120 = vector.broadcast %115 : vector<1x64xf32> to vector<32x64xf32>
    %121 = arith.mulf %113, %120 : vector<32x64xf32>
    %122 = vector.broadcast %114 : vector<1x64xf32> to vector<32x64xf32>
    %123 = arith.addf %121, %122 : vector<32x64xf32>
    %124 = arith.mulf %123, %123 : vector<32x64xf32>
    %125 = vector.broadcast %117 : vector<1x64xf32> to vector<32x64xf32>
    %126 = arith.mulf %124, %125 : vector<32x64xf32>
    %cst_128 = arith.constant dense<0.000000e+00> : vector<32x64xf32>
    %127 = tpu.matmul %126, %118, %cst_128 {dimension_numbers = #tpu.dot_dimension_numbers<[1], [0], [0], [1], [0, 0, 1, 1], [], []>} : vector<32x64xf32>, vector<64x64xf32>, vector<32x64xf32> -> vector<32x64xf32>
    %cst_129 = arith.constant 9.99999996E-13 : f32
    %128 = vector.broadcast %cst_129 : f32 to vector<32x64xf32>
    %129 = arith.addf %127, %128 : vector<32x64xf32>
    %130 = math.rsqrt %129 : vector<32x64xf32>
    %131 = arith.mulf %123, %130 : vector<32x64xf32>
    %cst_130 = arith.constant dense<0.000000e+00> : vector<32x64xf32>
    %132 = tpu.matmul %131, %119, %cst_130 {dimension_numbers = #tpu.dot_dimension_numbers<[1], [0], [0], [1], [0, 0, 1, 1], [], []>} : vector<32x64xf32>, vector<64x64xf32>, vector<32x64xf32> -> vector<32x64xf32>
    %133 = arith.mulf %131, %132 : vector<32x64xf32>
    %134 = vector.broadcast %117 : vector<1x64xf32> to vector<32x64xf32>
    %135 = arith.mulf %133, %134 : vector<32x64xf32>
    %cst_131 = arith.constant dense<0.000000e+00> : vector<32x64xf32>
    %136 = tpu.matmul %135, %118, %cst_131 {dimension_numbers = #tpu.dot_dimension_numbers<[1], [0], [0], [1], [0, 0, 1, 1], [], []>} : vector<32x64xf32>, vector<64x64xf32>, vector<32x64xf32> -> vector<32x64xf32>
    %cst_132 = arith.constant 1.000000e+00 : f32
    %137 = vector.broadcast %cst_132 : f32 to vector<1x64xf32>
    %138 = arith.subf %137, %117 : vector<1x64xf32>
    %139 = vector.broadcast %138 : vector<1x64xf32> to vector<32x64xf32>
    %140 = arith.mulf %139, %136 : vector<32x64xf32>
    %141 = arith.mulf %140, %132 : vector<32x64xf32>
    %142 = arith.subf %131, %141 : vector<32x64xf32>
    %143 = vector.broadcast %114 : vector<1x64xf32> to vector<32x64xf32>
    %144 = arith.subf %142, %143 : vector<32x64xf32>
    %145 = vector.broadcast %116 : vector<1x64xf32> to vector<32x64xf32>
    %146 = arith.mulf %144, %145 : vector<32x64xf32>
    %c0_133 = arith.constant 0 : index
    %c0_134 = arith.constant 0 : index
    %147 = vector.load %arg8[%c0_133, %c0_134] : memref<32x64xf32, #tpu.memory_space<vmem>>, vector<32x64xf32>
    tpu.vector_store %arg8[%c0_133, %c0_134], %146 {strides = array<i32>} : memref<32x64xf32, #tpu.memory_space<vmem>>, vector<32x64xf32>,
    return
  }
  func.func @transform_0(%arg0: i32) -> (i32, i32) {
    %c0_i32 = arith.constant 0 : i32
    %c0_i32_0 = arith.constant 0 : i32
    %c0_i32_1 = arith.constant 0 : i32
    return %c0_i32, %c0_i32_0 : i32, i32
  }
  func.func @transform_1(%arg0: i32) -> (i32, i32) {
    %c0_i32 = arith.constant 0 : i32
    %c0_i32_0 = arith.constant 0 : i32
    %c0_i32_1 = arith.constant 0 : i32
    return %c0_i32, %c0_i32_0 : i32, i32
  }
  func.func @transform_2(%arg0: i32) -> (i32, i32) {
    %c0_i32 = arith.constant 0 : i32
    %c0_i32_0 = arith.constant 0 : i32
    %c0_i32_1 = arith.constant 0 : i32
    return %c0_i32, %c0_i32_0 : i32, i32
  }
  func.func @transform_3(%arg0: i32) -> (i32, i32) {
    %c0_i32 = arith.constant 0 : i32
    %c0_i32_0 = arith.constant 0 : i32
    %c0_i32_1 = arith.constant 0 : i32
    return %c0_i32, %c0_i32_0 : i32, i32
  }
  func.func @transform_4(%arg0: i32) -> (i32, i32) {
    %c0_i32 = arith.constant 0 : i32
    %c0_i32_0 = arith.constant 0 : i32
    %c0_i32_1 = arith.constant 0 : i32
    return %c0_i32, %c0_i32_0 : i32, i32
  }
  func.func @transform_5(%arg0: i32) -> (i32, i32) {
    %c0_i32 = arith.constant 0 : i32
    %c0_i32_0 = arith.constant 0 : i32
    %c0_i32_1 = arith.constant 0 : i32
    return %c0_i32, %c0_i32_0 : i32, i32
  }
  func.func @transform_6(%arg0: i32) -> (i32, i32) {
    %c0_i32 = arith.constant 0 : i32
    %c0_i32_0 = arith.constant 0 : i32
    %c0_i32_1 = arith.constant 0 : i32
    return %c0_i32, %c0_i32_0 : i32, i32
  }
  func.func @transform_7(%arg0: i32) -> (i32, i32) {
    %c0_i32 = arith.constant 0 : i32
    %c0_i32_0 = arith.constant 0 : i32
    %c0_i32_1 = arith.constant 0 : i32
    return %c0_i32, %c0_i32_0 : i32, i32
  }
}

</mosaic_0001>

<llo_original>
// kernel: _lambda_.1
$region0: #{_lambda_.1}
  #allocation0 [shape = 'u32[]', space=smem, size = 0x4, offset = 0x4, fixed_abs, tag = 'smem constant byte address 0x4 - core index']
  #allocation1 [shape = 'u32[144,128]{1,0:T(1,128)}', space=vmem, size = 0x12000, scoped, tag = 'internal scratch']
  #allocation2 [shape = 'f32[96,128]{1,0:T(8,128)}', space=vmem, size = 0xc000, scoped, tag = 'scratch operand']
  %s0 = inlined_call_operand.vmem [shape: f32[32,16], index: 0, kind: input, shape index: {}]
  %s1 = inlined_call_operand.hbm [shape: f32[1104,128], index: 1, kind: input, shape index: {}]
  %s2 = inlined_call_operand.vmem [shape: f32[88,96], index: 2, kind: input, shape index: {}]
  %s3 = inlined_call_operand.vmem [shape: f32[56,64], index: 3, kind: input, shape index: {}]
  %s4 = inlined_call_operand.vmem [shape: f32[7,128], index: 4, kind: input, shape index: {}]
  %s5 = inlined_call_operand.vmem [shape: f32[128,64], index: 5, kind: input, shape index: {}]
  %s6 = inlined_call_operand.hbm [shape: f32[4,128], index: 6, kind: output, shape index: {0}]
  %s7 = inlined_call_operand.hbm [shape: f32[32,64], index: 7, kind: output, shape index: {1}]
  %8 = xla_tuple %s6, %s7
  %s9 = sld [smem:[#allocation0]]
  $region46: #{_lambda_.1} parent=0
    _
  %s11 = ssub.s32 1, %s9
  %s12 = scalar_select 0, %s11, %s9
  $region1: #{_lambda_.1} parent=0
    #allocation3 [shape = 'u8[565248]{0}', space=vmem, size = 0x8a000, scoped, tag = 'input window, operand 1, single buffered']
    #allocation4 [shape = 's32[1]{0}', space=sflag, size = 0x4, scoped, tag = 'scoped memory for _lambda_.1']
    #allocation5 [shape = 's32[1]{0}', space=sflag, size = 0x4, scoped, tag = 'scoped memory for _lambda_.1']
    #allocation6 [shape = 'u8[2048]{0}', space=vmem, size = 0x800, scoped, tag = 'output window, operand 0, single buffered']
    #allocation7 [shape = 'u8[16384]{0}', space=vmem, size = 0x4000, scoped, tag = 'output window, operand 1, single buffered']
    #allocation8 [shape = 's32[1]{0}', space=sflag, size = 0x4, scoped, tag = 'scoped memory for _lambda_.1']
    %13 = vsyncpa [#allocation4], 0
    %14 = vsyncpa [#allocation5], 0
    %15 = vsyncpa [#allocation8], 0
    // Predicated region
    $region2: #{_lambda_.1} parent=1 // pred_check
      _
    $region3: #{_lambda_.1} parent=1 // pred_check_branch
      %17 = sbr.rel (0) target = $region5
    $region4: #{_lambda_.1} parent=1 // pred_region
      _
    $region5: #{_lambda_.1} parent=1 // pred_fallthru
      _
    // Predicated region
    $region6: #{_lambda_.1} parent=1 // pred_check
      _
    $region7: #{_lambda_.1} parent=1 // pred_check_branch
      %19 = sbr.rel (0) target = $region9
    $region8: #{_lambda_.1} parent=1 // pred_region
      %s21 = ssub.s32 17664, 17664
      %22 = vsyncadd [#allocation4], %s21
      %s23 = sshll.u32 [#allocation3], 4
      %s24 = int_to_ptr.vmem [resolvable:$true] %s23
      %29 = dma.hbm_to_vmem [thread:$0]  %s1, 17664, %s24, [#allocation4], 128, 128, 8
    $region9: #{_lambda_.1} parent=1 // pred_fallthru
      _
    // Predicated region
    $region10: #{_lambda_.1} parent=1 // pred_check
      _
    $region11: #{_lambda_.1} parent=1 // pred_check_branch
      %31 = sbr.rel (0) target = $region13
    $region12: #{_lambda_.1} parent=1 // pred_region
      _
    $region13: #{_lambda_.1} parent=1 // pred_fallthru
      _
    // Predicated region
    $region14: #{_lambda_.1} parent=1 // pred_check
      _
    $region15: #{_lambda_.1} parent=1 // pred_check_branch
      %33 = sbr.rel (0) target = $region17
    $region16: #{_lambda_.1} parent=1 // pred_region
      _
    $region17: #{_lambda_.1} parent=1 // pred_fallthru
      _
    // Predicated region
    $region18: #{_lambda_.1} parent=1 // pred_check
      _
    $region19: #{_lambda_.1} parent=1 // pred_check_branch
      %35 = sbr.rel (0) target = $region21
    $region20: #{_lambda_.1} parent=1 // pred_region
      _
    $region21: #{_lambda_.1} parent=1 // pred_fallthru
      _
    // Predicated region
    $region22: #{_lambda_.1} parent=1 // pred_check
      _
    $region23: #{_lambda_.1} parent=1 // pred_check_branch
      %37 = sbr.rel (0) target = $region25
    $region24: #{_lambda_.1} parent=1 // pred_region
      _
    $region25: #{_lambda_.1} parent=1 // pred_fallthru
      _
    // Predicated region
    $region26: #{_lambda_.1} parent=1 // pred_check
      _
    $region27: #{_lambda_.1} parent=1 // pred_check_branch
      %39 = sbr.rel (0) target = $region29
    $region28: #{_lambda_.1} parent=1 // pred_region
      %40 = dma.done [#allocation4], 17664
    $region29: #{_lambda_.1} parent=1 // pred_fallthru
      _
    %v41 = vld [vmem:[%s0] sm:$0xff]
    %v42 = vld [vmem:[%s0 + $0x8] sm:$0xff]
    %v43 = vld [vmem:[%s0 + $0x10] sm:$0xff]
    %v44 = vld [vmem:[%s0 + $0x18] sm:$0xff]
    %v45 = vld [vmem:[%s4] sm:$0x1]
    %v46 = vld [vmem:[#allocation3] sm:$0xff]
    %v47 = vld [vmem:[#allocation3 + $0x8] sm:$0xff]
    %vm48 = vcmask 130048
    %v50 = vsel %vm48, %v41, 0
    %v53 = vsel %vm48, %v42, 0
    %v56 = vsel %vm48, %v43, 0
    %v59 = vsel %vm48, %v44, 0
    %61 = vmatprep.subr.mxu0 0.0
    %62 = vmatpush1.msra.mxu0 0.0
    %63 = vmatprep.subr.mxu0 0.0
    %64 = vmatpush1.msra.mxu0 0.0
    %65 = vmatprep.subr.mxu0 0.0
    %66 = vmatpush1.msra.mxu0 0.0
    %67 = vmatprep.subr.mxu0 0.0
    %68 = vmatpush1.msra.mxu0 0.0
    %69 = vmatprep.subr.mxu0 0.0
    %70 = vmatpush1.msra.mxu0 0.0
    %71 = vmatprep.subr.mxu0 0.0
    %72 = vmatpush1.msra.mxu0 0.0
    %73 = vmatprep.subr.mxu0 0.0
    %74 = vmatpush1.msra.mxu0 0.0
    %75 = vmatprep.subr.mxu0 0.0
    %76 = vmatpush1.msra.mxu0 0.0
    %77 = vmatprep.subr.mxu0 0.0
    %78 = vmatpush1.msra.mxu0 0.0
    %79 = vmatprep.subr.mxu0 0.0
    %80 = vmatpush1.msra.mxu0 0.0
    %81 = vmatprep.subr.mxu0 0.0
    %82 = vmatpush1.msra.mxu0 0.0
    %83 = vmatprep.subr.mxu0 0.0
    %84 = vmatpush1.msra.mxu0 0.0
    %85 = vmatprep.subr.mxu0 0.0
    %86 = vmatpush1.msra.mxu0 0.0
    %87 = vmatprep.subr.mxu0 0.0
    %88 = vmatpush1.msra.mxu0 0.0
    %89 = vmatprep.subr.mxu0 0.0
    %90 = vmatpush1.msra.mxu0 %v47
    %91 = vmatprep.subr.mxu0 0.0
    %92 = vmatpush1.msra.mxu0 %v46
    %93 = vmatprep.subr.mxu0 0.0
    %94 = vmatpush2.msra.mxu0 0.0
    %95 = vmatprep.subr.mxu0 0.0
    %96 = vmatpush2.msra.mxu0 0.0
    %97 = vmatprep.subr.mxu0 0.0
    %98 = vmatpush2.msra.mxu0 0.0
    %99 = vmatprep.subr.mxu0 0.0
    %100 = vmatpush2.msra.mxu0 0.0
    %101 = vmatprep.subr.mxu0 0.0
    %102 = vmatpush2.msra.mxu0 0.0
    %103 = vmatprep.subr.mxu0 0.0
    %104 = vmatpush2.msra.mxu0 0.0
    %105 = vmatprep.subr.mxu0 0.0
    %106 = vmatpush2.msra.mxu0 0.0
    %107 = vmatprep.subr.mxu0 0.0
    %108 = vmatpush2.msra.mxu0 0.0
    %109 = vmatprep.subr.mxu0 0.0
    %110 = vmatpush2.msra.mxu0 0.0
    %111 = vmatprep.subr.mxu0 0.0
    %112 = vmatpush2.msra.mxu0 0.0
    %113 = vmatprep.subr.mxu0 0.0
    %114 = vmatpush2.msra.mxu0 0.0
    %115 = vmatprep.subr.mxu0 0.0
    %116 = vmatpush2.msra.mxu0 0.0
    %117 = vmatprep.subr.mxu0 0.0
    %118 = vmatpush2.msra.mxu0 0.0
    %119 = vmatprep.subr.mxu0 0.0
    %120 = vmatpush2.msra.mxu0 0.0
    %121 = vmatprep.subr.mxu0 0.0
    %122 = vmatpush2.msra.mxu0 0.0
    %123 = vmatprep.subr.mxu0 0.0
    %124 = vmatpush2.msra.mxu0 0.0
    %125 = vmatprep.mubr.f32.mxu0 0.0
    %126 = vmatmul.mubr.f32.gmra.mxu0 %v50
    %v127 = vpop.f32.mrf.mxu0
    %v128 = vadd.f32 0.0, %v127
    %v129 = vpop.f32.mrf.mxu0
    %130 = vmatprep.mubr.f32.mxu0 0.0
    %131 = vmatmul.mubr.f32.gmra.mxu0 %v53
    %v132 = vpop.f32.mrf.mxu0
    %v133 = vadd.f32 0.0, %v132
    %v134 = vpop.f32.mrf.mxu0
    %135 = vmatprep.mubr.f32.mxu0 0.0
    %136 = vmatmul.mubr.f32.gmra.mxu0 %v56
    %v137 = vpop.f32.mrf.mxu0
    %v138 = vadd.f32 0.0, %v137
    %v139 = vpop.f32.mrf.mxu0
    %140 = vmatprep.mubr.f32.mxu0 0.0
    %141 = vmatmul.mubr.f32.gmra.mxu0 %v59
    %v142 = vpop.f32.mrf.mxu0
    %v143 = vadd.f32 0.0, %v142
    %v144 = vpop.f32.mrf.mxu0
    %145 = vdwg.mxu0
    %vm146 = vcmask 261120
    %147 = vst.msk [vmem:[#allocation2] sm:$0xff] %vm146, %v128
    %148 = vst.msk [vmem:[#allocation2 + $0x8] sm:$0xff] %vm146, %v133
    %149 = vst.msk [vmem:[#allocation2 + $0x10] sm:$0xff] %vm146, %v138
    %150 = vst.msk [vmem:[#allocation2 + $0x18] sm:$0xff] %vm146, %v143
    %v151 = vld [vmem:[#allocation3 + $0x10] sm:$0xff]
    %v152 = vld [vmem:[#allocation3 + $0x18] sm:$0xff]
    %153 = vmatprep.subr.mxu0 0.0
    %154 = vmatpush1.msra.mxu0 0.0
    %155 = vmatprep.subr.mxu0 0.0
    %156 = vmatpush1.msra.mxu0 0.0
    %157 = vmatprep.subr.mxu0 0.0
    %158 = vmatpush1.msra.mxu0 0.0
    %159 = vmatprep.subr.mxu0 0.0
    %160 = vmatpush1.msra.mxu0 0.0
    %161 = vmatprep.subr.mxu0 0.0
    %162 = vmatpush1.msra.mxu0 0.0
    %163 = vmatprep.subr.mxu0 0.0
    %164 = vmatpush1.msra.mxu0 0.0
    %165 = vmatprep.subr.mxu0 0.0
    %166 = vmatpush1.msra.mxu0 0.0
    %167 = vmatprep.subr.mxu0 0.0
    %168 = vmatpush1.msra.mxu0 0.0
    %169 = vmatprep.subr.mxu0 0.0
    %170 = vmatpush1.msra.mxu0 0.0
    %171 = vmatprep.subr.mxu0 0.0
    %172 = vmatpush1.msra.mxu0 0.0
    %173 = vmatprep.subr.mxu0 0.0
    %174 = vmatpush1.msra.mxu0 0.0
    %175 = vmatprep.subr.mxu0 0.0
    %176 = vmatpush1.msra.mxu0 0.0
    %177 = vmatprep.subr.mxu0 0.0
    %178 = vmatpush1.msra.mxu0 0.0
    %179 = vmatprep.subr.mxu0 0.0
    %180 = vmatpush1.msra.mxu0 0.0
    %181 = vmatprep.subr.mxu0 0.0
    %182 = vmatpush1.msra.mxu0 %v152
    %183 = vmatprep.subr.mxu0 0.0
    %184 = vmatpush1.msra.mxu0 %v151
    %185 = vmatprep.subr.mxu0 0.0
    %186 = vmatpush2.msra.mxu0 0.0
    %187 = vmatprep.subr.mxu0 0.0
    %188 = vmatpush2.msra.mxu0 0.0
    %189 = vmatprep.subr.mxu0 0.0
    %190 = vmatpush2.msra.mxu0 0.0
    %191 = vmatprep.subr.mxu0 0.0
    %192 = vmatpush2.msra.mxu0 0.0
    %193 = vmatprep.subr.mxu0 0.0
    %194 = vmatpush2.msra.mxu0 0.0
    %195 = vmatprep.subr.mxu0 0.0
    %196 = vmatpush2.msra.mxu0 0.0
    %197 = vmatprep.subr.mxu0 0.0
    %198 = vmatpush2.msra.mxu0 0.0
    %199 = vmatprep.subr.mxu0 0.0
    %200 = vmatpush2.msra.mxu0 0.0
    %201 = vmatprep.subr.mxu0 0.0
    %202 = vmatpush2.msra.mxu0 0.0
    %203 = vmatprep.subr.mxu0 0.0
    %204 = vmatpush2.msra.mxu0 0.0
    %205 = vmatprep.subr.mxu0 0.0
    %206 = vmatpush2.msra.mxu0 0.0
    %207 = vmatprep.subr.mxu0 0.0
    %208 = vmatpush2.msra.mxu0 0.0
    %209 = vmatprep.subr.mxu0 0.0
    %210 = vmatpush2.msra.mxu0 0.0
    %211 = vmatprep.subr.mxu0 0.0
    %212 = vmatpush2.msra.mxu0 0.0
    %213 = vmatprep.subr.mxu0 0.0
    %214 = vmatpush2.msra.mxu0 0.0
    %215 = vmatprep.subr.mxu0 0.0
    %216 = vmatpush2.msra.mxu0 0.0
    %217 = vmatprep.mubr.f32.mxu0 0.0
    %218 = vmatmul.mubr.f32.gmra.mxu0 %v50
    %v219 = vpop.f32.mrf.mxu0
    %v220 = vadd.f32 0.0, %v219
    %v221 = vpop.f32.mrf.mxu0
    %222 = vmatprep.mubr.f32.mxu0 0.0
    %223 = vmatmul.mubr.f32.gmra.mxu0 %v53
    %v224 = vpop.f32.mrf.mxu0
    %v225 = vadd.f32 0.0, %v224
    %v226 = vpop.f32.mrf.mxu0
    %227 = vmatprep.mubr.f32.mxu0 0.0
    %228 = vmatmul.mubr.f32.gmra.mxu0 %v56
    %v229 = vpop.f32.mrf.mxu0
    %v230 = vadd.f32 0.0, %v229
    %v231 = vpop.f32.mrf.mxu0
    %232 = vmatprep.mubr.f32.mxu0 0.0
    %233 = vmatmul.mubr.f32.gmra.mxu0 %v59
    %v234 = vpop.f32.mrf.mxu0
    %v235 = vadd.f32 0.0, %v234
    %v236 = vpop.f32.mrf.mxu0
    %237 = vdwg.mxu0
    %238 = vst.msk [vmem:[#allocation2 + $0x20] sm:$0xff] %vm146, %v220
    %239 = vst.msk [vmem:[#allocation2 + $0x28] sm:$0xff] %vm146, %v225
    %240 = vst.msk [vmem:[#allocation2 + $0x30] sm:$0xff] %vm146, %v230
    %241 = vst.msk [vmem:[#allocation2 + $0x38] sm:$0xff] %vm146, %v235
    %v242 = vld [vmem:[#allocation3 + $0x20] sm:$0xff]
    %v243 = vld [vmem:[#allocation3 + $0x28] sm:$0xff]
    %244 = vmatprep.subr.mxu0 0.0
    %245 = vmatpush1.msra.mxu0 0.0
    %246 = vmatprep.subr.mxu0 0.0
    %247 = vmatpush1.msra.mxu0 0.0
    %248 = vmatprep.subr.mxu0 0.0
    %249 = vmatpush1.msra.mxu0 0.0
    %250 = vmatprep.subr.mxu0 0.0
    %251 = vmatpush1.msra.mxu0 0.0
    %252 = vmatprep.subr.mxu0 0.0
    %253 = vmatpush1.msra.mxu0 0.0
    %254 = vmatprep.subr.mxu0 0.0
    %255 = vmatpush1.msra.mxu0 0.0
    %256 = vmatprep.subr.mxu0 0.0
    %257 = vmatpush1.msra.mxu0 0.0
    %258 = vmatprep.subr.mxu0 0.0
    %259 = vmatpush1.msra.mxu0 0.0
    %260 = vmatprep.subr.mxu0 0.0
    %261 = vmatpush1.msra.mxu0 0.0
    %262 = vmatprep.subr.mxu0 0.0
    %263 = vmatpush1.msra.mxu0 0.0
    %264 = vmatprep.subr.mxu0 0.0
    %265 = vmatpush1.msra.mxu0 0.0
    %266 = vmatprep.subr.mxu0 0.0
    %267 = vmatpush1.msra.mxu0 0.0
    %268 = vmatprep.subr.mxu0 0.0
    %269 = vmatpush1.msra.mxu0 0.0
    %270 = vmatprep.subr.mxu0 0.0
    %271 = vmatpush1.msra.mxu0 0.0
    %272 = vmatprep.subr.mxu0 0.0
    %273 = vmatpush1.msra.mxu0 %v243
    %274 = vmatprep.subr.mxu0 0.0
    %275 = vmatpush1.msra.mxu0 %v242
    %276 = vmatprep.subr.mxu0 0.0
    %277 = vmatpush2.msra.mxu0 0.0
    %278 = vmatprep.subr.mxu0 0.0
    %279 = vmatpush2.msra.mxu0 0.0
    %280 = vmatprep.subr.mxu0 0.0
    %281 = vmatpush2.msra.mxu0 0.0
    %282 = vmatprep.subr.mxu0 0.0
    %283 = vmatpush2.msra.mxu0 0.0
    %284 = vmatprep.subr.mxu0 0.0
    %285 = vmatpush2.msra.mxu0 0.0
    %286 = vmatprep.subr.mxu0 0.0
    %287 = vmatpush2.msra.mxu0 0.0
    %288 = vmatprep.subr.mxu0 0.0
    %289 = vmatpush2.msra.mxu0 0.0
    %290 = vmatprep.subr.mxu0 0.0
    %291 = vmatpush2.msra.mxu0 0.0
    %292 = vmatprep.subr.mxu0 0.0
    %293 = vmatpush2.msra.mxu0 0.0
    %294 = vmatprep.subr.mxu0 0.0
    %295 = vmatpush2.msra.mxu0 0.0
    %296 = vmatprep.subr.mxu0 0.0
    %297 = vmatpush2.msra.mxu0 0.0
    %298 = vmatprep.subr.mxu0 0.0
    %299 = vmatpush2.msra.mxu0 0.0
    %300 = vmatprep.subr.mxu0 0.0
    %301 = vmatpush2.msra.mxu0 0.0
    %302 = vmatprep.subr.mxu0 0.0
    %303 = vmatpush2.msra.mxu0 0.0
    %304 = vmatprep.subr.mxu0 0.0
    %305 = vmatpush2.msra.mxu0 0.0
    %306 = vmatprep.subr.mxu0 0.0
    %307 = vmatpush2.msra.mxu0 0.0
    %308 = vmatprep.mubr.f32.mxu0 0.0
    %309 = vmatmul.mubr.f32.gmra.mxu0 %v50
    %v310 = vpop.f32.mrf.mxu0
    %v311 = vadd.f32 0.0, %v310
    %v312 = vpop.f32.mrf.mxu0
    %313 = vmatprep.mubr.f32.mxu0 0.0
    %314 = vmatmul.mubr.f32.gmra.mxu0 %v53
    %v315 = vpop.f32.mrf.mxu0
    %v316 = vadd.f32 0.0, %v315
    %v317 = vpop.f32.mrf.mxu0
    %318 = vmatprep.mubr.f32.mxu0 0.0
    %319 = vmatmul.mubr.f32.gmra.mxu0 %v56
    %v320 = vpop.f32.mrf.mxu0
    %v321 = vadd.f32 0.0, %v320
    %v322 = vpop.f32.mrf.mxu0
    %323 = vmatprep.mubr.f32.mxu0 0.0
    %324 = vmatmul.mubr.f32.gmra.mxu0 %v59
    %v325 = vpop.f32.mrf.mxu0
    %v326 = vadd.f32 0.0, %v325
    %v327 = vpop.f32.mrf.mxu0
    %328 = vdwg.mxu0
    %329 = vst.msk [vmem:[#allocation2 + $0x40] sm:$0xff] %vm146, %v311
    %330 = vst.msk [vmem:[#allocation2 + $0x48] sm:$0xff] %vm146, %v316
    %331 = vst.msk [vmem:[#allocation2 + $0x50] sm:$0xff] %vm146, %v321
    %332 = vst.msk [vmem:[#allocation2 + $0x58] sm:$0xff] %vm146, %v326
    %v333 = vld [vmem:[%s2] sm:$0xff]
    %v334 = vld [vmem:[%s2 + $0x8] sm:$0xff]
    %v335 = vld [vmem:[#allocation2] sm:$0xff]
    %v336 = vld [vmem:[#allocation2 + $0x8] sm:$0xff]
    %v337 = vld [vmem:[#allocation2 + $0x10] sm:$0xff]
    %v338 = vld [vmem:[#allocation2 + $0x18] sm:$0xff]
    %v339 = vld [vmem:[#allocation2 + $0x20] sm:$0xff]
    %v340 = vld [vmem:[#allocation2 + $0x28] sm:$0xff]
    %v341 = vld [vmem:[#allocation2 + $0x30] sm:$0xff]
    %v342 = vld [vmem:[#allocation2 + $0x38] sm:$0xff]
    %v343 = vld [vmem:[#allocation2 + $0x40] sm:$0xff]
    %v344 = vld [vmem:[#allocation2 + $0x48] sm:$0xff]
    %v345 = vld [vmem:[#allocation2 + $0x50] sm:$0xff]
    %v346 = vld [vmem:[#allocation2 + $0x58] sm:$0xff]
    %v347 = vlaneseq
    %v348 = vshrl.u32 %v347, 7
    %v349 = vsub.s32 0, %v348
    %v350 = vrot.slane %v45, %v349
    %vm351 = vcmask 785408
    %v353 = vsel %vm351, %v333, 0
    %v356 = vsel %vm351, %v334, 0
    %358 = vmatprep.subr.mxu0 0.0
    %359 = vmatpush1.msra.mxu0 0.0
    %360 = vmatprep.subr.mxu0 0.0
    %361 = vmatpush1.msra.mxu0 0.0
    %362 = vmatprep.subr.mxu0 0.0
    %363 = vmatpush1.msra.mxu0 0.0
    %364 = vmatprep.subr.mxu0 0.0
    %365 = vmatpush1.msra.mxu0 0.0
    %366 = vmatprep.subr.mxu0 0.0
    %367 = vmatpush1.msra.mxu0 %v346
    %368 = vmatprep.subr.mxu0 0.0
    %369 = vmatpush1.msra.mxu0 %v345
    %370 = vmatprep.subr.mxu0 0.0
    %371 = vmatpush1.msra.mxu0 %v344
    %372 = vmatprep.subr.mxu0 0.0
    %373 = vmatpush1.msra.mxu0 %v343
    %374 = vmatprep.subr.mxu0 0.0
    %375 = vmatpush1.msra.mxu0 %v342
    %376 = vmatprep.subr.mxu0 0.0
    %377 = vmatpush1.msra.mxu0 %v341
    %378 = vmatprep.subr.mxu0 0.0
    %379 = vmatpush1.msra.mxu0 %v340
    %380 = vmatprep.subr.mxu0 0.0
    %381 = vmatpush1.msra.mxu0 %v339
    %382 = vmatprep.subr.mxu0 0.0
    %383 = vmatpush1.msra.mxu0 %v338
    %384 = vmatprep.subr.mxu0 0.0
    %385 = vmatpush1.msra.mxu0 %v337
    %386 = vmatprep.subr.mxu0 0.0
    %387 = vmatpush1.msra.mxu0 %v336
    %388 = vmatprep.subr.mxu0 0.0
    %389 = vmatpush1.msra.mxu0 %v335
    %390 = vmatprep.subr.mxu0 0.0
    %391 = vmatpush2.msra.mxu0 0.0
    %392 = vmatprep.subr.mxu0 0.0
    %393 = vmatpush2.msra.mxu0 0.0
    %394 = vmatprep.subr.mxu0 0.0
    %395 = vmatpush2.msra.mxu0 0.0
    %396 = vmatprep.subr.mxu0 0.0
    %397 = vmatpush2.msra.mxu0 0.0
    %398 = vmatprep.subr.mxu0 0.0
    %399 = vmatpush2.msra.mxu0 0.0
    %400 = vmatprep.subr.mxu0 0.0
    %401 = vmatpush2.msra.mxu0 0.0
    %402 = vmatprep.subr.mxu0 0.0
    %403 = vmatpush2.msra.mxu0 0.0
    %404 = vmatprep.subr.mxu0 0.0
    %405 = vmatpush2.msra.mxu0 0.0
    %406 = vmatprep.subr.mxu0 0.0
    %407 = vmatpush2.msra.mxu0 0.0
    %408 = vmatprep.subr.mxu0 0.0
    %409 = vmatpush2.msra.mxu0 0.0
    %410 = vmatprep.subr.mxu0 0.0
    %411 = vmatpush2.msra.mxu0 0.0
    %412 = vmatprep.subr.mxu0 0.0
    %413 = vmatpush2.msra.mxu0 0.0
    %414 = vmatprep.subr.mxu0 0.0
    %415 = vmatpush2.msra.mxu0 0.0
    %416 = vmatprep.subr.mxu0 0.0
    %417 = vmatpush2.msra.mxu0 0.0
    %418 = vmatprep.subr.mxu0 0.0
    %419 = vmatpush2.msra.mxu0 0.0
    %420 = vmatprep.subr.mxu0 0.0
    %421 = vmatpush2.msra.mxu0 0.0
    %422 = vmatprep.mubr.f32.mxu0 0.0
    %423 = vmatmul.mubr.f32.gmra.mxu0 %v353
    %v424 = vpop.f32.mrf.mxu0
    %v425 = vadd.f32 %v350, %v424
    %v426 = vpop.f32.mrf.mxu0
    %427 = vmatprep.mubr.f32.mxu0 0.0
    %428 = vmatmul.mubr.f32.gmra.mxu0 %v356
    %v429 = vpop.f32.mrf.mxu0
    %v430 = vadd.f32 %v350, %v429
    %v431 = vpop.f32.mrf.mxu0
    %432 = vdwg.mxu0
    %vm433 = vcmp.ge.f32.partialorder %v425, 0.0
    %vm434 = vcmp.ge.f32.partialorder %v430, 0.0
    %v435 = vmul.f32 %v425, 0.2
    %v436 = vmul.f32 %v430, 0.2
    %v437 = vsel %vm433, %v425, %v435
    %v438 = vsel %vm434, %v430, %v436
    %v439 = vld [vmem:[%s4 + $0x1] sm:$0x1]
    %v440 = vld [vmem:[#allocation3 + $0x30] sm:$0xff]
    %v441 = vld [vmem:[#allocation3 + $0x38] sm:$0xff]
    %v442 = vld [vmem:[#allocation3 + $0x40] sm:$0xff]
    %v443 = vld [vmem:[#allocation3 + $0x48] sm:$0xff]
    %v445 = vsel %vm146, %v437, 0
    %v448 = vsel %vm146, %v438, 0
    %450 = vmatprep.subr.mxu0 0.0
    %451 = vmatpush1.msra.mxu0 0.0
    %452 = vmatprep.subr.mxu0 0.0
    %453 = vmatpush1.msra.mxu0 0.0
    %454 = vmatprep.subr.mxu0 0.0
    %455 = vmatpush1.msra.mxu0 0.0
    %456 = vmatprep.subr.mxu0 0.0
    %457 = vmatpush1.msra.mxu0 0.0
    %458 = vmatprep.subr.mxu0 0.0
    %459 = vmatpush1.msra.mxu0 0.0
    %460 = vmatprep.subr.mxu0 0.0
    %461 = vmatpush1.msra.mxu0 0.0
    %462 = vmatprep.subr.mxu0 0.0
    %463 = vmatpush1.msra.mxu0 0.0
    %464 = vmatprep.subr.mxu0 0.0
    %465 = vmatpush1.msra.mxu0 0.0
    %466 = vmatprep.subr.mxu0 0.0
    %467 = vmatpush1.msra.mxu0 0.0
    %468 = vmatprep.subr.mxu0 0.0
    %469 = vmatpush1.msra.mxu0 0.0
    %470 = vmatprep.subr.mxu0 0.0
    %471 = vmatpush1.msra.mxu0 0.0
    %472 = vmatprep.subr.mxu0 0.0
    %473 = vmatpush1.msra.mxu0 0.0
    %474 = vmatprep.subr.mxu0 0.0
    %475 = vmatpush1.msra.mxu0 %v443
    %476 = vmatprep.subr.mxu0 0.0
    %477 = vmatpush1.msra.mxu0 %v442
    %478 = vmatprep.subr.mxu0 0.0
    %479 = vmatpush1.msra.mxu0 %v441
    %480 = vmatprep.subr.mxu0 0.0
    %481 = vmatpush1.msra.mxu0 %v440
    %482 = vmatprep.subr.mxu0 0.0
    %483 = vmatpush2.msra.mxu0 0.0
    %484 = vmatprep.subr.mxu0 0.0
    %485 = vmatpush2.msra.mxu0 0.0
    %486 = vmatprep.subr.mxu0 0.0
    %487 = vmatpush2.msra.mxu0 0.0
    %488 = vmatprep.subr.mxu0 0.0
    %489 = vmatpush2.msra.mxu0 0.0
    %490 = vmatprep.subr.mxu0 0.0
    %491 = vmatpush2.msra.mxu0 0.0
    %492 = vmatprep.subr.mxu0 0.0
    %493 = vmatpush2.msra.mxu0 0.0
    %494 = vmatprep.subr.mxu0 0.0
    %495 = vmatpush2.msra.mxu0 0.0
    %496 = vmatprep.subr.mxu0 0.0
    %497 = vmatpush2.msra.mxu0 0.0
    %498 = vmatprep.subr.mxu0 0.0
    %499 = vmatpush2.msra.mxu0 0.0
    %500 = vmatprep.subr.mxu0 0.0
    %501 = vmatpush2.msra.mxu0 0.0
    %502 = vmatprep.subr.mxu0 0.0
    %503 = vmatpush2.msra.mxu0 0.0
    %504 = vmatprep.subr.mxu0 0.0
    %505 = vmatpush2.msra.mxu0 0.0
    %506 = vmatprep.subr.mxu0 0.0
    %507 = vmatpush2.msra.mxu0 0.0
    %508 = vmatprep.subr.mxu0 0.0
    %509 = vmatpush2.msra.mxu0 0.0
    %510 = vmatprep.subr.mxu0 0.0
    %511 = vmatpush2.msra.mxu0 0.0
    %512 = vmatprep.subr.mxu0 0.0
    %513 = vmatpush2.msra.mxu0 0.0
    %514 = vmatprep.mubr.f32.mxu0 0.0
    %515 = vmatmul.mubr.f32.gmra.mxu0 %v445
    %v516 = vpop.f32.mrf.mxu0
    %v517 = vadd.f32 0.0, %v516
    %v518 = vpop.f32.mrf.mxu0
    %519 = vmatprep.mubr.f32.mxu0 0.0
    %520 = vmatmul.mubr.f32.gmra.mxu0 %v448
    %v521 = vpop.f32.mrf.mxu0
    %v522 = vadd.f32 0.0, %v521
    %v523 = vpop.f32.mrf.mxu0
    %524 = vdwg.mxu0
    %vm525 = vcmask 523264
    %526 = vst.msk [vmem:[#allocation2] sm:$0xff] %vm525, %v517
    %527 = vst.msk [vmem:[#allocation2 + $0x8] sm:$0xff] %vm525, %v522
    %v528 = vld [vmem:[#allocation3 + $0x50] sm:$0xff]
    %v529 = vld [vmem:[#allocation3 + $0x58] sm:$0xff]
    %v530 = vld [vmem:[#allocation3 + $0x60] sm:$0xff]
    %v531 = vld [vmem:[#allocation3 + $0x68] sm:$0xff]
    %532 = vmatprep.subr.mxu0 0.0
    %533 = vmatpush1.msra.mxu0 0.0
    %534 = vmatprep.subr.mxu0 0.0
    %535 = vmatpush1.msra.mxu0 0.0
    %536 = vmatprep.subr.mxu0 0.0
    %537 = vmatpush1.msra.mxu0 0.0
    %538 = vmatprep.subr.mxu0 0.0
    %539 = vmatpush1.msra.mxu0 0.0
    %540 = vmatprep.subr.mxu0 0.0
    %541 = vmatpush1.msra.mxu0 0.0
    %542 = vmatprep.subr.mxu0 0.0
    %543 = vmatpush1.msra.mxu0 0.0
    %544 = vmatprep.subr.mxu0 0.0
    %545 = vmatpush1.msra.mxu0 0.0
    %546 = vmatprep.subr.mxu0 0.0
    %547 = vmatpush1.msra.mxu0 0.0
    %548 = vmatprep.subr.mxu0 0.0
    %549 = vmatpush1.msra.mxu0 0.0
    %550 = vmatprep.subr.mxu0 0.0
    %551 = vmatpush1.msra.mxu0 0.0
    %552 = vmatprep.subr.mxu0 0.0
    %553 = vmatpush1.msra.mxu0 0.0
    %554 = vmatprep.subr.mxu0 0.0
    %555 = vmatpush1.msra.mxu0 0.0
    %556 = vmatprep.subr.mxu0 0.0
    %557 = vmatpush1.msra.mxu0 %v531
    %558 = vmatprep.subr.mxu0 0.0
    %559 = vmatpush1.msra.mxu0 %v530
    %560 = vmatprep.subr.mxu0 0.0
    %561 = vmatpush1.msra.mxu0 %v529
    %562 = vmatprep.subr.mxu0 0.0
    %563 = vmatpush1.msra.mxu0 %v528
    %564 = vmatprep.subr.mxu0 0.0
    %565 = vmatpush2.msra.mxu0 0.0
    %566 = vmatprep.subr.mxu0 0.0
    %567 = vmatpush2.msra.mxu0 0.0
    %568 = vmatprep.subr.mxu0 0.0
    %569 = vmatpush2.msra.mxu0 0.0
    %570 = vmatprep.subr.mxu0 0.0
    %571 = vmatpush2.msra.mxu0 0.0
    %572 = vmatprep.subr.mxu0 0.0
    %573 = vmatpush2.msra.mxu0 0.0
    %574 = vmatprep.subr.mxu0 0.0
    %575 = vmatpush2.msra.mxu0 0.0
    %576 = vmatprep.subr.mxu0 0.0
    %577 = vmatpush2.msra.mxu0 0.0
    %578 = vmatprep.subr.mxu0 0.0
    %579 = vmatpush2.msra.mxu0 0.0
    %580 = vmatprep.subr.mxu0 0.0
    %581 = vmatpush2.msra.mxu0 0.0
    %582 = vmatprep.subr.mxu0 0.0
    %583 = vmatpush2.msra.mxu0 0.0
    %584 = vmatprep.subr.mxu0 0.0
    %585 = vmatpush2.msra.mxu0 0.0
    %586 = vmatprep.subr.mxu0 0.0
    %587 = vmatpush2.msra.mxu0 0.0
    %588 = vmatprep.subr.mxu0 0.0
    %589 = vmatpush2.msra.mxu0 0.0
    %590 = vmatprep.subr.mxu0 0.0
    %591 = vmatpush2.msra.mxu0 0.0
    %592 = vmatprep.subr.mxu0 0.0
    %593 = vmatpush2.msra.mxu0 0.0
    %594 = vmatprep.subr.mxu0 0.0
    %595 = vmatpush2.msra.mxu0 0.0
    %596 = vmatprep.mubr.f32.mxu0 0.0
    %597 = vmatmul.mubr.f32.gmra.mxu0 %v445
    %v598 = vpop.f32.mrf.mxu0
    %v599 = vadd.f32 0.0, %v598
    %v600 = vpop.f32.mrf.mxu0
    %601 = vmatprep.mubr.f32.mxu0 0.0
    %602 = vmatmul.mubr.f32.gmra.mxu0 %v448
    %v603 = vpop.f32.mrf.mxu0
    %v604 = vadd.f32 0.0, %v603
    %v605 = vpop.f32.mrf.mxu0
    %606 = vdwg.mxu0
    %607 = vst.msk [vmem:[#allocation2 + $0x10] sm:$0xff] %vm525, %v599
    %608 = vst.msk [vmem:[#allocation2 + $0x18] sm:$0xff] %vm525, %v604
    %v609 = vld [vmem:[#allocation3 + $0x70] sm:$0xff]
    %v610 = vld [vmem:[#allocation3 + $0x78] sm:$0xff]
    %v611 = vld [vmem:[#allocation3 + $0x80] sm:$0xff]
    %v612 = vld [vmem:[#allocation3 + $0x88] sm:$0xff]
    %613 = vmatprep.subr.mxu0 0.0
    %614 = vmatpush1.msra.mxu0 0.0
    %615 = vmatprep.subr.mxu0 0.0
    %616 = vmatpush1.msra.mxu0 0.0
    %617 = vmatprep.subr.mxu0 0.0
    %618 = vmatpush1.msra.mxu0 0.0
    %619 = vmatprep.subr.mxu0 0.0
    %620 = vmatpush1.msra.mxu0 0.0
    %621 = vmatprep.subr.mxu0 0.0
    %622 = vmatpush1.msra.mxu0 0.0
    %623 = vmatprep.subr.mxu0 0.0
    %624 = vmatpush1.msra.mxu0 0.0
    %625 = vmatprep.subr.mxu0 0.0
    %626 = vmatpush1.msra.mxu0 0.0
    %627 = vmatprep.subr.mxu0 0.0
    %628 = vmatpush1.msra.mxu0 0.0
    %629 = vmatprep.subr.mxu0 0.0
    %630 = vmatpush1.msra.mxu0 0.0
    %631 = vmatprep.subr.mxu0 0.0
    %632 = vmatpush1.msra.mxu0 0.0
    %633 = vmatprep.subr.mxu0 0.0
    %634 = vmatpush1.msra.mxu0 0.0
    %635 = vmatprep.subr.mxu0 0.0
    %636 = vmatpush1.msra.mxu0 0.0
    %637 = vmatprep.subr.mxu0 0.0
    %638 = vmatpush1.msra.mxu0 %v612
    %639 = vmatprep.subr.mxu0 0.0
    %640 = vmatpush1.msra.mxu0 %v611
    %641 = vmatprep.subr.mxu0 0.0
    %642 = vmatpush1.msra.mxu0 %v610
    %643 = vmatprep.subr.mxu0 0.0
    %644 = vmatpush1.msra.mxu0 %v609
    %645 = vmatprep.subr.mxu0 0.0
    %646 = vmatpush2.msra.mxu0 0.0
    %647 = vmatprep.subr.mxu0 0.0
    %648 = vmatpush2.msra.mxu0 0.0
    %649 = vmatprep.subr.mxu0 0.0
    %650 = vmatpush2.msra.mxu0 0.0
    %651 = vmatprep.subr.mxu0 0.0
    %652 = vmatpush2.msra.mxu0 0.0
    %653 = vmatprep.subr.mxu0 0.0
    %654 = vmatpush2.msra.mxu0 0.0
    %655 = vmatprep.subr.mxu0 0.0
    %656 = vmatpush2.msra.mxu0 0.0
    %657 = vmatprep.subr.mxu0 0.0
    %658 = vmatpush2.msra.mxu0 0.0
    %659 = vmatprep.subr.mxu0 0.0
    %660 = vmatpush2.msra.mxu0 0.0
    %661 = vmatprep.subr.mxu0 0.0
    %662 = vmatpush2.msra.mxu0 0.0
    %663 = vmatprep.subr.mxu0 0.0
    %664 = vmatpush2.msra.mxu0 0.0
    %665 = vmatprep.subr.mxu0 0.0
    %666 = vmatpush2.msra.mxu0 0.0
    %667 = vmatprep.subr.mxu0 0.0
    %668 = vmatpush2.msra.mxu0 0.0
    %669 = vmatprep.subr.mxu0 0.0
    %670 = vmatpush2.msra.mxu0 0.0
    %671 = vmatprep.subr.mxu0 0.0
    %672 = vmatpush2.msra.mxu0 0.0
    %673 = vmatprep.subr.mxu0 0.0
    %674 = vmatpush2.msra.mxu0 0.0
    %675 = vmatprep.subr.mxu0 0.0
    %676 = vmatpush2.msra.mxu0 0.0
    %677 = vmatprep.mubr.f32.mxu0 0.0
    %678 = vmatmul.mubr.f32.gmra.mxu0 %v445
    %v679 = vpop.f32.mrf.mxu0
    %v680 = vadd.f32 0.0, %v679
    %v681 = vpop.f32.mrf.mxu0
    %682 = vmatprep.mubr.f32.mxu0 0.0
    %683 = vmatmul.mubr.f32.gmra.mxu0 %v448
    %v684 = vpop.f32.mrf.mxu0
    %v685 = vadd.f32 0.0, %v684
    %v686 = vpop.f32.mrf.mxu0
    %687 = vdwg.mxu0
    %688 = vst.msk [vmem:[#allocation2 + $0x20] sm:$0xff] %vm525, %v680
    %689 = vst.msk [vmem:[#allocation2 + $0x28] sm:$0xff] %vm525, %v685
    %v690 = vld [vmem:[%s2 + $0x10] sm:$0xff]
    %v691 = vld [vmem:[#allocation2] sm:$0xff]
    %v692 = vld [vmem:[#allocation2 + $0x8] sm:$0xff]
    %v693 = vld [vmem:[#allocation2 + $0x10] sm:$0xff]
    %v694 = vld [vmem:[#allocation2 + $0x18] sm:$0xff]
    %v695 = vld [vmem:[#allocation2 + $0x20] sm:$0xff]
    %v696 = vld [vmem:[#allocation2 + $0x28] sm:$0xff]
    %v697 = vlaneseq
    %v698 = vshrl.u32 %v697, 7
    %v699 = vsub.s32 0, %v698
    %v700 = vrot.slane %v439, %v699
    %vm701 = vcmask 392192
    %v703 = vsel %vm701, %v690, 0
    %705 = vmatprep.subr.mxu0 0.0
    %706 = vmatpush1.msra.mxu0 0.0
    %707 = vmatprep.subr.mxu0 0.0
    %708 = vmatpush1.msra.mxu0 0.0
    %709 = vmatprep.subr.mxu0 0.0
    %710 = vmatpush1.msra.mxu0 0.0
    %711 = vmatprep.subr.mxu0 0.0
    %712 = vmatpush1.msra.mxu0 0.0
    %713 = vmatprep.subr.mxu0 0.0
    %714 = vmatpush1.msra.mxu0 0.0
    %715 = vmatprep.subr.mxu0 0.0
    %716 = vmatpush1.msra.mxu0 0.0
    %717 = vmatprep.subr.mxu0 0.0
    %718 = vmatpush1.msra.mxu0 0.0
    %719 = vmatprep.subr.mxu0 0.0
    %720 = vmatpush1.msra.mxu0 0.0
    %721 = vmatprep.subr.mxu0 0.0
    %722 = vmatpush1.msra.mxu0 0.0
    %723 = vmatprep.subr.mxu0 0.0
    %724 = vmatpush1.msra.mxu0 0.0
    %725 = vmatprep.subr.mxu0 0.0
    %726 = vmatpush1.msra.mxu0 %v696
    %727 = vmatprep.subr.mxu0 0.0
    %728 = vmatpush1.msra.mxu0 %v695
    %729 = vmatprep.subr.mxu0 0.0
    %730 = vmatpush1.msra.mxu0 %v694
    %731 = vmatprep.subr.mxu0 0.0
    %732 = vmatpush1.msra.mxu0 %v693
    %733 = vmatprep.subr.mxu0 0.0
    %734 = vmatpush1.msra.mxu0 %v692
    %735 = vmatprep.subr.mxu0 0.0
    %736 = vmatpush1.msra.mxu0 %v691
    %737 = vmatprep.subr.mxu0 0.0
    %738 = vmatpush2.msra.mxu0 0.0
    %739 = vmatprep.subr.mxu0 0.0
    %740 = vmatpush2.msra.mxu0 0.0
    %741 = vmatprep.subr.mxu0 0.0
    %742 = vmatpush2.msra.mxu0 0.0
    %743 = vmatprep.subr.mxu0 0.0
    %744 = vmatpush2.msra.mxu0 0.0
    %745 = vmatprep.subr.mxu0 0.0
    %746 = vmatpush2.msra.mxu0 0.0
    %747 = vmatprep.subr.mxu0 0.0
    %748 = vmatpush2.msra.mxu0 0.0
    %749 = vmatprep.subr.mxu0 0.0
    %750 = vmatpush2.msra.mxu0 0.0
    %751 = vmatprep.subr.mxu0 0.0
    %752 = vmatpush2.msra.mxu0 0.0
    %753 = vmatprep.subr.mxu0 0.0
    %754 = vmatpush2.msra.mxu0 0.0
    %755 = vmatprep.subr.mxu0 0.0
    %756 = vmatpush2.msra.mxu0 0.0
    %757 = vmatprep.subr.mxu0 0.0
    %758 = vmatpush2.msra.mxu0 0.0
    %759 = vmatprep.subr.mxu0 0.0
    %760 = vmatpush2.msra.mxu0 0.0
    %761 = vmatprep.subr.mxu0 0.0
    %762 = vmatpush2.msra.mxu0 0.0
    %763 = vmatprep.subr.mxu0 0.0
    %764 = vmatpush2.msra.mxu0 0.0
    %765 = vmatprep.subr.mxu0 0.0
    %766 = vmatpush2.msra.mxu0 0.0
    %767 = vmatprep.subr.mxu0 0.0
    %768 = vmatpush2.msra.mxu0 0.0
    %769 = vmatprep.mubr.f32.mxu0 0.0
    %770 = vmatmul.mubr.f32.gmra.mxu0 %v703
    %v771 = vpop.f32.mrf.mxu0
    %v772 = vadd.f32 %v700, %v771
    %v773 = vpop.f32.mrf.mxu0
    %774 = vdwg.mxu0
    %vm775 = vcmp.ge.f32.partialorder %v772, 0.0
    %v776 = vmul.f32 %v772, 0.2
    %v777 = vsel %vm775, %v772, %v776
    %v778 = vld [vmem:[%s4 + $0x2] sm:$0x1]
    %v779 = vld [vmem:[#allocation3 + $0x90] sm:$0xff]
    %v780 = vld [vmem:[#allocation3 + $0x98] sm:$0xff]
    %v781 = vld [vmem:[#allocation3 + $0xa0] sm:$0xff]
    %v782 = vld [vmem:[#allocation3 + $0xa8] sm:$0xff]
    %v783 = vld [vmem:[#allocation3 + $0xb0] sm:$0xff]
    %v784 = vld [vmem:[#allocation3 + $0xb8] sm:$0xff]
    %v785 = vld [vmem:[#allocation3 + $0xc0] sm:$0xff]
    %v786 = vld [vmem:[#allocation3 + $0xc8] sm:$0xff]
    %v788 = vsel %vm525, %v777, 0
    %790 = vmatprep.subr.mxu0 0.0
    %791 = vmatpush1.msra.mxu0 0.0
    %792 = vmatprep.subr.mxu0 0.0
    %793 = vmatpush1.msra.mxu0 0.0
    %794 = vmatprep.subr.mxu0 0.0
    %795 = vmatpush1.msra.mxu0 0.0
    %796 = vmatprep.subr.mxu0 0.0
    %797 = vmatpush1.msra.mxu0 0.0
    %798 = vmatprep.subr.mxu0 0.0
    %799 = vmatpush1.msra.mxu0 0.0
    %800 = vmatprep.subr.mxu0 0.0
    %801 = vmatpush1.msra.mxu0 0.0
    %802 = vmatprep.subr.mxu0 0.0
    %803 = vmatpush1.msra.mxu0 0.0
    %804 = vmatprep.subr.mxu0 0.0
    %805 = vmatpush1.msra.mxu0 0.0
    %806 = vmatprep.subr.mxu0 0.0
    %807 = vmatpush1.msra.mxu0 %v786
    %808 = vmatprep.subr.mxu0 0.0
    %809 = vmatpush1.msra.mxu0 %v785
    %810 = vmatprep.subr.mxu0 0.0
    %811 = vmatpush1.msra.mxu0 %v784
    %812 = vmatprep.subr.mxu0 0.0
    %813 = vmatpush1.msra.mxu0 %v783
    %814 = vmatprep.subr.mxu0 0.0
    %815 = vmatpush1.msra.mxu0 %v782
    %816 = vmatprep.subr.mxu0 0.0
    %817 = vmatpush1.msra.mxu0 %v781
    %818 = vmatprep.subr.mxu0 0.0
    %819 = vmatpush1.msra.mxu0 %v780
    %820 = vmatprep.subr.mxu0 0.0
    %821 = vmatpush1.msra.mxu0 %v779
    %822 = vmatprep.subr.mxu0 0.0
    %823 = vmatpush2.msra.mxu0 0.0
    %824 = vmatprep.subr.mxu0 0.0
    %825 = vmatpush2.msra.mxu0 0.0
    %826 = vmatprep.subr.mxu0 0.0
    %827 = vmatpush2.msra.mxu0 0.0
    %828 = vmatprep.subr.mxu0 0.0
    %829 = vmatpush2.msra.mxu0 0.0
    %830 = vmatprep.subr.mxu0 0.0
    %831 = vmatpush2.msra.mxu0 0.0
    %832 = vmatprep.subr.mxu0 0.0
    %833 = vmatpush2.msra.mxu0 0.0
    %834 = vmatprep.subr.mxu0 0.0
    %835 = vmatpush2.msra.mxu0 0.0
    %836 = vmatprep.subr.mxu0 0.0
    %837 = vmatpush2.msra.mxu0 0.0
    %838 = vmatprep.subr.mxu0 0.0
    %839 = vmatpush2.msra.mxu0 0.0
    %840 = vmatprep.subr.mxu0 0.0
    %841 = vmatpush2.msra.mxu0 0.0
    %842 = vmatprep.subr.mxu0 0.0
    %843 = vmatpush2.msra.mxu0 0.0
    %844 = vmatprep.subr.mxu0 0.0
    %845 = vmatpush2.msra.mxu0 0.0
    %846 = vmatprep.subr.mxu0 0.0
    %847 = vmatpush2.msra.mxu0 0.0
    %848 = vmatprep.subr.mxu0 0.0
    %849 = vmatpush2.msra.mxu0 0.0
    %850 = vmatprep.subr.mxu0 0.0
    %851 = vmatpush2.msra.mxu0 0.0
    %852 = vmatprep.subr.mxu0 0.0
    %853 = vmatpush2.msra.mxu0 0.0
    %854 = vmatprep.mubr.f32.mxu0 0.0
    %855 = vmatmul.mubr.f32.gmra.mxu0 %v788
    %v856 = vpop.f32.mrf.mxu0
    %v857 = vadd.f32 0.0, %v856
    %v858 = vpop.f32.mrf.mxu0
    %859 = vdwg.mxu0
    %860 = vst [vmem:[#allocation2] sm:$0xff] %v857
    %v861 = vld [vmem:[#allocation3 + $0xd0] sm:$0xff]
    %v862 = vld [vmem:[#allocation3 + $0xd8] sm:$0xff]
    %v863 = vld [vmem:[#allocation3 + $0xe0] sm:$0xff]
    %v864 = vld [vmem:[#allocation3 + $0xe8] sm:$0xff]
    %v865 = vld [vmem:[#allocation3 + $0xf0] sm:$0xff]
    %v866 = vld [vmem:[#allocation3 + $0xf8] sm:$0xff]
    %v867 = vld [vmem:[#allocation3 + $0x100] sm:$0xff]
    %v868 = vld [vmem:[#allocation3 + $0x108] sm:$0xff]
    %869 = vmatprep.subr.mxu0 0.0
    %870 = vmatpush1.msra.mxu0 0.0
    %871 = vmatprep.subr.mxu0 0.0
    %872 = vmatpush1.msra.mxu0 0.0
    %873 = vmatprep.subr.mxu0 0.0
    %874 = vmatpush1.msra.mxu0 0.0
    %875 = vmatprep.subr.mxu0 0.0
    %876 = vmatpush1.msra.mxu0 0.0
    %877 = vmatprep.subr.mxu0 0.0
    %878 = vmatpush1.msra.mxu0 0.0
    %879 = vmatprep.subr.mxu0 0.0
    %880 = vmatpush1.msra.mxu0 0.0
    %881 = vmatprep.subr.mxu0 0.0
    %882 = vmatpush1.msra.mxu0 0.0
    %883 = vmatprep.subr.mxu0 0.0
    %884 = vmatpush1.msra.mxu0 0.0
    %885 = vmatprep.subr.mxu0 0.0
    %886 = vmatpush1.msra.mxu0 %v868
    %887 = vmatprep.subr.mxu0 0.0
    %888 = vmatpush1.msra.mxu0 %v867
    %889 = vmatprep.subr.mxu0 0.0
    %890 = vmatpush1.msra.mxu0 %v866
    %891 = vmatprep.subr.mxu0 0.0
    %892 = vmatpush1.msra.mxu0 %v865
    %893 = vmatprep.subr.mxu0 0.0
    %894 = vmatpush1.msra.mxu0 %v864
    %895 = vmatprep.subr.mxu0 0.0
    %896 = vmatpush1.msra.mxu0 %v863
    %897 = vmatprep.subr.mxu0 0.0
    %898 = vmatpush1.msra.mxu0 %v862
    %899 = vmatprep.subr.mxu0 0.0
    %900 = vmatpush1.msra.mxu0 %v861
    %901 = vmatprep.subr.mxu0 0.0
    %902 = vmatpush2.msra.mxu0 0.0
    %903 = vmatprep.subr.mxu0 0.0
    %904 = vmatpush2.msra.mxu0 0.0
    %905 = vmatprep.subr.mxu0 0.0
    %906 = vmatpush2.msra.mxu0 0.0
    %907 = vmatprep.subr.mxu0 0.0
    %908 = vmatpush2.msra.mxu0 0.0
    %909 = vmatprep.subr.mxu0 0.0
    %910 = vmatpush2.msra.mxu0 0.0
    %911 = vmatprep.subr.mxu0 0.0
    %912 = vmatpush2.msra.mxu0 0.0
    %913 = vmatprep.subr.mxu0 0.0
    %914 = vmatpush2.msra.mxu0 0.0
    %915 = vmatprep.subr.mxu0 0.0
    %916 = vmatpush2.msra.mxu0 0.0
    %917 = vmatprep.subr.mxu0 0.0
    %918 = vmatpush2.msra.mxu0 0.0
    %919 = vmatprep.subr.mxu0 0.0
    %920 = vmatpush2.msra.mxu0 0.0
    %921 = vmatprep.subr.mxu0 0.0
    %922 = vmatpush2.msra.mxu0 0.0
    %923 = vmatprep.subr.mxu0 0.0
    %924 = vmatpush2.msra.mxu0 0.0
    %925 = vmatprep.subr.mxu0 0.0
    %926 = vmatpush2.msra.mxu0 0.0
    %927 = vmatprep.subr.mxu0 0.0
    %928 = vmatpush2.msra.mxu0 0.0
    %929 = vmatprep.subr.mxu0 0.0
    %930 = vmatpush2.msra.mxu0 0.0
    %931 = vmatprep.subr.mxu0 0.0
    %932 = vmatpush2.msra.mxu0 0.0
    %933 = vmatprep.mubr.f32.mxu0 0.0
    %934 = vmatmul.mubr.f32.gmra.mxu0 %v788
    %v935 = vpop.f32.mrf.mxu0
    %v936 = vadd.f32 0.0, %v935
    %v937 = vpop.f32.mrf.mxu0
    %938 = vdwg.mxu0
    %939 = vst [vmem:[#allocation2 + $0x8] sm:$0xff] %v936
    %v940 = vld [vmem:[#allocation3 + $0x110] sm:$0xff]
    %v941 = vld [vmem:[#allocation3 + $0x118] sm:$0xff]
    %v942 = vld [vmem:[#allocation3 + $0x120] sm:$0xff]
    %v943 = vld [vmem:[#allocation3 + $0x128] sm:$0xff]
    %v944 = vld [vmem:[#allocation3 + $0x130] sm:$0xff]
    %v945 = vld [vmem:[#allocation3 + $0x138] sm:$0xff]
    %v946 = vld [vmem:[#allocation3 + $0x140] sm:$0xff]
    %v947 = vld [vmem:[#allocation3 + $0x148] sm:$0xff]
    %948 = vmatprep.subr.mxu0 0.0
    %949 = vmatpush1.msra.mxu0 0.0
    %950 = vmatprep.subr.mxu0 0.0
    %951 = vmatpush1.msra.mxu0 0.0
    %952 = vmatprep.subr.mxu0 0.0
    %953 = vmatpush1.msra.mxu0 0.0
    %954 = vmatprep.subr.mxu0 0.0
    %955 = vmatpush1.msra.mxu0 0.0
    %956 = vmatprep.subr.mxu0 0.0
    %957 = vmatpush1.msra.mxu0 0.0
    %958 = vmatprep.subr.mxu0 0.0
    %959 = vmatpush1.msra.mxu0 0.0
    %960 = vmatprep.subr.mxu0 0.0
    %961 = vmatpush1.msra.mxu0 0.0
    %962 = vmatprep.subr.mxu0 0.0
    %963 = vmatpush1.msra.mxu0 0.0
    %964 = vmatprep.subr.mxu0 0.0
    %965 = vmatpush1.msra.mxu0 %v947
    %966 = vmatprep.subr.mxu0 0.0
    %967 = vmatpush1.msra.mxu0 %v946
    %968 = vmatprep.subr.mxu0 0.0
    %969 = vmatpush1.msra.mxu0 %v945
    %970 = vmatprep.subr.mxu0 0.0
    %971 = vmatpush1.msra.mxu0 %v944
    %972 = vmatprep.subr.mxu0 0.0
    %973 = vmatpush1.msra.mxu0 %v943
    %974 = vmatprep.subr.mxu0 0.0
    %975 = vmatpush1.msra.mxu0 %v942
    %976 = vmatprep.subr.mxu0 0.0
    %977 = vmatpush1.msra.mxu0 %v941
    %978 = vmatprep.subr.mxu0 0.0
    %979 = vmatpush1.msra.mxu0 %v940
    %980 = vmatprep.subr.mxu0 0.0
    %981 = vmatpush2.msra.mxu0 0.0
    %982 = vmatprep.subr.mxu0 0.0
    %983 = vmatpush2.msra.mxu0 0.0
    %984 = vmatprep.subr.mxu0 0.0
    %985 = vmatpush2.msra.mxu0 0.0
    %986 = vmatprep.subr.mxu0 0.0
    %987 = vmatpush2.msra.mxu0 0.0
    %988 = vmatprep.subr.mxu0 0.0
    %989 = vmatpush2.msra.mxu0 0.0
    %990 = vmatprep.subr.mxu0 0.0
    %991 = vmatpush2.msra.mxu0 0.0
    %992 = vmatprep.subr.mxu0 0.0
    %993 = vmatpush2.msra.mxu0 0.0
    %994 = vmatprep.subr.mxu0 0.0
    %995 = vmatpush2.msra.mxu0 0.0
    %996 = vmatprep.subr.mxu0 0.0
    %997 = vmatpush2.msra.mxu0 0.0
    %998 = vmatprep.subr.mxu0 0.0
    %999 = vmatpush2.msra.mxu0 0.0
    %1000 = vmatprep.subr.mxu0 0.0
    %1001 = vmatpush2.msra.mxu0 0.0
    %1002 = vmatprep.subr.mxu0 0.0
    %1003 = vmatpush2.msra.mxu0 0.0
    %1004 = vmatprep.subr.mxu0 0.0
    %1005 = vmatpush2.msra.mxu0 0.0
    %1006 = vmatprep.subr.mxu0 0.0
    %1007 = vmatpush2.msra.mxu0 0.0
    %1008 = vmatprep.subr.mxu0 0.0
    %1009 = vmatpush2.msra.mxu0 0.0
    %1010 = vmatprep.subr.mxu0 0.0
    %1011 = vmatpush2.msra.mxu0 0.0
    %1012 = vmatprep.mubr.f32.mxu0 0.0
    %1013 = vmatmul.mubr.f32.gmra.mxu0 %v788
    %v1014 = vpop.f32.mrf.mxu0
    %v1015 = vadd.f32 0.0, %v1014
    %v1016 = vpop.f32.mrf.mxu0
    %1017 = vdwg.mxu0
    %1018 = vst [vmem:[#allocation2 + $0x10] sm:$0xff] %v1015
    %v1019 = vld [vmem:[%s2 + $0x18] sm:$0xf]
    %v1020 = vld [vmem:[#allocation2] sm:$0xff]
    %v1021 = vld [vmem:[#allocation2 + $0x8] sm:$0xff]
    %v1022 = vld [vmem:[#allocation2 + $0x10] sm:$0xff]
    %v1023 = vlaneseq
    %v1024 = vshrl.u32 %v1023, 7
    %v1025 = vsub.s32 0, %v1024
    %v1026 = vrot.slane %v778, %v1025
    %vm1027 = vcmask 195584
    %v1029 = vsel %vm1027, %v1019, 0
    %1031 = vmatprep.subr.mxu0 0.0
    %1032 = vmatpush1.msra.mxu0 0.0
    %1033 = vmatprep.subr.mxu0 0.0
    %1034 = vmatpush1.msra.mxu0 0.0
    %1035 = vmatprep.subr.mxu0 0.0
    %1036 = vmatpush1.msra.mxu0 0.0
    %1037 = vmatprep.subr.mxu0 0.0
    %1038 = vmatpush1.msra.mxu0 0.0
    %1039 = vmatprep.subr.mxu0 0.0
    %1040 = vmatpush1.msra.mxu0 0.0
    %1041 = vmatprep.subr.mxu0 0.0
    %1042 = vmatpush1.msra.mxu0 0.0
    %1043 = vmatprep.subr.mxu0 0.0
    %1044 = vmatpush1.msra.mxu0 0.0
    %1045 = vmatprep.subr.mxu0 0.0
    %1046 = vmatpush1.msra.mxu0 0.0
    %1047 = vmatprep.subr.mxu0 0.0
    %1048 = vmatpush1.msra.mxu0 0.0
    %1049 = vmatprep.subr.mxu0 0.0
    %1050 = vmatpush1.msra.mxu0 0.0
    %1051 = vmatprep.subr.mxu0 0.0
    %1052 = vmatpush1.msra.mxu0 0.0
    %1053 = vmatprep.subr.mxu0 0.0
    %1054 = vmatpush1.msra.mxu0 0.0
    %1055 = vmatprep.subr.mxu0 0.0
    %1056 = vmatpush1.msra.mxu0 0.0
    %1057 = vmatprep.subr.mxu0 0.0
    %1058 = vmatpush1.msra.mxu0 %v1022
    %1059 = vmatprep.subr.mxu0 0.0
    %1060 = vmatpush1.msra.mxu0 %v1021
    %1061 = vmatprep.subr.mxu0 0.0
    %1062 = vmatpush1.msra.mxu0 %v1020
    %1063 = vmatprep.subr.mxu0 0.0
    %1064 = vmatpush2.msra.mxu0 0.0
    %1065 = vmatprep.subr.mxu0 0.0
    %1066 = vmatpush2.msra.mxu0 0.0
    %1067 = vmatprep.subr.mxu0 0.0
    %1068 = vmatpush2.msra.mxu0 0.0
    %1069 = vmatprep.subr.mxu0 0.0
    %1070 = vmatpush2.msra.mxu0 0.0
    %1071 = vmatprep.subr.mxu0 0.0
    %1072 = vmatpush2.msra.mxu0 0.0
    %1073 = vmatprep.subr.mxu0 0.0
    %1074 = vmatpush2.msra.mxu0 0.0
    %1075 = vmatprep.subr.mxu0 0.0
    %1076 = vmatpush2.msra.mxu0 0.0
    %1077 = vmatprep.subr.mxu0 0.0
    %1078 = vmatpush2.msra.mxu0 0.0
    %1079 = vmatprep.subr.mxu0 0.0
    %1080 = vmatpush2.msra.mxu0 0.0
    %1081 = vmatprep.subr.mxu0 0.0
    %1082 = vmatpush2.msra.mxu0 0.0
    %1083 = vmatprep.subr.mxu0 0.0
    %1084 = vmatpush2.msra.mxu0 0.0
    %1085 = vmatprep.subr.mxu0 0.0
    %1086 = vmatpush2.msra.mxu0 0.0
    %1087 = vmatprep.subr.mxu0 0.0
    %1088 = vmatpush2.msra.mxu0 0.0
    %1089 = vmatprep.subr.mxu0 0.0
    %1090 = vmatpush2.msra.mxu0 0.0
    %1091 = vmatprep.subr.mxu0 0.0
    %1092 = vmatpush2.msra.mxu0 0.0
    %1093 = vmatprep.subr.mxu0 0.0
    %1094 = vmatpush2.msra.mxu0 0.0
    %1095 = vmatprep.mubr.f32.mxu0 0.0
    %1096 = vmatmul.mubr.f32.gmra.mxu0 %v1029
    %v1097 = vpop.f32.mrf.mxu0
    %v1098 = vadd.f32 %v1026, %v1097
    %v1099 = vpop.f32.mrf.mxu0
    %1100 = vdwg.mxu0
    %vm1101 = vcmp.ge.f32.partialorder %v1098, 0.0
    %v1102 = vmul.f32 %v1098, 0.2
    %v1103 = vsel %vm1101, %v1098, %v1102
    %1104 = vst [vmem:[#allocation6] sm:$0xf] %v1103
    %v1105 = vld [vmem:[#allocation3 + $0x150] sm:$0xff]
    %v1106 = vld [vmem:[#allocation3 + $0x158] sm:$0xff]
    %v1107 = vld [vmem:[#allocation3 + $0x160] sm:$0xff]
    %v1108 = vld [vmem:[#allocation3 + $0x168] sm:$0xff]
    %v1109 = vld [vmem:[#allocation3 + $0x170] sm:$0xff]
    %v1110 = vld [vmem:[#allocation3 + $0x178] sm:$0xff]
    %v1111 = vld [vmem:[#allocation3 + $0x180] sm:$0xff]
    %v1112 = vld [vmem:[#allocation3 + $0x188] sm:$0xff]
    %v1113 = vld [vmem:[#allocation3 + $0x190] sm:$0xff]
    %v1114 = vld [vmem:[#allocation3 + $0x198] sm:$0xff]
    %v1115 = vld [vmem:[#allocation3 + $0x1a0] sm:$0xff]
    %v1116 = vld [vmem:[#allocation3 + $0x1a8] sm:$0xff]
    %v1117 = vld [vmem:[#allocation3 + $0x1b0] sm:$0xff]
    %v1118 = vld [vmem:[#allocation3 + $0x1b8] sm:$0xff]
    %v1119 = vld [vmem:[#allocation3 + $0x1c0] sm:$0xff]
    %v1120 = vld [vmem:[#allocation3 + $0x1c8] sm:$0xff]
    %1121 = vmatprep.subr.mxu0 0.0
    %1122 = vmatpush1.msra.mxu0 %v1120
    %1123 = vmatprep.subr.mxu0 0.0
    %1124 = vmatpush1.msra.mxu0 %v1119
    %1125 = vmatprep.subr.mxu0 0.0
    %1126 = vmatpush1.msra.mxu0 %v1118
    %1127 = vmatprep.subr.mxu0 0.0
    %1128 = vmatpush1.msra.mxu0 %v1117
    %1129 = vmatprep.subr.mxu0 0.0
    %1130 = vmatpush1.msra.mxu0 %v1116
    %1131 = vmatprep.subr.mxu0 0.0
    %1132 = vmatpush1.msra.mxu0 %v1115
    %1133 = vmatprep.subr.mxu0 0.0
    %1134 = vmatpush1.msra.mxu0 %v1114
    %1135 = vmatprep.subr.mxu0 0.0
    %1136 = vmatpush1.msra.mxu0 %v1113
    %1137 = vmatprep.subr.mxu0 0.0
    %1138 = vmatpush1.msra.mxu0 %v1112
    %1139 = vmatprep.subr.mxu0 0.0
    %1140 = vmatpush1.msra.mxu0 %v1111
    %1141 = vmatprep.subr.mxu0 0.0
    %1142 = vmatpush1.msra.mxu0 %v1110
    %1143 = vmatprep.subr.mxu0 0.0
    %1144 = vmatpush1.msra.mxu0 %v1109
    %1145 = vmatprep.subr.mxu0 0.0
    %1146 = vmatpush1.msra.mxu0 %v1108
    %1147 = vmatprep.subr.mxu0 0.0
    %1148 = vmatpush1.msra.mxu0 %v1107
    %1149 = vmatprep.subr.mxu0 0.0
    %1150 = vmatpush1.msra.mxu0 %v1106
    %1151 = vmatprep.subr.mxu0 0.0
    %1152 = vmatpush1.msra.mxu0 %v1105
    %1153 = vmatprep.subr.mxu0 0.0
    %1154 = vmatpush2.msra.mxu0 0.0
    %1155 = vmatprep.subr.mxu0 0.0
    %1156 = vmatpush2.msra.mxu0 0.0
    %1157 = vmatprep.subr.mxu0 0.0
    %1158 = vmatpush2.msra.mxu0 0.0
    %1159 = vmatprep.subr.mxu0 0.0
    %1160 = vmatpush2.msra.mxu0 0.0
    %1161 = vmatprep.subr.mxu0 0.0
    %1162 = vmatpush2.msra.mxu0 0.0
    %1163 = vmatprep.subr.mxu0 0.0
    %1164 = vmatpush2.msra.mxu0 0.0
    %1165 = vmatprep.subr.mxu0 0.0
    %1166 = vmatpush2.msra.mxu0 0.0
    %1167 = vmatprep.subr.mxu0 0.0
    %1168 = vmatpush2.msra.mxu0 0.0
    %1169 = vmatprep.subr.mxu0 0.0
    %1170 = vmatpush2.msra.mxu0 0.0
    %1171 = vmatprep.subr.mxu0 0.0
    %1172 = vmatpush2.msra.mxu0 0.0
    %1173 = vmatprep.subr.mxu0 0.0
    %1174 = vmatpush2.msra.mxu0 0.0
    %1175 = vmatprep.subr.mxu0 0.0
    %1176 = vmatpush2.msra.mxu0 0.0
    %1177 = vmatprep.subr.mxu0 0.0
    %1178 = vmatpush2.msra.mxu0 0.0
    %1179 = vmatprep.subr.mxu0 0.0
    %1180 = vmatpush2.msra.mxu0 0.0
    %1181 = vmatprep.subr.mxu0 0.0
    %1182 = vmatpush2.msra.mxu0 0.0
    %1183 = vmatprep.subr.mxu0 0.0
    %1184 = vmatpush2.msra.mxu0 0.0
    %1185 = vmatprep.mubr.f32.mxu0 0.0
    %1186 = vmatmul.mubr.f32.gmra.mxu0 %v1103
    %v1187 = vpop.f32.mrf.mxu0
    %v1188 = vadd.f32 0.0, %v1187
    %v1189 = vpop.f32.mrf.mxu0
    %1190 = vdwg.mxu0
    %vm1191 = vcmask 519168
    %1192 = vst.msk [vmem:[#allocation2] sm:$0xf] %vm1191, %v1188
    %v1193 = vld [vmem:[#allocation3 + $0x1d0] sm:$0xff]
    %v1194 = vld [vmem:[#allocation3 + $0x1d8] sm:$0xff]
    %v1195 = vld [vmem:[#allocation3 + $0x1e0] sm:$0xff]
    %v1196 = vld [vmem:[#allocation3 + $0x1e8] sm:$0xff]
    %v1197 = vld [vmem:[#allocation3 + $0x1f0] sm:$0xff]
    %v1198 = vld [vmem:[#allocation3 + $0x1f8] sm:$0xff]
    %v1199 = vld [vmem:[#allocation3 + $0x200] sm:$0xff]
    %v1200 = vld [vmem:[#allocation3 + $0x208] sm:$0xff]
    %v1201 = vld [vmem:[#allocation3 + $0x210] sm:$0xff]
    %v1202 = vld [vmem:[#allocation3 + $0x218] sm:$0xff]
    %v1203 = vld [vmem:[#allocation3 + $0x220] sm:$0xff]
    %v1204 = vld [vmem:[#allocation3 + $0x228] sm:$0xff]
    %v1205 = vld [vmem:[#allocation3 + $0x230] sm:$0xff]
    %v1206 = vld [vmem:[#allocation3 + $0x238] sm:$0xff]
    %v1207 = vld [vmem:[#allocation3 + $0x240] sm:$0xff]
    %v1208 = vld [vmem:[#allocation3 + $0x248] sm:$0xff]
    %1209 = vmatprep.subr.mxu0 0.0
    %1210 = vmatpush1.msra.mxu0 %v1208
    %1211 = vmatprep.subr.mxu0 0.0
    %1212 = vmatpush1.msra.mxu0 %v1207
    %1213 = vmatprep.subr.mxu0 0.0
    %1214 = vmatpush1.msra.mxu0 %v1206
    %1215 = vmatprep.subr.mxu0 0.0
    %1216 = vmatpush1.msra.mxu0 %v1205
    %1217 = vmatprep.subr.mxu0 0.0
    %1218 = vmatpush1.msra.mxu0 %v1204
    %1219 = vmatprep.subr.mxu0 0.0
    %1220 = vmatpush1.msra.mxu0 %v1203
    %1221 = vmatprep.subr.mxu0 0.0
    %1222 = vmatpush1.msra.mxu0 %v1202
    %1223 = vmatprep.subr.mxu0 0.0
    %1224 = vmatpush1.msra.mxu0 %v1201
    %1225 = vmatprep.subr.mxu0 0.0
    %1226 = vmatpush1.msra.mxu0 %v1200
    %1227 = vmatprep.subr.mxu0 0.0
    %1228 = vmatpush1.msra.mxu0 %v1199
    %1229 = vmatprep.subr.mxu0 0.0
    %1230 = vmatpush1.msra.mxu0 %v1198
    %1231 = vmatprep.subr.mxu0 0.0
    %1232 = vmatpush1.msra.mxu0 %v1197
    %1233 = vmatprep.subr.mxu0 0.0
    %1234 = vmatpush1.msra.mxu0 %v1196
    %1235 = vmatprep.subr.mxu0 0.0
    %1236 = vmatpush1.msra.mxu0 %v1195
    %1237 = vmatprep.subr.mxu0 0.0
    %1238 = vmatpush1.msra.mxu0 %v1194
    %1239 = vmatprep.subr.mxu0 0.0
    %1240 = vmatpush1.msra.mxu0 %v1193
    %1241 = vmatprep.subr.mxu0 0.0
    %1242 = vmatpush2.msra.mxu0 0.0
    %1243 = vmatprep.subr.mxu0 0.0
    %1244 = vmatpush2.msra.mxu0 0.0
    %1245 = vmatprep.subr.mxu0 0.0
    %1246 = vmatpush2.msra.mxu0 0.0
    %1247 = vmatprep.subr.mxu0 0.0
    %1248 = vmatpush2.msra.mxu0 0.0
    %1249 = vmatprep.subr.mxu0 0.0
    %1250 = vmatpush2.msra.mxu0 0.0
    %1251 = vmatprep.subr.mxu0 0.0
    %1252 = vmatpush2.msra.mxu0 0.0
    %1253 = vmatprep.subr.mxu0 0.0
    %1254 = vmatpush2.msra.mxu0 0.0
    %1255 = vmatprep.subr.mxu0 0.0
    %1256 = vmatpush2.msra.mxu0 0.0
    %1257 = vmatprep.subr.mxu0 0.0
    %1258 = vmatpush2.msra.mxu0 0.0
    %1259 = vmatprep.subr.mxu0 0.0
    %1260 = vmatpush2.msra.mxu0 0.0
    %1261 = vmatprep.subr.mxu0 0.0
    %1262 = vmatpush2.msra.mxu0 0.0
    %1263 = vmatprep.subr.mxu0 0.0
    %1264 = vmatpush2.msra.mxu0 0.0
    %1265 = vmatprep.subr.mxu0 0.0
    %1266 = vmatpush2.msra.mxu0 0.0
    %1267 = vmatprep.subr.mxu0 0.0
    %1268 = vmatpush2.msra.mxu0 0.0
    %1269 = vmatprep.subr.mxu0 0.0
    %1270 = vmatpush2.msra.mxu0 0.0
    %1271 = vmatprep.subr.mxu0 0.0
    %1272 = vmatpush2.msra.mxu0 0.0
    %1273 = vmatprep.mubr.f32.mxu0 0.0
    %1274 = vmatmul.mubr.f32.gmra.mxu0 %v1103
    %v1275 = vpop.f32.mrf.mxu0
    %v1276 = vadd.f32 0.0, %v1275
    %v1277 = vpop.f32.mrf.mxu0
    %1278 = vdwg.mxu0
    %1279 = vst.msk [vmem:[#allocation2 + $0x4] sm:$0xf] %vm1191, %v1276
    %v1280 = vld [vmem:[#allocation3 + $0x250] sm:$0xff]
    %v1281 = vld [vmem:[#allocation3 + $0x258] sm:$0xff]
    %v1282 = vld [vmem:[#allocation3 + $0x260] sm:$0xff]
    %v1283 = vld [vmem:[#allocation3 + $0x268] sm:$0xff]
    %v1284 = vld [vmem:[#allocation3 + $0x270] sm:$0xff]
    %v1285 = vld [vmem:[#allocation3 + $0x278] sm:$0xff]
    %v1286 = vld [vmem:[#allocation3 + $0x280] sm:$0xff]
    %v1287 = vld [vmem:[#allocation3 + $0x288] sm:$0xff]
    %v1288 = vld [vmem:[#allocation3 + $0x290] sm:$0xff]
    %v1289 = vld [vmem:[#allocation3 + $0x298] sm:$0xff]
    %v1290 = vld [vmem:[#allocation3 + $0x2a0] sm:$0xff]
    %v1291 = vld [vmem:[#allocation3 + $0x2a8] sm:$0xff]
    %v1292 = vld [vmem:[#allocation3 + $0x2b0] sm:$0xff]
    %v1293 = vld [vmem:[#allocation3 + $0x2b8] sm:$0xff]
    %v1294 = vld [vmem:[#allocation3 + $0x2c0] sm:$0xff]
    %v1295 = vld [vmem:[#allocation3 + $0x2c8] sm:$0xff]
    %1296 = vmatprep.subr.mxu0 0.0
    %1297 = vmatpush1.msra.mxu0 %v1295
    %1298 = vmatprep.subr.mxu0 0.0
    %1299 = vmatpush1.msra.mxu0 %v1294
    %1300 = vmatprep.subr.mxu0 0.0
    %1301 = vmatpush1.msra.mxu0 %v1293
    %1302 = vmatprep.subr.mxu0 0.0
    %1303 = vmatpush1.msra.mxu0 %v1292
    %1304 = vmatprep.subr.mxu0 0.0
    %1305 = vmatpush1.msra.mxu0 %v1291
    %1306 = vmatprep.subr.mxu0 0.0
    %1307 = vmatpush1.msra.mxu0 %v1290
    %1308 = vmatprep.subr.mxu0 0.0
    %1309 = vmatpush1.msra.mxu0 %v1289
    %1310 = vmatprep.subr.mxu0 0.0
    %1311 = vmatpush1.msra.mxu0 %v1288
    %1312 = vmatprep.subr.mxu0 0.0
    %1313 = vmatpush1.msra.mxu0 %v1287
    %1314 = vmatprep.subr.mxu0 0.0
    %1315 = vmatpush1.msra.mxu0 %v1286
    %1316 = vmatprep.subr.mxu0 0.0
    %1317 = vmatpush1.msra.mxu0 %v1285
    %1318 = vmatprep.subr.mxu0 0.0
    %1319 = vmatpush1.msra.mxu0 %v1284
    %1320 = vmatprep.subr.mxu0 0.0
    %1321 = vmatpush1.msra.mxu0 %v1283
    %1322 = vmatprep.subr.mxu0 0.0
    %1323 = vmatpush1.msra.mxu0 %v1282
    %1324 = vmatprep.subr.mxu0 0.0
    %1325 = vmatpush1.msra.mxu0 %v1281
    %1326 = vmatprep.subr.mxu0 0.0
    %1327 = vmatpush1.msra.mxu0 %v1280
    %1328 = vmatprep.subr.mxu0 0.0
    %1329 = vmatpush2.msra.mxu0 0.0
    %1330 = vmatprep.subr.mxu0 0.0
    %1331 = vmatpush2.msra.mxu0 0.0
    %1332 = vmatprep.subr.mxu0 0.0
    %1333 = vmatpush2.msra.mxu0 0.0
    %1334 = vmatprep.subr.mxu0 0.0
    %1335 = vmatpush2.msra.mxu0 0.0
    %1336 = vmatprep.subr.mxu0 0.0
    %1337 = vmatpush2.msra.mxu0 0.0
    %1338 = vmatprep.subr.mxu0 0.0
    %1339 = vmatpush2.msra.mxu0 0.0
    %1340 = vmatprep.subr.mxu0 0.0
    %1341 = vmatpush2.msra.mxu0 0.0
    %1342 = vmatprep.subr.mxu0 0.0
    %1343 = vmatpush2.msra.mxu0 0.0
    %1344 = vmatprep.subr.mxu0 0.0
    %1345 = vmatpush2.msra.mxu0 0.0
    %1346 = vmatprep.subr.mxu0 0.0
    %1347 = vmatpush2.msra.mxu0 0.0
    %1348 = vmatprep.subr.mxu0 0.0
    %1349 = vmatpush2.msra.mxu0 0.0
    %1350 = vmatprep.subr.mxu0 0.0
    %1351 = vmatpush2.msra.mxu0 0.0
    %1352 = vmatprep.subr.mxu0 0.0
    %1353 = vmatpush2.msra.mxu0 0.0
    %1354 = vmatprep.subr.mxu0 0.0
    %1355 = vmatpush2.msra.mxu0 0.0
    %1356 = vmatprep.subr.mxu0 0.0
    %1357 = vmatpush2.msra.mxu0 0.0
    %1358 = vmatprep.subr.mxu0 0.0
    %1359 = vmatpush2.msra.mxu0 0.0
    %1360 = vmatprep.mubr.f32.mxu0 0.0
    %1361 = vmatmul.mubr.f32.gmra.mxu0 %v1103
    %v1362 = vpop.f32.mrf.mxu0
    %v1363 = vadd.f32 0.0, %v1362
    %v1364 = vpop.f32.mrf.mxu0
    %1365 = vdwg.mxu0
    %1366 = vst.msk [vmem:[#allocation2 + $0x8] sm:$0xf] %vm1191, %v1363
    %v1367 = vld [vmem:[%s2 + $0x20] sm:$0xff]
    %v1368 = vld [vmem:[#allocation2] sm:$0xff]
    %v1369 = vld [vmem:[#allocation2 + $0x8] sm:$0xf]
    %v1370 = vld [vmem:[%s3] sm:$0xff]
    %vm1371 = vcmask 97280
    %v1373 = vsel %vm1371, %v1367, 0
    %vm1375 = vcmask 1043456
    %v1377 = vsel %vm1375, %v1369, 0
    %1379 = vmatprep.subr.mxu0 0.0
    %1380 = vmatpush1.msra.mxu0 0.0
    %1381 = vmatprep.subr.mxu0 0.0
    %1382 = vmatpush1.msra.mxu0 0.0
    %1383 = vmatprep.subr.mxu0 0.0
    %1384 = vmatpush1.msra.mxu0 0.0
    %1385 = vmatprep.subr.mxu0 0.0
    %1386 = vmatpush1.msra.mxu0 0.0
    %1387 = vmatprep.subr.mxu0 0.0
    %1388 = vmatpush1.msra.mxu0 0.0
    %1389 = vmatprep.subr.mxu0 0.0
    %1390 = vmatpush1.msra.mxu0 0.0
    %1391 = vmatprep.subr.mxu0 0.0
    %1392 = vmatpush1.msra.mxu0 0.0
    %1393 = vmatprep.subr.mxu0 0.0
    %1394 = vmatpush1.msra.mxu0 0.0
    %1395 = vmatprep.subr.mxu0 0.0
    %1396 = vmatpush1.msra.mxu0 0.0
    %1397 = vmatprep.subr.mxu0 0.0
    %1398 = vmatpush1.msra.mxu0 0.0
    %1399 = vmatprep.subr.mxu0 0.0
    %1400 = vmatpush1.msra.mxu0 0.0
    %1401 = vmatprep.subr.mxu0 0.0
    %1402 = vmatpush1.msra.mxu0 0.0
    %1403 = vmatprep.subr.mxu0 0.0
    %1404 = vmatpush1.msra.mxu0 0.0
    %1405 = vmatprep.subr.mxu0 0.0
    %1406 = vmatpush1.msra.mxu0 0.0
    %1407 = vmatprep.subr.mxu0 0.0
    %1408 = vmatpush1.msra.mxu0 %v1377
    %1409 = vmatprep.subr.mxu0 0.0
    %1410 = vmatpush1.msra.mxu0 %v1368
    %1411 = vmatprep.subr.mxu0 0.0
    %1412 = vmatpush2.msra.mxu0 0.0
    %1413 = vmatprep.subr.mxu0 0.0
    %1414 = vmatpush2.msra.mxu0 0.0
    %1415 = vmatprep.subr.mxu0 0.0
    %1416 = vmatpush2.msra.mxu0 0.0
    %1417 = vmatprep.subr.mxu0 0.0
    %1418 = vmatpush2.msra.mxu0 0.0
    %1419 = vmatprep.subr.mxu0 0.0
    %1420 = vmatpush2.msra.mxu0 0.0
    %1421 = vmatprep.subr.mxu0 0.0
    %1422 = vmatpush2.msra.mxu0 0.0
    %1423 = vmatprep.subr.mxu0 0.0
    %1424 = vmatpush2.msra.mxu0 0.0
    %1425 = vmatprep.subr.mxu0 0.0
    %1426 = vmatpush2.msra.mxu0 0.0
    %1427 = vmatprep.subr.mxu0 0.0
    %1428 = vmatpush2.msra.mxu0 0.0
    %1429 = vmatprep.subr.mxu0 0.0
    %1430 = vmatpush2.msra.mxu0 0.0
    %1431 = vmatprep.subr.mxu0 0.0
    %1432 = vmatpush2.msra.mxu0 0.0
    %1433 = vmatprep.subr.mxu0 0.0
    %1434 = vmatpush2.msra.mxu0 0.0
    %1435 = vmatprep.subr.mxu0 0.0
    %1436 = vmatpush2.msra.mxu0 0.0
    %1437 = vmatprep.subr.mxu0 0.0
    %1438 = vmatpush2.msra.mxu0 0.0
    %1439 = vmatprep.subr.mxu0 0.0
    %1440 = vmatpush2.msra.mxu0 0.0
    %1441 = vmatprep.subr.mxu0 0.0
    %1442 = vmatpush2.msra.mxu0 0.0
    %1443 = vmatprep.mubr.f32.mxu0 0.0
    %1444 = vmatmul.mubr.f32.gmra.mxu0 %v1373
    %v1445 = vpop.f32.mrf.mxu0
    %v1446 = vadd.f32 %v1370, %v1445
    %v1447 = vpop.f32.mrf.mxu0
    %1448 = vdwg.mxu0
    %vm1449 = vcmp.ge.f32.partialorder %v1446, 0.0
    %v1450 = vmul.f32 %v1446, 0.2
    %v1451 = vsel %vm1449, %v1446, %v1450
    %v1452 = vld [vmem:[#allocation3 + $0x2d0] sm:$0xff]
    %v1453 = vld [vmem:[#allocation3 + $0x2d8] sm:$0xff]
    %v1454 = vld [vmem:[#allocation3 + $0x2e0] sm:$0xff]
    %v1455 = vld [vmem:[#allocation3 + $0x2e8] sm:$0xff]
    %v1456 = vld [vmem:[#allocation3 + $0x2f0] sm:$0xff]
    %v1457 = vld [vmem:[#allocation3 + $0x2f8] sm:$0xff]
    %v1458 = vld [vmem:[#allocation3 + $0x300] sm:$0xff]
    %v1459 = vld [vmem:[#allocation3 + $0x308] sm:$0xff]
    %v1461 = vsel %vm525, %v1451, 0
    %1463 = vmatprep.subr.mxu0 0.0
    %1464 = vmatpush1.msra.mxu0 0.0
    %1465 = vmatprep.subr.mxu0 0.0
    %1466 = vmatpush1.msra.mxu0 0.0
    %1467 = vmatprep.subr.mxu0 0.0
    %1468 = vmatpush1.msra.mxu0 0.0
    %1469 = vmatprep.subr.mxu0 0.0
    %1470 = vmatpush1.msra.mxu0 0.0
    %1471 = vmatprep.subr.mxu0 0.0
    %1472 = vmatpush1.msra.mxu0 0.0
    %1473 = vmatprep.subr.mxu0 0.0
    %1474 = vmatpush1.msra.mxu0 0.0
    %1475 = vmatprep.subr.mxu0 0.0
    %1476 = vmatpush1.msra.mxu0 0.0
    %1477 = vmatprep.subr.mxu0 0.0
    %1478 = vmatpush1.msra.mxu0 0.0
    %1479 = vmatprep.subr.mxu0 0.0
    %1480 = vmatpush1.msra.mxu0 %v1459
    %1481 = vmatprep.subr.mxu0 0.0
    %1482 = vmatpush1.msra.mxu0 %v1458
    %1483 = vmatprep.subr.mxu0 0.0
    %1484 = vmatpush1.msra.mxu0 %v1457
    %1485 = vmatprep.subr.mxu0 0.0
    %1486 = vmatpush1.msra.mxu0 %v1456
    %1487 = vmatprep.subr.mxu0 0.0
    %1488 = vmatpush1.msra.mxu0 %v1455
    %1489 = vmatprep.subr.mxu0 0.0
    %1490 = vmatpush1.msra.mxu0 %v1454
    %1491 = vmatprep.subr.mxu0 0.0
    %1492 = vmatpush1.msra.mxu0 %v1453
    %1493 = vmatprep.subr.mxu0 0.0
    %1494 = vmatpush1.msra.mxu0 %v1452
    %1495 = vmatprep.subr.mxu0 0.0
    %1496 = vmatpush2.msra.mxu0 0.0
    %1497 = vmatprep.subr.mxu0 0.0
    %1498 = vmatpush2.msra.mxu0 0.0
    %1499 = vmatprep.subr.mxu0 0.0
    %1500 = vmatpush2.msra.mxu0 0.0
    %1501 = vmatprep.subr.mxu0 0.0
    %1502 = vmatpush2.msra.mxu0 0.0
    %1503 = vmatprep.subr.mxu0 0.0
    %1504 = vmatpush2.msra.mxu0 0.0
    %1505 = vmatprep.subr.mxu0 0.0
    %1506 = vmatpush2.msra.mxu0 0.0
    %1507 = vmatprep.subr.mxu0 0.0
    %1508 = vmatpush2.msra.mxu0 0.0
    %1509 = vmatprep.subr.mxu0 0.0
    %1510 = vmatpush2.msra.mxu0 0.0
    %1511 = vmatprep.subr.mxu0 0.0
    %1512 = vmatpush2.msra.mxu0 0.0
    %1513 = vmatprep.subr.mxu0 0.0
    %1514 = vmatpush2.msra.mxu0 0.0
    %1515 = vmatprep.subr.mxu0 0.0
    %1516 = vmatpush2.msra.mxu0 0.0
    %1517 = vmatprep.subr.mxu0 0.0
    %1518 = vmatpush2.msra.mxu0 0.0
    %1519 = vmatprep.subr.mxu0 0.0
    %1520 = vmatpush2.msra.mxu0 0.0
    %1521 = vmatprep.subr.mxu0 0.0
    %1522 = vmatpush2.msra.mxu0 0.0
    %1523 = vmatprep.subr.mxu0 0.0
    %1524 = vmatpush2.msra.mxu0 0.0
    %1525 = vmatprep.subr.mxu0 0.0
    %1526 = vmatpush2.msra.mxu0 0.0
    %1527 = vmatprep.mubr.f32.mxu0 0.0
    %1528 = vmatmul.mubr.f32.gmra.mxu0 %v1461
    %v1529 = vpop.f32.mrf.mxu0
    %v1530 = vadd.f32 0.0, %v1529
    %v1531 = vpop.f32.mrf.mxu0
    %1532 = vdwg.mxu0
    %1533 = vst.msk [vmem:[#allocation2] sm:$0xff] %vm525, %v1530
    %v1534 = vld [vmem:[#allocation3 + $0x310] sm:$0xff]
    %v1535 = vld [vmem:[#allocation3 + $0x318] sm:$0xff]
    %v1536 = vld [vmem:[#allocation3 + $0x320] sm:$0xff]
    %v1537 = vld [vmem:[#allocation3 + $0x328] sm:$0xff]
    %v1538 = vld [vmem:[#allocation3 + $0x330] sm:$0xff]
    %v1539 = vld [vmem:[#allocation3 + $0x338] sm:$0xff]
    %v1540 = vld [vmem:[#allocation3 + $0x340] sm:$0xff]
    %v1541 = vld [vmem:[#allocation3 + $0x348] sm:$0xff]
    %1542 = vmatprep.subr.mxu0 0.0
    %1543 = vmatpush1.msra.mxu0 0.0
    %1544 = vmatprep.subr.mxu0 0.0
    %1545 = vmatpush1.msra.mxu0 0.0
    %1546 = vmatprep.subr.mxu0 0.0
    %1547 = vmatpush1.msra.mxu0 0.0
    %1548 = vmatprep.subr.mxu0 0.0
    %1549 = vmatpush1.msra.mxu0 0.0
    %1550 = vmatprep.subr.mxu0 0.0
    %1551 = vmatpush1.msra.mxu0 0.0
    %1552 = vmatprep.subr.mxu0 0.0
    %1553 = vmatpush1.msra.mxu0 0.0
    %1554 = vmatprep.subr.mxu0 0.0
    %1555 = vmatpush1.msra.mxu0 0.0
    %1556 = vmatprep.subr.mxu0 0.0
    %1557 = vmatpush1.msra.mxu0 0.0
    %1558 = vmatprep.subr.mxu0 0.0
    %1559 = vmatpush1.msra.mxu0 %v1541
    %1560 = vmatprep.subr.mxu0 0.0
    %1561 = vmatpush1.msra.mxu0 %v1540
    %1562 = vmatprep.subr.mxu0 0.0
    %1563 = vmatpush1.msra.mxu0 %v1539
    %1564 = vmatprep.subr.mxu0 0.0
    %1565 = vmatpush1.msra.mxu0 %v1538
    %1566 = vmatprep.subr.mxu0 0.0
    %1567 = vmatpush1.msra.mxu0 %v1537
    %1568 = vmatprep.subr.mxu0 0.0
    %1569 = vmatpush1.msra.mxu0 %v1536
    %1570 = vmatprep.subr.mxu0 0.0
    %1571 = vmatpush1.msra.mxu0 %v1535
    %1572 = vmatprep.subr.mxu0 0.0
    %1573 = vmatpush1.msra.mxu0 %v1534
    %1574 = vmatprep.subr.mxu0 0.0
    %1575 = vmatpush2.msra.mxu0 0.0
    %1576 = vmatprep.subr.mxu0 0.0
    %1577 = vmatpush2.msra.mxu0 0.0
    %1578 = vmatprep.subr.mxu0 0.0
    %1579 = vmatpush2.msra.mxu0 0.0
    %1580 = vmatprep.subr.mxu0 0.0
    %1581 = vmatpush2.msra.mxu0 0.0
    %1582 = vmatprep.subr.mxu0 0.0
    %1583 = vmatpush2.msra.mxu0 0.0
    %1584 = vmatprep.subr.mxu0 0.0
    %1585 = vmatpush2.msra.mxu0 0.0
    %1586 = vmatprep.subr.mxu0 0.0
    %1587 = vmatpush2.msra.mxu0 0.0
    %1588 = vmatprep.subr.mxu0 0.0
    %1589 = vmatpush2.msra.mxu0 0.0
    %1590 = vmatprep.subr.mxu0 0.0
    %1591 = vmatpush2.msra.mxu0 0.0
    %1592 = vmatprep.subr.mxu0 0.0
    %1593 = vmatpush2.msra.mxu0 0.0
    %1594 = vmatprep.subr.mxu0 0.0
    %1595 = vmatpush2.msra.mxu0 0.0
    %1596 = vmatprep.subr.mxu0 0.0
    %1597 = vmatpush2.msra.mxu0 0.0
    %1598 = vmatprep.subr.mxu0 0.0
    %1599 = vmatpush2.msra.mxu0 0.0
    %1600 = vmatprep.subr.mxu0 0.0
    %1601 = vmatpush2.msra.mxu0 0.0
    %1602 = vmatprep.subr.mxu0 0.0
    %1603 = vmatpush2.msra.mxu0 0.0
    %1604 = vmatprep.subr.mxu0 0.0
    %1605 = vmatpush2.msra.mxu0 0.0
    %1606 = vmatprep.mubr.f32.mxu0 0.0
    %1607 = vmatmul.mubr.f32.gmra.mxu0 %v1461
    %v1608 = vpop.f32.mrf.mxu0
    %v1609 = vadd.f32 0.0, %v1608
    %v1610 = vpop.f32.mrf.mxu0
    %1611 = vdwg.mxu0
    %1612 = vst.msk [vmem:[#allocation2 + $0x8] sm:$0xff] %vm525, %v1609
    %v1613 = vld [vmem:[#allocation3 + $0x350] sm:$0xff]
    %v1614 = vld [vmem:[#allocation3 + $0x358] sm:$0xff]
    %v1615 = vld [vmem:[#allocation3 + $0x360] sm:$0xff]
    %v1616 = vld [vmem:[#allocation3 + $0x368] sm:$0xff]
    %v1617 = vld [vmem:[#allocation3 + $0x370] sm:$0xff]
    %v1618 = vld [vmem:[#allocation3 + $0x378] sm:$0xff]
    %v1619 = vld [vmem:[#allocation3 + $0x380] sm:$0xff]
    %v1620 = vld [vmem:[#allocation3 + $0x388] sm:$0xff]
    %1621 = vmatprep.subr.mxu0 0.0
    %1622 = vmatpush1.msra.mxu0 0.0
    %1623 = vmatprep.subr.mxu0 0.0
    %1624 = vmatpush1.msra.mxu0 0.0
    %1625 = vmatprep.subr.mxu0 0.0
    %1626 = vmatpush1.msra.mxu0 0.0
    %1627 = vmatprep.subr.mxu0 0.0
    %1628 = vmatpush1.msra.mxu0 0.0
    %1629 = vmatprep.subr.mxu0 0.0
    %1630 = vmatpush1.msra.mxu0 0.0
    %1631 = vmatprep.subr.mxu0 0.0
    %1632 = vmatpush1.msra.mxu0 0.0
    %1633 = vmatprep.subr.mxu0 0.0
    %1634 = vmatpush1.msra.mxu0 0.0
    %1635 = vmatprep.subr.mxu0 0.0
    %1636 = vmatpush1.msra.mxu0 0.0
    %1637 = vmatprep.subr.mxu0 0.0
    %1638 = vmatpush1.msra.mxu0 %v1620
    %1639 = vmatprep.subr.mxu0 0.0
    %1640 = vmatpush1.msra.mxu0 %v1619
    %1641 = vmatprep.subr.mxu0 0.0
    %1642 = vmatpush1.msra.mxu0 %v1618
    %1643 = vmatprep.subr.mxu0 0.0
    %1644 = vmatpush1.msra.mxu0 %v1617
    %1645 = vmatprep.subr.mxu0 0.0
    %1646 = vmatpush1.msra.mxu0 %v1616
    %1647 = vmatprep.subr.mxu0 0.0
    %1648 = vmatpush1.msra.mxu0 %v1615
    %1649 = vmatprep.subr.mxu0 0.0
    %1650 = vmatpush1.msra.mxu0 %v1614
    %1651 = vmatprep.subr.mxu0 0.0
    %1652 = vmatpush1.msra.mxu0 %v1613
    %1653 = vmatprep.subr.mxu0 0.0
    %1654 = vmatpush2.msra.mxu0 0.0
    %1655 = vmatprep.subr.mxu0 0.0
    %1656 = vmatpush2.msra.mxu0 0.0
    %1657 = vmatprep.subr.mxu0 0.0
    %1658 = vmatpush2.msra.mxu0 0.0
    %1659 = vmatprep.subr.mxu0 0.0
    %1660 = vmatpush2.msra.mxu0 0.0
    %1661 = vmatprep.subr.mxu0 0.0
    %1662 = vmatpush2.msra.mxu0 0.0
    %1663 = vmatprep.subr.mxu0 0.0
    %1664 = vmatpush2.msra.mxu0 0.0
    %1665 = vmatprep.subr.mxu0 0.0
    %1666 = vmatpush2.msra.mxu0 0.0
    %1667 = vmatprep.subr.mxu0 0.0
    %1668 = vmatpush2.msra.mxu0 0.0
    %1669 = vmatprep.subr.mxu0 0.0
    %1670 = vmatpush2.msra.mxu0 0.0
    %1671 = vmatprep.subr.mxu0 0.0
    %1672 = vmatpush2.msra.mxu0 0.0
    %1673 = vmatprep.subr.mxu0 0.0
    %1674 = vmatpush2.msra.mxu0 0.0
    %1675 = vmatprep.subr.mxu0 0.0
    %1676 = vmatpush2.msra.mxu0 0.0
    %1677 = vmatprep.subr.mxu0 0.0
    %1678 = vmatpush2.msra.mxu0 0.0
    %1679 = vmatprep.subr.mxu0 0.0
    %1680 = vmatpush2.msra.mxu0 0.0
    %1681 = vmatprep.subr.mxu0 0.0
    %1682 = vmatpush2.msra.mxu0 0.0
    %1683 = vmatprep.subr.mxu0 0.0
    %1684 = vmatpush2.msra.mxu0 0.0
    %1685 = vmatprep.mubr.f32.mxu0 0.0
    %1686 = vmatmul.mubr.f32.gmra.mxu0 %v1461
    %v1687 = vpop.f32.mrf.mxu0
    %v1688 = vadd.f32 0.0, %v1687
    %v1689 = vpop.f32.mrf.mxu0
    %1690 = vdwg.mxu0
    %1691 = vst.msk [vmem:[#allocation2 + $0x10] sm:$0xff] %vm525, %v1688
    %v1692 = vld [vmem:[%s2 + $0x28] sm:$0xff]
    %v1693 = vld [vmem:[%s2 + $0x30] sm:$0xff]
    %v1694 = vld [vmem:[#allocation2] sm:$0xff]
    %v1695 = vld [vmem:[#allocation2 + $0x8] sm:$0xff]
    %v1696 = vld [vmem:[#allocation2 + $0x10] sm:$0xff]
    %v1697 = vld [vmem:[%s3 + $0x8] sm:$0xff]
    %v1698 = vld [vmem:[%s3 + $0x10] sm:$0xff]
    %v1700 = vsel %vm1027, %v1692, 0
    %v1703 = vsel %vm1027, %v1693, 0
    %1705 = vmatprep.subr.mxu0 0.0
    %1706 = vmatpush1.msra.mxu0 0.0
    %1707 = vmatprep.subr.mxu0 0.0
    %1708 = vmatpush1.msra.mxu0 0.0
    %1709 = vmatprep.subr.mxu0 0.0
    %1710 = vmatpush1.msra.mxu0 0.0
    %1711 = vmatprep.subr.mxu0 0.0
    %1712 = vmatpush1.msra.mxu0 0.0
    %1713 = vmatprep.subr.mxu0 0.0
    %1714 = vmatpush1.msra.mxu0 0.0
    %1715 = vmatprep.subr.mxu0 0.0
    %1716 = vmatpush1.msra.mxu0 0.0
    %1717 = vmatprep.subr.mxu0 0.0
    %1718 = vmatpush1.msra.mxu0 0.0
    %1719 = vmatprep.subr.mxu0 0.0
    %1720 = vmatpush1.msra.mxu0 0.0
    %1721 = vmatprep.subr.mxu0 0.0
    %1722 = vmatpush1.msra.mxu0 0.0
    %1723 = vmatprep.subr.mxu0 0.0
    %1724 = vmatpush1.msra.mxu0 0.0
    %1725 = vmatprep.subr.mxu0 0.0
    %1726 = vmatpush1.msra.mxu0 0.0
    %1727 = vmatprep.subr.mxu0 0.0
    %1728 = vmatpush1.msra.mxu0 0.0
    %1729 = vmatprep.subr.mxu0 0.0
    %1730 = vmatpush1.msra.mxu0 0.0
    %1731 = vmatprep.subr.mxu0 0.0
    %1732 = vmatpush1.msra.mxu0 %v1696
    %1733 = vmatprep.subr.mxu0 0.0
    %1734 = vmatpush1.msra.mxu0 %v1695
    %1735 = vmatprep.subr.mxu0 0.0
    %1736 = vmatpush1.msra.mxu0 %v1694
    %1737 = vmatprep.subr.mxu0 0.0
    %1738 = vmatpush2.msra.mxu0 0.0
    %1739 = vmatprep.subr.mxu0 0.0
    %1740 = vmatpush2.msra.mxu0 0.0
    %1741 = vmatprep.subr.mxu0 0.0
    %1742 = vmatpush2.msra.mxu0 0.0
    %1743 = vmatprep.subr.mxu0 0.0
    %1744 = vmatpush2.msra.mxu0 0.0
    %1745 = vmatprep.subr.mxu0 0.0
    %1746 = vmatpush2.msra.mxu0 0.0
    %1747 = vmatprep.subr.mxu0 0.0
    %1748 = vmatpush2.msra.mxu0 0.0
    %1749 = vmatprep.subr.mxu0 0.0
    %1750 = vmatpush2.msra.mxu0 0.0
    %1751 = vmatprep.subr.mxu0 0.0
    %1752 = vmatpush2.msra.mxu0 0.0
    %1753 = vmatprep.subr.mxu0 0.0
    %1754 = vmatpush2.msra.mxu0 0.0
    %1755 = vmatprep.subr.mxu0 0.0
    %1756 = vmatpush2.msra.mxu0 0.0
    %1757 = vmatprep.subr.mxu0 0.0
    %1758 = vmatpush2.msra.mxu0 0.0
    %1759 = vmatprep.subr.mxu0 0.0
    %1760 = vmatpush2.msra.mxu0 0.0
    %1761 = vmatprep.subr.mxu0 0.0
    %1762 = vmatpush2.msra.mxu0 0.0
    %1763 = vmatprep.subr.mxu0 0.0
    %1764 = vmatpush2.msra.mxu0 0.0
    %1765 = vmatprep.subr.mxu0 0.0
    %1766 = vmatpush2.msra.mxu0 0.0
    %1767 = vmatprep.subr.mxu0 0.0
    %1768 = vmatpush2.msra.mxu0 0.0
    %1769 = vmatprep.mubr.f32.mxu0 0.0
    %1770 = vmatmul.mubr.f32.gmra.mxu0 %v1700
    %v1771 = vpop.f32.mrf.mxu0
    %v1772 = vadd.f32 %v1697, %v1771
    %v1773 = vpop.f32.mrf.mxu0
    %1774 = vmatprep.mubr.f32.mxu0 0.0
    %1775 = vmatmul.mubr.f32.gmra.mxu0 %v1703
    %v1776 = vpop.f32.mrf.mxu0
    %v1777 = vadd.f32 %v1698, %v1776
    %v1778 = vpop.f32.mrf.mxu0
    %1779 = vdwg.mxu0
    %vm1780 = vcmp.ge.f32.partialorder %v1772, 0.0
    %vm1781 = vcmp.ge.f32.partialorder %v1777, 0.0
    %v1782 = vmul.f32 %v1772, 0.2
    %v1783 = vmul.f32 %v1777, 0.2
    %v1784 = vsel %vm1780, %v1772, %v1782
    %v1785 = vsel %vm1781, %v1777, %v1783
    %v1786 = vld [vmem:[#allocation3 + $0x390] sm:$0xff]
    %v1787 = vld [vmem:[#allocation3 + $0x398] sm:$0xff]
    %v1788 = vld [vmem:[#allocation3 + $0x3a0] sm:$0xff]
    %v1789 = vld [vmem:[#allocation3 + $0x3a8] sm:$0xff]
    %v1790 = vld [vmem:[#allocation3 + $0x3b0] sm:$0xff]
    %v1791 = vld [vmem:[#allocation3 + $0x3b8] sm:$0xff]
    %v1792 = vld [vmem:[#allocation3 + $0x3c0] sm:$0xff]
    %v1793 = vld [vmem:[#allocation3 + $0x3c8] sm:$0xff]
    %v1795 = vsel %vm525, %v1784, 0
    %v1798 = vsel %vm525, %v1785, 0
    %1800 = vmatprep.subr.mxu0 0.0
    %1801 = vmatpush1.msra.mxu0 0.0
    %1802 = vmatprep.subr.mxu0 0.0
    %1803 = vmatpush1.msra.mxu0 0.0
    %1804 = vmatprep.subr.mxu0 0.0
    %1805 = vmatpush1.msra.mxu0 0.0
    %1806 = vmatprep.subr.mxu0 0.0
    %1807 = vmatpush1.msra.mxu0 0.0
    %1808 = vmatprep.subr.mxu0 0.0
    %1809 = vmatpush1.msra.mxu0 0.0
    %1810 = vmatprep.subr.mxu0 0.0
    %1811 = vmatpush1.msra.mxu0 0.0
    %1812 = vmatprep.subr.mxu0 0.0
    %1813 = vmatpush1.msra.mxu0 0.0
    %1814 = vmatprep.subr.mxu0 0.0
    %1815 = vmatpush1.msra.mxu0 0.0
    %1816 = vmatprep.subr.mxu0 0.0
    %1817 = vmatpush1.msra.mxu0 %v1793
    %1818 = vmatprep.subr.mxu0 0.0
    %1819 = vmatpush1.msra.mxu0 %v1792
    %1820 = vmatprep.subr.mxu0 0.0
    %1821 = vmatpush1.msra.mxu0 %v1791
    %1822 = vmatprep.subr.mxu0 0.0
    %1823 = vmatpush1.msra.mxu0 %v1790
    %1824 = vmatprep.subr.mxu0 0.0
    %1825 = vmatpush1.msra.mxu0 %v1789
    %1826 = vmatprep.subr.mxu0 0.0
    %1827 = vmatpush1.msra.mxu0 %v1788
    %1828 = vmatprep.subr.mxu0 0.0
    %1829 = vmatpush1.msra.mxu0 %v1787
    %1830 = vmatprep.subr.mxu0 0.0
    %1831 = vmatpush1.msra.mxu0 %v1786
    %1832 = vmatprep.subr.mxu0 0.0
    %1833 = vmatpush2.msra.mxu0 0.0
    %1834 = vmatprep.subr.mxu0 0.0
    %1835 = vmatpush2.msra.mxu0 0.0
    %1836 = vmatprep.subr.mxu0 0.0
    %1837 = vmatpush2.msra.mxu0 0.0
    %1838 = vmatprep.subr.mxu0 0.0
    %1839 = vmatpush2.msra.mxu0 0.0
    %1840 = vmatprep.subr.mxu0 0.0
    %1841 = vmatpush2.msra.mxu0 0.0
    %1842 = vmatprep.subr.mxu0 0.0
    %1843 = vmatpush2.msra.mxu0 0.0
    %1844 = vmatprep.subr.mxu0 0.0
    %1845 = vmatpush2.msra.mxu0 0.0
    %1846 = vmatprep.subr.mxu0 0.0
    %1847 = vmatpush2.msra.mxu0 0.0
    %1848 = vmatprep.subr.mxu0 0.0
    %1849 = vmatpush2.msra.mxu0 0.0
    %1850 = vmatprep.subr.mxu0 0.0
    %1851 = vmatpush2.msra.mxu0 0.0
    %1852 = vmatprep.subr.mxu0 0.0
    %1853 = vmatpush2.msra.mxu0 0.0
    %1854 = vmatprep.subr.mxu0 0.0
    %1855 = vmatpush2.msra.mxu0 0.0
    %1856 = vmatprep.subr.mxu0 0.0
    %1857 = vmatpush2.msra.mxu0 0.0
    %1858 = vmatprep.subr.mxu0 0.0
    %1859 = vmatpush2.msra.mxu0 0.0
    %1860 = vmatprep.subr.mxu0 0.0
    %1861 = vmatpush2.msra.mxu0 0.0
    %1862 = vmatprep.subr.mxu0 0.0
    %1863 = vmatpush2.msra.mxu0 0.0
    %1864 = vmatprep.mubr.f32.mxu0 0.0
    %1865 = vmatmul.mubr.f32.gmra.mxu0 %v1795
    %v1866 = vpop.f32.mrf.mxu0
    %v1867 = vadd.f32 0.0, %v1866
    %v1868 = vpop.f32.mrf.mxu0
    %1869 = vmatprep.mubr.f32.mxu0 0.0
    %1870 = vmatmul.mubr.f32.gmra.mxu0 %v1798
    %v1871 = vpop.f32.mrf.mxu0
    %v1872 = vadd.f32 0.0, %v1871
    %v1873 = vpop.f32.mrf.mxu0
    %1874 = vdwg.mxu0
    %1875 = vst.msk [vmem:[#allocation2] sm:$0xff] %vm525, %v1867
    %1876 = vst.msk [vmem:[#allocation2 + $0x8] sm:$0xff] %vm525, %v1872
    %v1877 = vld [vmem:[#allocation3 + $0x3d0] sm:$0xff]
    %v1878 = vld [vmem:[#allocation3 + $0x3d8] sm:$0xff]
    %v1879 = vld [vmem:[#allocation3 + $0x3e0] sm:$0xff]
    %v1880 = vld [vmem:[#allocation3 + $0x3e8] sm:$0xff]
    %v1881 = vld [vmem:[#allocation3 + $0x3f0] sm:$0xff]
    %v1882 = vld [vmem:[#allocation3 + $0x3f8] sm:$0xff]
    %v1883 = vld [vmem:[#allocation3 + $0x400] sm:$0xff]
    %v1884 = vld [vmem:[#allocation3 + $0x408] sm:$0xff]
    %1885 = vmatprep.subr.mxu0 0.0
    %1886 = vmatpush1.msra.mxu0 0.0
    %1887 = vmatprep.subr.mxu0 0.0
    %1888 = vmatpush1.msra.mxu0 0.0
    %1889 = vmatprep.subr.mxu0 0.0
    %1890 = vmatpush1.msra.mxu0 0.0
    %1891 = vmatprep.subr.mxu0 0.0
    %1892 = vmatpush1.msra.mxu0 0.0
    %1893 = vmatprep.subr.mxu0 0.0
    %1894 = vmatpush1.msra.mxu0 0.0
    %1895 = vmatprep.subr.mxu0 0.0
    %1896 = vmatpush1.msra.mxu0 0.0
    %1897 = vmatprep.subr.mxu0 0.0
    %1898 = vmatpush1.msra.mxu0 0.0
    %1899 = vmatprep.subr.mxu0 0.0
    %1900 = vmatpush1.msra.mxu0 0.0
    %1901 = vmatprep.subr.mxu0 0.0
    %1902 = vmatpush1.msra.mxu0 %v1884
    %1903 = vmatprep.subr.mxu0 0.0
    %1904 = vmatpush1.msra.mxu0 %v1883
    %1905 = vmatprep.subr.mxu0 0.0
    %1906 = vmatpush1.msra.mxu0 %v1882
    %1907 = vmatprep.subr.mxu0 0.0
    %1908 = vmatpush1.msra.mxu0 %v1881
    %1909 = vmatprep.subr.mxu0 0.0
    %1910 = vmatpush1.msra.mxu0 %v1880
    %1911 = vmatprep.subr.mxu0 0.0
    %1912 = vmatpush1.msra.mxu0 %v1879
    %1913 = vmatprep.subr.mxu0 0.0
    %1914 = vmatpush1.msra.mxu0 %v1878
    %1915 = vmatprep.subr.mxu0 0.0
    %1916 = vmatpush1.msra.mxu0 %v1877
    %1917 = vmatprep.subr.mxu0 0.0
    %1918 = vmatpush2.msra.mxu0 0.0
    %1919 = vmatprep.subr.mxu0 0.0
    %1920 = vmatpush2.msra.mxu0 0.0
    %1921 = vmatprep.subr.mxu0 0.0
    %1922 = vmatpush2.msra.mxu0 0.0
    %1923 = vmatprep.subr.mxu0 0.0
    %1924 = vmatpush2.msra.mxu0 0.0
    %1925 = vmatprep.subr.mxu0 0.0
    %1926 = vmatpush2.msra.mxu0 0.0
    %1927 = vmatprep.subr.mxu0 0.0
    %1928 = vmatpush2.msra.mxu0 0.0
    %1929 = vmatprep.subr.mxu0 0.0
    %1930 = vmatpush2.msra.mxu0 0.0
    %1931 = vmatprep.subr.mxu0 0.0
    %1932 = vmatpush2.msra.mxu0 0.0
    %1933 = vmatprep.subr.mxu0 0.0
    %1934 = vmatpush2.msra.mxu0 0.0
    %1935 = vmatprep.subr.mxu0 0.0
    %1936 = vmatpush2.msra.mxu0 0.0
    %1937 = vmatprep.subr.mxu0 0.0
    %1938 = vmatpush2.msra.mxu0 0.0
    %1939 = vmatprep.subr.mxu0 0.0
    %1940 = vmatpush2.msra.mxu0 0.0
    %1941 = vmatprep.subr.mxu0 0.0
    %1942 = vmatpush2.msra.mxu0 0.0
    %1943 = vmatprep.subr.mxu0 0.0
    %1944 = vmatpush2.msra.mxu0 0.0
    %1945 = vmatprep.subr.mxu0 0.0
    %1946 = vmatpush2.msra.mxu0 0.0
    %1947 = vmatprep.subr.mxu0 0.0
    %1948 = vmatpush2.msra.mxu0 0.0
    %1949 = vmatprep.mubr.f32.mxu0 0.0
    %1950 = vmatmul.mubr.f32.gmra.mxu0 %v1795
    %v1951 = vpop.f32.mrf.mxu0
    %v1952 = vadd.f32 0.0, %v1951
    %v1953 = vpop.f32.mrf.mxu0
    %1954 = vmatprep.mubr.f32.mxu0 0.0
    %1955 = vmatmul.mubr.f32.gmra.mxu0 %v1798
    %v1956 = vpop.f32.mrf.mxu0
    %v1957 = vadd.f32 0.0, %v1956
    %v1958 = vpop.f32.mrf.mxu0
    %1959 = vdwg.mxu0
    %1960 = vst.msk [vmem:[#allocation2 + $0x10] sm:$0xff] %vm525, %v1952
    %1961 = vst.msk [vmem:[#allocation2 + $0x18] sm:$0xff] %vm525, %v1957
    %v1962 = vld [vmem:[#allocation3 + $0x410] sm:$0xff]
    %v1963 = vld [vmem:[#allocation3 + $0x418] sm:$0xff]
    %v1964 = vld [vmem:[#allocation3 + $0x420] sm:$0xff]
    %v1965 = vld [vmem:[#allocation3 + $0x428] sm:$0xff]
    %v1966 = vld [vmem:[#allocation3 + $0x430] sm:$0xff]
    %v1967 = vld [vmem:[#allocation3 + $0x438] sm:$0xff]
    %v1968 = vld [vmem:[#allocation3 + $0x440] sm:$0xff]
    %v1969 = vld [vmem:[#allocation3 + $0x448] sm:$0xff]
    %1970 = vmatprep.subr.mxu0 0.0
    %1971 = vmatpush1.msra.mxu0 0.0
    %1972 = vmatprep.subr.mxu0 0.0
    %1973 = vmatpush1.msra.mxu0 0.0
    %1974 = vmatprep.subr.mxu0 0.0
    %1975 = vmatpush1.msra.mxu0 0.0
    %1976 = vmatprep.subr.mxu0 0.0
    %1977 = vmatpush1.msra.mxu0 0.0
    %1978 = vmatprep.subr.mxu0 0.0
    %1979 = vmatpush1.msra.mxu0 0.0
    %1980 = vmatprep.subr.mxu0 0.0
    %1981 = vmatpush1.msra.mxu0 0.0
    %1982 = vmatprep.subr.mxu0 0.0
    %1983 = vmatpush1.msra.mxu0 0.0
    %1984 = vmatprep.subr.mxu0 0.0
    %1985 = vmatpush1.msra.mxu0 0.0
    %1986 = vmatprep.subr.mxu0 0.0
    %1987 = vmatpush1.msra.mxu0 %v1969
    %1988 = vmatprep.subr.mxu0 0.0
    %1989 = vmatpush1.msra.mxu0 %v1968
    %1990 = vmatprep.subr.mxu0 0.0
    %1991 = vmatpush1.msra.mxu0 %v1967
    %1992 = vmatprep.subr.mxu0 0.0
    %1993 = vmatpush1.msra.mxu0 %v1966
    %1994 = vmatprep.subr.mxu0 0.0
    %1995 = vmatpush1.msra.mxu0 %v1965
    %1996 = vmatprep.subr.mxu0 0.0
    %1997 = vmatpush1.msra.mxu0 %v1964
    %1998 = vmatprep.subr.mxu0 0.0
    %1999 = vmatpush1.msra.mxu0 %v1963
    %2000 = vmatprep.subr.mxu0 0.0
    %2001 = vmatpush1.msra.mxu0 %v1962
    %2002 = vmatprep.subr.mxu0 0.0
    %2003 = vmatpush2.msra.mxu0 0.0
    %2004 = vmatprep.subr.mxu0 0.0
    %2005 = vmatpush2.msra.mxu0 0.0
    %2006 = vmatprep.subr.mxu0 0.0
    %2007 = vmatpush2.msra.mxu0 0.0
    %2008 = vmatprep.subr.mxu0 0.0
    %2009 = vmatpush2.msra.mxu0 0.0
    %2010 = vmatprep.subr.mxu0 0.0
    %2011 = vmatpush2.msra.mxu0 0.0
    %2012 = vmatprep.subr.mxu0 0.0
    %2013 = vmatpush2.msra.mxu0 0.0
    %2014 = vmatprep.subr.mxu0 0.0
    %2015 = vmatpush2.msra.mxu0 0.0
    %2016 = vmatprep.subr.mxu0 0.0
    %2017 = vmatpush2.msra.mxu0 0.0
    %2018 = vmatprep.subr.mxu0 0.0
    %2019 = vmatpush2.msra.mxu0 0.0
    %2020 = vmatprep.subr.mxu0 0.0
    %2021 = vmatpush2.msra.mxu0 0.0
    %2022 = vmatprep.subr.mxu0 0.0
    %2023 = vmatpush2.msra.mxu0 0.0
    %2024 = vmatprep.subr.mxu0 0.0
    %2025 = vmatpush2.msra.mxu0 0.0
    %2026 = vmatprep.subr.mxu0 0.0
    %2027 = vmatpush2.msra.mxu0 0.0
    %2028 = vmatprep.subr.mxu0 0.0
    %2029 = vmatpush2.msra.mxu0 0.0
    %2030 = vmatprep.subr.mxu0 0.0
    %2031 = vmatpush2.msra.mxu0 0.0
    %2032 = vmatprep.subr.mxu0 0.0
    %2033 = vmatpush2.msra.mxu0 0.0
    %2034 = vmatprep.mubr.f32.mxu0 0.0
    %2035 = vmatmul.mubr.f32.gmra.mxu0 %v1795
    %v2036 = vpop.f32.mrf.mxu0
    %v2037 = vadd.f32 0.0, %v2036
    %v2038 = vpop.f32.mrf.mxu0
    %2039 = vmatprep.mubr.f32.mxu0 0.0
    %2040 = vmatmul.mubr.f32.gmra.mxu0 %v1798
    %v2041 = vpop.f32.mrf.mxu0
    %v2042 = vadd.f32 0.0, %v2041
    %v2043 = vpop.f32.mrf.mxu0
    %2044 = vdwg.mxu0
    %2045 = vst.msk [vmem:[#allocation2 + $0x20] sm:$0xff] %vm525, %v2037
    %2046 = vst.msk [vmem:[#allocation2 + $0x28] sm:$0xff] %vm525, %v2042
    %v2047 = vld [vmem:[%s2 + $0x38] sm:$0xff]
    %v2048 = vld [vmem:[%s2 + $0x40] sm:$0xff]
    %v2049 = vld [vmem:[%s2 + $0x48] sm:$0xff]
    %v2050 = vld [vmem:[%s2 + $0x50] sm:$0xff]
    %v2051 = vld [vmem:[#allocation2] sm:$0xff]
    %v2052 = vld [vmem:[#allocation2 + $0x8] sm:$0xff]
    %v2053 = vld [vmem:[#allocation2 + $0x10] sm:$0xff]
    %v2054 = vld [vmem:[#allocation2 + $0x18] sm:$0xff]
    %v2055 = vld [vmem:[#allocation2 + $0x20] sm:$0xff]
    %v2056 = vld [vmem:[#allocation2 + $0x28] sm:$0xff]
    %v2057 = vld [vmem:[%s3 + $0x18] sm:$0xff]
    %v2058 = vld [vmem:[%s3 + $0x20] sm:$0xff]
    %v2059 = vld [vmem:[%s3 + $0x28] sm:$0xff]
    %v2060 = vld [vmem:[%s3 + $0x30] sm:$0xff]
    %v2062 = vsel %vm701, %v2047, 0
    %v2065 = vsel %vm701, %v2048, 0
    %v2068 = vsel %vm701, %v2049, 0
    %v2071 = vsel %vm701, %v2050, 0
    %2073 = vmatprep.subr.mxu0 0.0
    %2074 = vmatpush1.msra.mxu0 0.0
    %2075 = vmatprep.subr.mxu0 0.0
    %2076 = vmatpush1.msra.mxu0 0.0
    %2077 = vmatprep.subr.mxu0 0.0
    %2078 = vmatpush1.msra.mxu0 0.0
    %2079 = vmatprep.subr.mxu0 0.0
    %2080 = vmatpush1.msra.mxu0 0.0
    %2081 = vmatprep.subr.mxu0 0.0
    %2082 = vmatpush1.msra.mxu0 0.0
    %2083 = vmatprep.subr.mxu0 0.0
    %2084 = vmatpush1.msra.mxu0 0.0
    %2085 = vmatprep.subr.mxu0 0.0
    %2086 = vmatpush1.msra.mxu0 0.0
    %2087 = vmatprep.subr.mxu0 0.0
    %2088 = vmatpush1.msra.mxu0 0.0
    %2089 = vmatprep.subr.mxu0 0.0
    %2090 = vmatpush1.msra.mxu0 0.0
    %2091 = vmatprep.subr.mxu0 0.0
    %2092 = vmatpush1.msra.mxu0 0.0
    %2093 = vmatprep.subr.mxu0 0.0
    %2094 = vmatpush1.msra.mxu0 %v2056
    %2095 = vmatprep.subr.mxu0 0.0
    %2096 = vmatpush1.msra.mxu0 %v2055
    %2097 = vmatprep.subr.mxu0 0.0
    %2098 = vmatpush1.msra.mxu0 %v2054
    %2099 = vmatprep.subr.mxu0 0.0
    %2100 = vmatpush1.msra.mxu0 %v2053
    %2101 = vmatprep.subr.mxu0 0.0
    %2102 = vmatpush1.msra.mxu0 %v2052
    %2103 = vmatprep.subr.mxu0 0.0
    %2104 = vmatpush1.msra.mxu0 %v2051
    %2105 = vmatprep.subr.mxu0 0.0
    %2106 = vmatpush2.msra.mxu0 0.0
    %2107 = vmatprep.subr.mxu0 0.0
    %2108 = vmatpush2.msra.mxu0 0.0
    %2109 = vmatprep.subr.mxu0 0.0
    %2110 = vmatpush2.msra.mxu0 0.0
    %2111 = vmatprep.subr.mxu0 0.0
    %2112 = vmatpush2.msra.mxu0 0.0
    %2113 = vmatprep.subr.mxu0 0.0
    %2114 = vmatpush2.msra.mxu0 0.0
    %2115 = vmatprep.subr.mxu0 0.0
    %2116 = vmatpush2.msra.mxu0 0.0
    %2117 = vmatprep.subr.mxu0 0.0
    %2118 = vmatpush2.msra.mxu0 0.0
    %2119 = vmatprep.subr.mxu0 0.0
    %2120 = vmatpush2.msra.mxu0 0.0
    %2121 = vmatprep.subr.mxu0 0.0
    %2122 = vmatpush2.msra.mxu0 0.0
    %2123 = vmatprep.subr.mxu0 0.0
    %2124 = vmatpush2.msra.mxu0 0.0
    %2125 = vmatprep.subr.mxu0 0.0
    %2126 = vmatpush2.msra.mxu0 0.0
    %2127 = vmatprep.subr.mxu0 0.0
    %2128 = vmatpush2.msra.mxu0 0.0
    %2129 = vmatprep.subr.mxu0 0.0
    %2130 = vmatpush2.msra.mxu0 0.0
    %2131 = vmatprep.subr.mxu0 0.0
    %2132 = vmatpush2.msra.mxu0 0.0
    %2133 = vmatprep.subr.mxu0 0.0
    %2134 = vmatpush2.msra.mxu0 0.0
    %2135 = vmatprep.subr.mxu0 0.0
    %2136 = vmatpush2.msra.mxu0 0.0
    %2137 = vmatprep.mubr.f32.mxu0 0.0
    %2138 = vmatmul.mubr.f32.gmra.mxu0 %v2062
    %v2139 = vpop.f32.mrf.mxu0
    %v2140 = vadd.f32 %v2057, %v2139
    %v2141 = vpop.f32.mrf.mxu0
    %2142 = vmatprep.mubr.f32.mxu0 0.0
    %2143 = vmatmul.mubr.f32.gmra.mxu0 %v2065
    %v2144 = vpop.f32.mrf.mxu0
    %v2145 = vadd.f32 %v2058, %v2144
    %v2146 = vpop.f32.mrf.mxu0
    %2147 = vmatprep.mubr.f32.mxu0 0.0
    %2148 = vmatmul.mubr.f32.gmra.mxu0 %v2068
    %v2149 = vpop.f32.mrf.mxu0
    %v2150 = vadd.f32 %v2059, %v2149
    %v2151 = vpop.f32.mrf.mxu0
    %2152 = vmatprep.mubr.f32.mxu0 0.0
    %2153 = vmatmul.mubr.f32.gmra.mxu0 %v2071
    %v2154 = vpop.f32.mrf.mxu0
    %v2155 = vadd.f32 %v2060, %v2154
    %v2156 = vpop.f32.mrf.mxu0
    %2157 = vdwg.mxu0
    %v2158 = vld [vmem:[%s4 + $0x3] sm:$0x1]
    %v2159 = vld [vmem:[%s4 + $0x4] sm:$0x1]
    %v2160 = vld [vmem:[%s4 + $0x5] sm:$0x1]
    %v2161 = vld [vmem:[%s4 + $0x6] sm:$0x1]
    %v2162 = vld [vmem:[%s5] sm:$0xff]
    %v2163 = vld [vmem:[%s5 + $0x8] sm:$0xff]
    %v2164 = vld [vmem:[%s5 + $0x10] sm:$0xff]
    %v2165 = vld [vmem:[%s5 + $0x18] sm:$0xff]
    %v2166 = vld [vmem:[%s5 + $0x20] sm:$0xff]
    %v2167 = vld [vmem:[%s5 + $0x28] sm:$0xff]
    %v2168 = vld [vmem:[%s5 + $0x30] sm:$0xff]
    %v2169 = vld [vmem:[%s5 + $0x38] sm:$0xff]
    %v2170 = vld [vmem:[%s5 + $0x40] sm:$0xff]
    %v2171 = vld [vmem:[%s5 + $0x48] sm:$0xff]
    %v2172 = vld [vmem:[%s5 + $0x50] sm:$0xff]
    %v2173 = vld [vmem:[%s5 + $0x58] sm:$0xff]
    %v2174 = vld [vmem:[%s5 + $0x60] sm:$0xff]
    %v2175 = vld [vmem:[%s5 + $0x68] sm:$0xff]
    %v2176 = vld [vmem:[%s5 + $0x70] sm:$0xff]
    %v2177 = vld [vmem:[%s5 + $0x78] sm:$0xff]
    %v2178 = vlaneseq
    %v2179 = vshrl.u32 %v2178, 7
    %v2180 = vsub.s32 0, %v2179
    %v2181 = vrot.slane %v2159, %v2180
    %v2182 = vmul.f32 %v2140, %v2181
    %v2183 = vmul.f32 %v2145, %v2181
    %v2184 = vmul.f32 %v2150, %v2181
    %v2185 = vmul.f32 %v2155, %v2181
    %v2186 = vlaneseq
    %v2187 = vshrl.u32 %v2186, 7
    %v2188 = vsub.s32 0, %v2187
    %v2189 = vrot.slane %v2158, %v2188
    %v2190 = vadd.f32 %v2182, %v2189
    %v2191 = vadd.f32 %v2183, %v2189
    %v2192 = vadd.f32 %v2184, %v2189
    %v2193 = vadd.f32 %v2185, %v2189
    %v2194 = vmul.f32 %v2190, %v2190
    %v2195 = vmul.f32 %v2191, %v2191
    %v2196 = vmul.f32 %v2192, %v2192
    %v2197 = vmul.f32 %v2193, %v2193
    %v2198 = vlaneseq
    %v2199 = vshrl.u32 %v2198, 7
    %v2200 = vsub.s32 0, %v2199
    %v2201 = vrot.slane %v2161, %v2200
    %v2202 = vmul.f32 %v2194, %v2201
    %v2203 = vmul.f32 %v2195, %v2201
    %v2204 = vmul.f32 %v2196, %v2201
    %v2205 = vmul.f32 %v2197, %v2201
    %v2207 = vsel %vm525, %v2202, 0
    %v2210 = vsel %vm525, %v2203, 0
    %v2213 = vsel %vm525, %v2204, 0
    %v2216 = vsel %vm525, %v2205, 0
    %2218 = vmatprep.subr.mxu0 0.0
    %2219 = vmatpush1.msra.mxu0 0.0
    %2220 = vmatprep.subr.mxu0 0.0
    %2221 = vmatpush1.msra.mxu0 0.0
    %2222 = vmatprep.subr.mxu0 0.0
    %2223 = vmatpush1.msra.mxu0 0.0
    %2224 = vmatprep.subr.mxu0 0.0
    %2225 = vmatpush1.msra.mxu0 0.0
    %2226 = vmatprep.subr.mxu0 0.0
    %2227 = vmatpush1.msra.mxu0 0.0
    %2228 = vmatprep.subr.mxu0 0.0
    %2229 = vmatpush1.msra.mxu0 0.0
    %2230 = vmatprep.subr.mxu0 0.0
    %2231 = vmatpush1.msra.mxu0 0.0
    %2232 = vmatprep.subr.mxu0 0.0
    %2233 = vmatpush1.msra.mxu0 0.0
    %2234 = vmatprep.subr.mxu0 0.0
    %2235 = vmatpush1.msra.mxu0 %v2169
    %2236 = vmatprep.subr.mxu0 0.0
    %2237 = vmatpush1.msra.mxu0 %v2168
    %2238 = vmatprep.subr.mxu0 0.0
    %2239 = vmatpush1.msra.mxu0 %v2167
    %2240 = vmatprep.subr.mxu0 0.0
    %2241 = vmatpush1.msra.mxu0 %v2166
    %2242 = vmatprep.subr.mxu0 0.0
    %2243 = vmatpush1.msra.mxu0 %v2165
    %2244 = vmatprep.subr.mxu0 0.0
    %2245 = vmatpush1.msra.mxu0 %v2164
    %2246 = vmatprep.subr.mxu0 0.0
    %2247 = vmatpush1.msra.mxu0 %v2163
    %2248 = vmatprep.subr.mxu0 0.0
    %2249 = vmatpush1.msra.mxu0 %v2162
    %2250 = vmatprep.subr.mxu0 0.0
    %2251 = vmatpush2.msra.mxu0 0.0
    %2252 = vmatprep.subr.mxu0 0.0
    %2253 = vmatpush2.msra.mxu0 0.0
    %2254 = vmatprep.subr.mxu0 0.0
    %2255 = vmatpush2.msra.mxu0 0.0
    %2256 = vmatprep.subr.mxu0 0.0
    %2257 = vmatpush2.msra.mxu0 0.0
    %2258 = vmatprep.subr.mxu0 0.0
    %2259 = vmatpush2.msra.mxu0 0.0
    %2260 = vmatprep.subr.mxu0 0.0
    %2261 = vmatpush2.msra.mxu0 0.0
    %2262 = vmatprep.subr.mxu0 0.0
    %2263 = vmatpush2.msra.mxu0 0.0
    %2264 = vmatprep.subr.mxu0 0.0
    %2265 = vmatpush2.msra.mxu0 0.0
    %2266 = vmatprep.subr.mxu0 0.0
    %2267 = vmatpush2.msra.mxu0 0.0
    %2268 = vmatprep.subr.mxu0 0.0
    %2269 = vmatpush2.msra.mxu0 0.0
    %2270 = vmatprep.subr.mxu0 0.0
    %2271 = vmatpush2.msra.mxu0 0.0
    %2272 = vmatprep.subr.mxu0 0.0
    %2273 = vmatpush2.msra.mxu0 0.0
    %2274 = vmatprep.subr.mxu0 0.0
    %2275 = vmatpush2.msra.mxu0 0.0
    %2276 = vmatprep.subr.mxu0 0.0
    %2277 = vmatpush2.msra.mxu0 0.0
    %2278 = vmatprep.subr.mxu0 0.0
    %2279 = vmatpush2.msra.mxu0 0.0
    %2280 = vmatprep.subr.mxu0 0.0
    %2281 = vmatpush2.msra.mxu0 0.0
    %2282 = vmatprep.mubr.f32.mxu0 0.0
    %2283 = vmatmul.mubr.f32.gmra.mxu0 %v2207
    %v2284 = vpop.f32.mrf.mxu0
    %v2285 = vadd.f32 1e-12, %v2284
    %v2286 = vpop.f32.mrf.mxu0
    %2287 = vmatprep.mubr.f32.mxu0 0.0
    %2288 = vmatmul.mubr.f32.gmra.mxu0 %v2210
    %v2289 = vpop.f32.mrf.mxu0
    %v2290 = vadd.f32 1e-12, %v2289
    %v2291 = vpop.f32.mrf.mxu0
    %2292 = vmatprep.mubr.f32.mxu0 0.0
    %2293 = vmatmul.mubr.f32.gmra.mxu0 %v2213
    %v2294 = vpop.f32.mrf.mxu0
    %v2295 = vadd.f32 1e-12, %v2294
    %v2296 = vpop.f32.mrf.mxu0
    %2297 = vmatprep.mubr.f32.mxu0 0.0
    %2298 = vmatmul.mubr.f32.gmra.mxu0 %v2216
    %v2299 = vpop.f32.mrf.mxu0
    %v2300 = vadd.f32 1e-12, %v2299
    %v2301 = vpop.f32.mrf.mxu0
    %2302 = vdwg.mxu0
    %v2303 = vrsqrt.pop %v2285
    %v2304 = vrsqrt.pop %v2290
    %v2305 = vrsqrt.pop %v2295
    %v2306 = vrsqrt.pop %v2300
    %v2307 = vmul.f32 %v2190, %v2303
    %v2308 = vmul.f32 %v2191, %v2304
    %v2309 = vmul.f32 %v2192, %v2305
    %v2310 = vmul.f32 %v2193, %v2306
    %v2312 = vsel %vm525, %v2307, 0
    %v2315 = vsel %vm525, %v2308, 0
    %v2318 = vsel %vm525, %v2309, 0
    %v2321 = vsel %vm525, %v2310, 0
    %2323 = vmatprep.subr.mxu0 0.0
    %2324 = vmatpush1.msra.mxu0 0.0
    %2325 = vmatprep.subr.mxu0 0.0
    %2326 = vmatpush1.msra.mxu0 0.0
    %2327 = vmatprep.subr.mxu0 0.0
    %2328 = vmatpush1.msra.mxu0 0.0
    %2329 = vmatprep.subr.mxu0 0.0
    %2330 = vmatpush1.msra.mxu0 0.0
    %2331 = vmatprep.subr.mxu0 0.0
    %2332 = vmatpush1.msra.mxu0 0.0
    %2333 = vmatprep.subr.mxu0 0.0
    %2334 = vmatpush1.msra.mxu0 0.0
    %2335 = vmatprep.subr.mxu0 0.0
    %2336 = vmatpush1.msra.mxu0 0.0
    %2337 = vmatprep.subr.mxu0 0.0
    %2338 = vmatpush1.msra.mxu0 0.0
    %2339 = vmatprep.subr.mxu0 0.0
    %2340 = vmatpush1.msra.mxu0 %v2177
    %2341 = vmatprep.subr.mxu0 0.0
    %2342 = vmatpush1.msra.mxu0 %v2176
    %2343 = vmatprep.subr.mxu0 0.0
    %2344 = vmatpush1.msra.mxu0 %v2175
    %2345 = vmatprep.subr.mxu0 0.0
    %2346 = vmatpush1.msra.mxu0 %v2174
    %2347 = vmatprep.subr.mxu0 0.0
    %2348 = vmatpush1.msra.mxu0 %v2173
    %2349 = vmatprep.subr.mxu0 0.0
    %2350 = vmatpush1.msra.mxu0 %v2172
    %2351 = vmatprep.subr.mxu0 0.0
    %2352 = vmatpush1.msra.mxu0 %v2171
    %2353 = vmatprep.subr.mxu0 0.0
    %2354 = vmatpush1.msra.mxu0 %v2170
    %2355 = vmatprep.subr.mxu0 0.0
    %2356 = vmatpush2.msra.mxu0 0.0
    %2357 = vmatprep.subr.mxu0 0.0
    %2358 = vmatpush2.msra.mxu0 0.0
    %2359 = vmatprep.subr.mxu0 0.0
    %2360 = vmatpush2.msra.mxu0 0.0
    %2361 = vmatprep.subr.mxu0 0.0
    %2362 = vmatpush2.msra.mxu0 0.0
    %2363 = vmatprep.subr.mxu0 0.0
    %2364 = vmatpush2.msra.mxu0 0.0
    %2365 = vmatprep.subr.mxu0 0.0
    %2366 = vmatpush2.msra.mxu0 0.0
    %2367 = vmatprep.subr.mxu0 0.0
    %2368 = vmatpush2.msra.mxu0 0.0
    %2369 = vmatprep.subr.mxu0 0.0
    %2370 = vmatpush2.msra.mxu0 0.0
    %2371 = vmatprep.subr.mxu0 0.0
    %2372 = vmatpush2.msra.mxu0 0.0
    %2373 = vmatprep.subr.mxu0 0.0
    %2374 = vmatpush2.msra.mxu0 0.0
    %2375 = vmatprep.subr.mxu0 0.0
    %2376 = vmatpush2.msra.mxu0 0.0
    %2377 = vmatprep.subr.mxu0 0.0
    %2378 = vmatpush2.msra.mxu0 0.0
    %2379 = vmatprep.subr.mxu0 0.0
    %2380 = vmatpush2.msra.mxu0 0.0
    %2381 = vmatprep.subr.mxu0 0.0
    %2382 = vmatpush2.msra.mxu0 0.0
    %2383 = vmatprep.subr.mxu0 0.0
    %2384 = vmatpush2.msra.mxu0 0.0
    %2385 = vmatprep.subr.mxu0 0.0
    %2386 = vmatpush2.msra.mxu0 0.0
    %2387 = vmatprep.mubr.f32.mxu0 0.0
    %2388 = vmatmul.mubr.f32.gmra.mxu0 %v2312
    %v2389 = vpop.f32.mrf.mxu0
    %v2390 = vadd.f32 0.0, %v2389
    %v2391 = vpop.f32.mrf.mxu0
    %2392 = vmatprep.mubr.f32.mxu0 0.0
    %2393 = vmatmul.mubr.f32.gmra.mxu0 %v2315
    %v2394 = vpop.f32.mrf.mxu0
    %v2395 = vadd.f32 0.0, %v2394
    %v2396 = vpop.f32.mrf.mxu0
    %2397 = vmatprep.mubr.f32.mxu0 0.0
    %2398 = vmatmul.mubr.f32.gmra.mxu0 %v2318
    %v2399 = vpop.f32.mrf.mxu0
    %v2400 = vadd.f32 0.0, %v2399
    %v2401 = vpop.f32.mrf.mxu0
    %2402 = vmatprep.mubr.f32.mxu0 0.0
    %2403 = vmatmul.mubr.f32.gmra.mxu0 %v2321
    %v2404 = vpop.f32.mrf.mxu0
    %v2405 = vadd.f32 0.0, %v2404
    %v2406 = vpop.f32.mrf.mxu0
    %2407 = vdwg.mxu0
    %v2408 = vmul.f32 %v2307, %v2390
    %v2409 = vmul.f32 %v2308, %v2395
    %v2410 = vmul.f32 %v2309, %v2400
    %v2411 = vmul.f32 %v2310, %v2405
    %v2412 = vmul.f32 %v2408, %v2201
    %v2413 = vmul.f32 %v2409, %v2201
    %v2414 = vmul.f32 %v2410, %v2201
    %v2415 = vmul.f32 %v2411, %v2201
    %v2417 = vsel %vm525, %v2412, 0
    %v2420 = vsel %vm525, %v2413, 0
    %v2423 = vsel %vm525, %v2414, 0
    %v2426 = vsel %vm525, %v2415, 0
    %2428 = vmatprep.subr.mxu0 0.0
    %2429 = vmatpush1.msra.mxu0 0.0
    %2430 = vmatprep.subr.mxu0 0.0
    %2431 = vmatpush1.msra.mxu0 0.0
    %2432 = vmatprep.subr.mxu0 0.0
    %2433 = vmatpush1.msra.mxu0 0.0
    %2434 = vmatprep.subr.mxu0 0.0
    %2435 = vmatpush1.msra.mxu0 0.0
    %2436 = vmatprep.subr.mxu0 0.0
    %2437 = vmatpush1.msra.mxu0 0.0
    %2438 = vmatprep.subr.mxu0 0.0
    %2439 = vmatpush1.msra.mxu0 0.0
    %2440 = vmatprep.subr.mxu0 0.0
    %2441 = vmatpush1.msra.mxu0 0.0
    %2442 = vmatprep.subr.mxu0 0.0
    %2443 = vmatpush1.msra.mxu0 0.0
    %2444 = vmatprep.subr.mxu0 0.0
    %2445 = vmatpush1.msra.mxu0 %v2169
    %2446 = vmatprep.subr.mxu0 0.0
    %2447 = vmatpush1.msra.mxu0 %v2168
    %2448 = vmatprep.subr.mxu0 0.0
    %2449 = vmatpush1.msra.mxu0 %v2167
    %2450 = vmatprep.subr.mxu0 0.0
    %2451 = vmatpush1.msra.mxu0 %v2166
    %2452 = vmatprep.subr.mxu0 0.0
    %2453 = vmatpush1.msra.mxu0 %v2165
    %2454 = vmatprep.subr.mxu0 0.0
    %2455 = vmatpush1.msra.mxu0 %v2164
    %2456 = vmatprep.subr.mxu0 0.0
    %2457 = vmatpush1.msra.mxu0 %v2163
    %2458 = vmatprep.subr.mxu0 0.0
    %2459 = vmatpush1.msra.mxu0 %v2162
    %2460 = vmatprep.subr.mxu0 0.0
    %2461 = vmatpush2.msra.mxu0 0.0
    %2462 = vmatprep.subr.mxu0 0.0
    %2463 = vmatpush2.msra.mxu0 0.0
    %2464 = vmatprep.subr.mxu0 0.0
    %2465 = vmatpush2.msra.mxu0 0.0
    %2466 = vmatprep.subr.mxu0 0.0
    %2467 = vmatpush2.msra.mxu0 0.0
    %2468 = vmatprep.subr.mxu0 0.0
    %2469 = vmatpush2.msra.mxu0 0.0
    %2470 = vmatprep.subr.mxu0 0.0
    %2471 = vmatpush2.msra.mxu0 0.0
    %2472 = vmatprep.subr.mxu0 0.0
    %2473 = vmatpush2.msra.mxu0 0.0
    %2474 = vmatprep.subr.mxu0 0.0
    %2475 = vmatpush2.msra.mxu0 0.0
    %2476 = vmatprep.subr.mxu0 0.0
    %2477 = vmatpush2.msra.mxu0 0.0
    %2478 = vmatprep.subr.mxu0 0.0
    %2479 = vmatpush2.msra.mxu0 0.0
    %2480 = vmatprep.subr.mxu0 0.0
    %2481 = vmatpush2.msra.mxu0 0.0
    %2482 = vmatprep.subr.mxu0 0.0
    %2483 = vmatpush2.msra.mxu0 0.0
    %2484 = vmatprep.subr.mxu0 0.0
    %2485 = vmatpush2.msra.mxu0 0.0
    %2486 = vmatprep.subr.mxu0 0.0
    %2487 = vmatpush2.msra.mxu0 0.0
    %2488 = vmatprep.subr.mxu0 0.0
    %2489 = vmatpush2.msra.mxu0 0.0
    %2490 = vmatprep.subr.mxu0 0.0
    %2491 = vmatpush2.msra.mxu0 0.0
    %2492 = vmatprep.mubr.f32.mxu0 0.0
    %2493 = vmatmul.mubr.f32.gmra.mxu0 %v2417
    %v2494 = vpop.f32.mrf.mxu0
    %v2495 = vadd.f32 0.0, %v2494
    %v2496 = vpop.f32.mrf.mxu0
    %2497 = vmatprep.mubr.f32.mxu0 0.0
    %2498 = vmatmul.mubr.f32.gmra.mxu0 %v2420
    %v2499 = vpop.f32.mrf.mxu0
    %v2500 = vadd.f32 0.0, %v2499
    %v2501 = vpop.f32.mrf.mxu0
    %2502 = vmatprep.mubr.f32.mxu0 0.0
    %2503 = vmatmul.mubr.f32.gmra.mxu0 %v2423
    %v2504 = vpop.f32.mrf.mxu0
    %v2505 = vadd.f32 0.0, %v2504
    %v2506 = vpop.f32.mrf.mxu0
    %2507 = vmatprep.mubr.f32.mxu0 0.0
    %2508 = vmatmul.mubr.f32.gmra.mxu0 %v2426
    %v2509 = vpop.f32.mrf.mxu0
    %v2510 = vadd.f32 0.0, %v2509
    %v2511 = vpop.f32.mrf.mxu0
    %2512 = vdwg.mxu0
    %v2513 = vsub.f32 1.0, %v2161
    %v2514 = vlaneseq
    %v2515 = vshrl.u32 %v2514, 7
    %v2516 = vsub.s32 0, %v2515
    %v2517 = vrot.slane %v2513, %v2516
    %v2518 = vmul.f32 %v2517, %v2495
    %v2519 = vmul.f32 %v2517, %v2500
    %v2520 = vmul.f32 %v2517, %v2505
    %v2521 = vmul.f32 %v2517, %v2510
    %v2522 = vmul.f32 %v2518, %v2390
    %v2523 = vmul.f32 %v2519, %v2395
    %v2524 = vmul.f32 %v2520, %v2400
    %v2525 = vmul.f32 %v2521, %v2405
    %v2526 = vsub.f32 %v2307, %v2522
    %v2527 = vsub.f32 %v2308, %v2523
    %v2528 = vsub.f32 %v2309, %v2524
    %v2529 = vsub.f32 %v2310, %v2525
    %v2530 = vsub.f32 %v2526, %v2189
    %v2531 = vsub.f32 %v2527, %v2189
    %v2532 = vsub.f32 %v2528, %v2189
    %v2533 = vsub.f32 %v2529, %v2189
    %v2534 = vlaneseq
    %v2535 = vshrl.u32 %v2534, 7
    %v2536 = vsub.s32 0, %v2535
    %v2537 = vrot.slane %v2160, %v2536
    %v2538 = vmul.f32 %v2530, %v2537
    %v2539 = vmul.f32 %v2531, %v2537
    %v2540 = vmul.f32 %v2532, %v2537
    %v2541 = vmul.f32 %v2533, %v2537
    %2542 = vst.msk [vmem:[#allocation7] sm:$0xff] %vm525, %v2538
    %2543 = vst.msk [vmem:[#allocation7 + $0x8] sm:$0xff] %vm525, %v2539
    %2544 = vst.msk [vmem:[#allocation7 + $0x10] sm:$0xff] %vm525, %v2540
    %2545 = vst.msk [vmem:[#allocation7 + $0x18] sm:$0xff] %vm525, %v2541
    // Predicated region
    $region30: #{_lambda_.1} parent=1 // pred_check
      _
    $region31: #{_lambda_.1} parent=1 // pred_check_branch
      %2547 = sbr.rel (0) target = $region33
    $region32: #{_lambda_.1} parent=1 // pred_region
      %s2549 = ssub.s32 64, 64
      %2550 = vsyncadd [#allocation5], %s2549
      %s2552 = sshll.u32 [#allocation6], 4
      %s2553 = int_to_ptr.vmem [resolvable:$true] %s2552
      %2555 = dma.vmem_to_hbm [thread:$0]  %s2553, 64, %s6, [#allocation5]
    $region33: #{_lambda_.1} parent=1 // pred_fallthru
      _
    // Predicated region
    $region34: #{_lambda_.1} parent=1 // pred_check
      _
    $region35: #{_lambda_.1} parent=1 // pred_check_branch
      %2557 = sbr.rel (0) target = $region37
    $region36: #{_lambda_.1} parent=1 // pred_region
      %s2559 = ssub.s32 512, 512
      %2560 = vsyncadd [#allocation8], %s2559
      %s2561 = sshll.u32 [#allocation7], 4
      %s2562 = int_to_ptr.vmem [resolvable:$true] %s2561
      %2567 = dma.vmem_to_hbm [thread:$0]  %s2562, 512, %s7, [#allocation8], 128, 128, 8
    $region37: #{_lambda_.1} parent=1 // pred_fallthru
      _
    // Predicated region
    $region38: #{_lambda_.1} parent=1 // pred_check
      _
    $region39: #{_lambda_.1} parent=1 // pred_check_branch
      %2569 = sbr.rel (0) target = $region41
    $region40: #{_lambda_.1} parent=1 // pred_region
      %2570 = dma.done [#allocation5], 64
    $region41: #{_lambda_.1} parent=1 // pred_fallthru
      _
    // Predicated region
    $region42: #{_lambda_.1} parent=1 // pred_check
      _
    $region43: #{_lambda_.1} parent=1 // pred_check_branch
      %2572 = sbr.rel (0) target = $region45
    $region44: #{_lambda_.1} parent=1 // pred_region
      %2573 = dma.done [#allocation8], 512
    $region45: #{_lambda_.1} parent=1 // pred_fallthru
      _
    %2574 = vsyncpa [#allocation4], 1
    %2575 = vsyncpa [#allocation5], 1
    %2576 = vsyncpa [#allocation8], 1

</llo_original>
